<compile_context>
chip_gen: v7x
topology: tpu7x:2x2x1
jax: 0.10.0
libtpu: 0.0.40
codegen_flags: <defaults>
</compile_context>

<pallas_src>
import math

import jax
import jax.numpy as jnp
from jax.experimental import pallas as pl
from jax.experimental.pallas import tpu as pltpu

SIGMA = 25.0
LN_SIGMA = math.log(SIGMA)
TWO_PI = 2.0 * math.pi

NDIM = 2
NHIDDEN = 50
TIME_EMBED_DIM = 10            # GaussianFourierProjection output dim (sin || cos)
TED_HALF = TIME_EMBED_DIM // 2
IN0 = NDIM + TIME_EMBED_DIM    # width of the concatenated layer-1 input (= 12)
LANES = 128                    # everything is padded to full lane width


# ---------------------------------------------------------------------------
# Kernel: full forward pass (std math, Fourier time embedding, 5-layer tanh
# MLP, output rescaling) for one (tm, 128) row tile.
#
#   x_ref      : (tm, 128)   x in lanes 0..NDIM-1, zeros elsewhere
#   t_ref      : (tm, 1)     diffusion time (padded rows carry t = 1)
#   w1_ref     : (128, 128)  layer-1 weight, zero-padded from (12, 50)
#   wstack_ref : (4,128,128) [w2, w3, w4, w5] zero-padded from (50,50)/(50,2)
#   misc_ref   : (8, 128)    rows 0..4 = b1..b5 (padded), row 5 = 2*pi*W laid
#                            out over lanes 2..11, row 6 = phase (pi/2 on the
#                            cos lanes 7..11), row 7 unused padding
#   out_ref    : (tm, 128)   lanes 0..NDIM-1 = score, lanes >= NDIM = 0
# ---------------------------------------------------------------------------
def _score_kernel(x_ref, t_ref, w1_ref, wstack_ref, misc_ref, out_ref):
    x = x_ref[...]                               # (tm, 128)
    t = t_ref[...]                               # (tm, 1)
    misc = misc_ref[...]                         # (8, 128)

    # v = std^2 = (sigma^(2t) - 1) / (2 ln sigma)
    v = (jnp.exp((2.0 * LN_SIGMA) * t) - 1.0) * (1.0 / (2.0 * LN_SIGMA))
    # ln_std = log(sqrt(v)) / 4 = 0.125 * log(v)   (sqrt folded away)
    ln_std = 0.125 * jnp.log(v)
    r_opv = jax.lax.rsqrt(1.0 + v)               # 1 / sqrt(1 + std^2)
    inv_std = jax.lax.rsqrt(v)                   # 1 / std

    # Fourier embedding with a single sin: cos(z) = sin(z + pi/2).
    # Coefficient row (2*pi folded in) and phase row are zero outside lanes
    # 2..11, so those lanes evaluate to sin(0) = 0.
    trig = jnp.sin(ln_std * misc[5:6, :] + misc[6:7, :])        # (tm, 128)

    # concat(x / sqrt(1+std^2), sin, cos) without a concatenate: x already
    # sits in lanes 0..1 (zeros elsewhere), trig fills lanes 2..11.
    inp = x * r_opv + trig                                       # (tm, 128)

    h = jnp.tanh(jnp.dot(inp, w1_ref[...], preferred_element_type=jnp.float32)
                 + misc[0:1, :])
    h = jnp.tanh(jnp.dot(h, wstack_ref[0], preferred_element_type=jnp.float32)
                 + misc[1:2, :])
    h = jnp.tanh(jnp.dot(h, wstack_ref[1], preferred_element_type=jnp.float32)
                 + misc[2:3, :])
    h = jnp.tanh(jnp.dot(h, wstack_ref[2], preferred_element_type=jnp.float32)
                 + misc[3:4, :])
    pred = jnp.dot(h, wstack_ref[3], preferred_element_type=jnp.float32) + misc[4:5, :]

    # Lane-dense store; only lanes [:NDIM] are meaningful (the rest are 0 and
    # discarded by the wrapper slice).
    out_ref[...] = pred * inv_std - x * (r_opv * r_opv)


# ---------------------------------------------------------------------------
# Wrapper: generation-aware tiling + bucketed padding.
# ---------------------------------------------------------------------------
def _round_up(n, m):
    return ((n + m - 1) // m) * m


def _num_tensorcores():
    """v7x chips expose 2 TensorCores per chip; earlier generations 1."""
    try:
        kind = jax.devices()[0].device_kind.lower()
    except Exception:
        kind = ""
    return 2 if "v7" in kind else 1


def score_model_forward(x, t, packed, *, max_tile_rows=4096):
    # NOTE: as in the reference model, t == 0 gives std == 0 (inf/nan); callers
    # must sample t > 0.  Padded rows use t = 1 and are discarded.
    B = x.shape[0]
    x = x.astype(jnp.float32)
    t = jnp.reshape(t, (-1, 1)).astype(jnp.float32)

    n_cores = _num_tensorcores()
    # Bucket the padded batch to a power of two (>= 8 * n_cores) so distinct
    # small B values share one compiled kernel.
    bp = max(8 * n_cores, 1 << max(3, (B - 1).bit_length()))
    # One tile per TensorCore (whole batch in one grid step on 1-TC chips),
    # unless a tile would exceed max_tile_rows.
    n_tiles = max(n_cores, pl.cdiv(bp, max_tile_rows))
    n_tiles = _round_up(n_tiles, n_cores)
    bp = _round_up(bp, 8 * n_tiles)
    tm = bp // n_tiles

    # Two cheap, fusable pads instead of zeros + .at[].set chains.
    xpad = jnp.pad(x, ((0, bp - B), (0, LANES - NDIM)))                 # (bp, 128)
    tpad = jnp.pad(t, ((0, bp - B), (0, 0)), constant_values=1.0)       # (bp, 1)

    flops = int(2 * bp * 5 * LANES * LANES)
    transcendentals = int(bp * (5 * LANES + 4))
    bytes_accessed = int(4 * (bp * (2 * LANES + 1) + 5 * LANES * LANES + 8 * LANES))

    out = pl.pallas_call(
        _score_kernel,
        out_shape=jax.ShapeDtypeStruct((bp, LANES), jnp.float32),
        grid=(n_tiles,),
        in_specs=[
            pl.BlockSpec((tm, LANES), lambda i: (i, 0)),
            pl.BlockSpec((tm, 1), lambda i: (i, 0)),
            pl.BlockSpec((LANES, LANES), lambda i: (0, 0)),               # resident
            pl.BlockSpec((4, LANES, LANES), lambda i: (0, 0, 0)),         # resident
            pl.BlockSpec((8, LANES), lambda i: (0, 0)),                   # resident
        ],
        out_specs=pl.BlockSpec((tm, LANES), lambda i: (i, 0)),
        compiler_params=pltpu.CompilerParams(dimension_semantics=("parallel",)),
        cost_estimate=pl.CostEstimate(flops=flops,
                                      transcendentals=transcendentals,
                                      bytes_accessed=bytes_accessed),
    )(xpad, tpad, packed["w1"], packed["wstack"], packed["misc"])
    return out[:B, :NDIM]


# ---------------------------------------------------------------------------
# Deterministic parameter init (mimics torch defaults: Linear weights/bias
# uniform(+-1/sqrt(fan_in)), Fourier W ~ N(0,1)*scale with scale=1).
# Weights are stored transposed, i.e. (in_features, out_features).
# ---------------------------------------------------------------------------
def init_params(key):
    keys = jax.random.split(key, 11)

    def linear(kw, kb, fan_in, fan_out):
        bound = 1.0 / math.sqrt(fan_in)
        w = jax.random.uniform(kw, (fan_in, fan_out), jnp.float32, -bound, bound)
        b = jax.random.uniform(kb, (1, fan_out), jnp.float32, -bound, bound)
        return w, b

    wf = jax.random.normal(keys[0], (1, TED_HALF), jnp.float32)  # scale = 1
    w1, b1 = linear(keys[1], keys[2], IN0, NHIDDEN)
    w2, b2 = linear(keys[3], keys[4], NHIDDEN, NHIDDEN)
    w3, b3 = linear(keys[5], keys[6], NHIDDEN, NHIDDEN)
    w4, b4 = linear(keys[7], keys[8], NHIDDEN, NHIDDEN)
    w5, b5 = linear(keys[9], keys[10], NHIDDEN, NDIM)
    return dict(wf=wf, w1=w1, b1=b1, w2=w2, b2=b2, w3=w3, b3=b3,
                w4=w4, b4=b4, w5=w5, b5=b5)


def pack_params(p):
    """Pack logical parameters into the lane-dense slabs the kernel expects."""
    def pad_mat(w):
        return jnp.zeros((LANES, LANES), jnp.float32).at[:w.shape[0], :w.shape[1]].set(w)

    def pad_row(b):
        b = jnp.reshape(b, (-1,))
        return jnp.zeros((LANES,), jnp.float32).at[:b.shape[0]].set(b)

    w1p = pad_mat(p["w1"])
    wstack = jnp.stack([pad_mat(p["w2"]), pad_mat(p["w3"]),
                        pad_mat(p["w4"]), pad_mat(p["w5"])])     # (4, 128, 128)

    wf2pi = jnp.zeros((LANES,), jnp.float32)
    wf2pi = wf2pi.at[NDIM:NDIM + TED_HALF].set(TWO_PI * p["wf"][0])
    wf2pi = wf2pi.at[NDIM + TED_HALF:IN0].set(TWO_PI * p["wf"][0])
    phase = jnp.zeros((LANES,), jnp.float32)
    phase = phase.at[NDIM + TED_HALF:IN0].set(0.5 * math.pi)     # cos lanes

    misc = jnp.stack([pad_row(p["b1"]), pad_row(p["b2"]), pad_row(p["b3"]),
                      pad_row(p["b4"]), pad_row(p["b5"]), wf2pi, phase,
                      jnp.zeros((LANES,), jnp.float32)])         # (8, 128)
    return dict(w1=w1p, wstack=wstack, misc=misc)


# ---------------------------------------------------------------------------
# Pure-JAX reference (mirrors the PyTorch forward) for a correctness check.
# ---------------------------------------------------------------------------
def reference_forward(x, t, params):
    t = t.reshape(-1, 1)
    std = jnp.sqrt((SIGMA ** (2.0 * t) - 1.0) / (2.0 * LN_SIGMA))
    ln_std = jnp.log(std) / 4.0
    proj = ln_std * params["wf"] * TWO_PI
    t_embed = jnp.concatenate([jnp.sin(proj), jnp.cos(proj)], axis=-1)
    xs = x / jnp.sqrt(1.0 + std ** 2)
    h = jnp.tanh(jnp.concatenate([xs, t_embed], axis=1) @ params["w1"] + params["b1"])
    h = jnp.tanh(h @ params["w2"] + params["b2"])
    h = jnp.tanh(h @ params["w3"] + params["b3"])
    h = jnp.tanh(h @ params["w4"] + params["b4"])
    pred = h @ params["w5"] + params["b5"]
    return pred / std - x / (1.0 + std ** 2)


if __name__ == "__main__":
    key = jax.random.PRNGKey(0)
    k_x, k_t, k_p = jax.random.split(key, 3)

    B = 200  # not a power of two -> exercises row padding / bucketing
    x = jax.random.normal(k_x, (B, NDIM), jnp.float32)
    # avoid t == 0 (std -> 0 there, as noted in the original module)
    t = jax.random.uniform(k_t, (B,), jnp.float32, minval=0.1, maxval=1.0)

    params = init_params(k_p)
    packed = pack_params(params)

    out = score_model_forward(x, t, packed)
    out = jax.block_until_ready(out)

    ref = reference_forward(x, t, params)
    assert out.shape == (B, NDIM)
    err = jnp.max(jnp.abs(out - ref))
    assert jnp.allclose(out, ref, rtol=2e-4, atol=2e-4), f"max abs err = {err}"

    print("KERNEL_OK")
</pallas_src>

<mosaic_0001>
module attributes {stable_mosaic.version = 11 : i64} {
  func.func @_score_kernel(%arg0: i32, %arg1: memref<256x128xf32, #tpu.memory_space<vmem>>, %arg2: memref<256x1xf32, #tpu.memory_space<vmem>>, %arg3: memref<128x128xf32, #tpu.memory_space<vmem>>, %arg4: memref<4x128x128xf32, #tpu.memory_space<vmem>>, %arg5: memref<8x128xf32, #tpu.memory_space<vmem>>, %arg6: memref<256x128xf32, #tpu.memory_space<vmem>>) attributes {dimension_semantics = [#tpu.dimension_semantics<parallel>], iteration_bounds = array<i64: 1>, scalar_prefetch = 0 : i64, scratch_operands = 0 : i64, tpu.core_type = #tpu.core_type<tc>, window_params = [{transform_indices = @transform_0, window_bounds = array<i64: 256, 128>}, {transform_indices = @transform_1, window_bounds = array<i64: 256, 1>}, {pipeline_mode = #tpu.pipeline_mode<synchronous>, transform_indices = @transform_2, window_bounds = array<i64: 128, 128>}, {pipeline_mode = #tpu.pipeline_mode<synchronous>, transform_indices = @transform_3, window_bounds = array<i64: 4, 128, 128>}, {pipeline_mode = #tpu.pipeline_mode<synchronous>, transform_indices = @transform_4, window_bounds = array<i64: 8, 128>}, {transform_indices = @transform_5, window_bounds = array<i64: 256, 128>}]} {
    %c0 = arith.constant 0 : index
    %c0_0 = arith.constant 0 : index
    %0 = vector.load %arg1[%c0, %c0_0] : memref<256x128xf32, #tpu.memory_space<vmem>>, vector<256x128xf32>
    %c0_1 = arith.constant 0 : index
    %c0_2 = arith.constant 0 : index
    %1 = vector.load %arg2[%c0_1, %c0_2] : memref<256x1xf32, #tpu.memory_space<vmem>>, vector<256x1xf32>
    %c0_3 = arith.constant 0 : index
    %c0_4 = arith.constant 0 : index
    %2 = vector.load %arg5[%c0_3, %c0_4] : memref<8x128xf32, #tpu.memory_space<vmem>>, vector<8x128xf32>
    %cst = arith.constant 6.43775177 : f32
    %3 = vector.broadcast %cst : f32 to vector<256x1xf32>
    %4 = arith.mulf %3, %1 : vector<256x1xf32>
    %5 = math.exp %4 : vector<256x1xf32>
    %cst_5 = arith.constant 1.000000e+00 : f32
    %6 = vector.broadcast %cst_5 : f32 to vector<256x1xf32>
    %7 = arith.subf %5, %6 : vector<256x1xf32>
    %cst_6 = arith.constant 0.155333728 : f32
    %8 = vector.broadcast %cst_6 : f32 to vector<256x1xf32>
    %9 = arith.mulf %7, %8 : vector<256x1xf32>
    %10 = math.log %9 : vector<256x1xf32>
    %cst_7 = arith.constant 1.250000e-01 : f32
    %11 = vector.broadcast %cst_7 : f32 to vector<256x1xf32>
    %12 = arith.mulf %11, %10 : vector<256x1xf32>
    %cst_8 = arith.constant 1.000000e+00 : f32
    %13 = vector.broadcast %cst_8 : f32 to vector<256x1xf32>
    %14 = arith.addf %13, %9 : vector<256x1xf32>
    %15 = math.rsqrt %14 : vector<256x1xf32>
    %16 = math.rsqrt %9 : vector<256x1xf32>
    %17 = vector.extract_strided_slice %2 {offsets = [5, 0], sizes = [1, 128], strides = [1, 1]} : vector<8x128xf32> to vector<1x128xf32>
    %18 = vector.broadcast %12 : vector<256x1xf32> to vector<256x128xf32>
    %19 = vector.broadcast %17 : vector<1x128xf32> to vector<256x128xf32>
    %20 = arith.mulf %18, %19 : vector<256x128xf32>
    %21 = vector.extract_strided_slice %2 {offsets = [6, 0], sizes = [1, 128], strides = [1, 1]} : vector<8x128xf32> to vector<1x128xf32>
    %22 = vector.broadcast %21 : vector<1x128xf32> to vector<256x128xf32>
    %23 = arith.addf %20, %22 : vector<256x128xf32>
    %24 = math.sin %23 : vector<256x128xf32>
    %25 = vector.broadcast %15 : vector<256x1xf32> to vector<256x128xf32>
    %26 = arith.mulf %0, %25 : vector<256x128xf32>
    %27 = arith.addf %26, %24 : vector<256x128xf32>
    %c0_9 = arith.constant 0 : index
    %c0_10 = arith.constant 0 : index
    %28 = vector.load %arg3[%c0_9, %c0_10] : memref<128x128xf32, #tpu.memory_space<vmem>>, vector<128x128xf32>
    %cst_11 = arith.constant dense<0.000000e+00> : vector<256x128xf32>
    %29 = tpu.matmul %27, %28, %cst_11 {dimension_numbers = #tpu.dot_dimension_numbers<[1], [0], [0], [1], [0, 0, 1, 1], [], []>} : vector<256x128xf32>, vector<128x128xf32>, vector<256x128xf32> -> vector<256x128xf32>
    %30 = vector.extract_strided_slice %2 {offsets = [0, 0], sizes = [1, 128], strides = [1, 1]} : vector<8x128xf32> to vector<1x128xf32>
    %31 = vector.broadcast %30 : vector<1x128xf32> to vector<256x128xf32>
    %32 = arith.addf %29, %31 : vector<256x128xf32>
    %33 = math.tanh %32 : vector<256x128xf32>
    %c0_12 = arith.constant 0 : index
    %c0_13 = arith.constant 0 : index
    %c0_14 = arith.constant 0 : index
    %34 = vector.load %arg4[%c0_12, %c0_13, %c0_14] : memref<4x128x128xf32, #tpu.memory_space<vmem>>, vector<1x128x128xf32>
    %35 = vector.shape_cast %34 : vector<1x128x128xf32> to vector<128x128xf32>
    %cst_15 = arith.constant dense<0.000000e+00> : vector<256x128xf32>
    %36 = tpu.matmul %33, %35, %cst_15 {dimension_numbers = #tpu.dot_dimension_numbers<[1], [0], [0], [1], [0, 0, 1, 1], [], []>} : vector<256x128xf32>, vector<128x128xf32>, vector<256x128xf32> -> vector<256x128xf32>
    %37 = vector.extract_strided_slice %2 {offsets = [1, 0], sizes = [1, 128], strides = [1, 1]} : vector<8x128xf32> to vector<1x128xf32>
    %38 = vector.broadcast %37 : vector<1x128xf32> to vector<256x128xf32>
    %39 = arith.addf %36, %38 : vector<256x128xf32>
    %40 = math.tanh %39 : vector<256x128xf32>
    %c1 = arith.constant 1 : index
    %c0_16 = arith.constant 0 : index
    %c0_17 = arith.constant 0 : index
    %41 = vector.load %arg4[%c1, %c0_16, %c0_17] : memref<4x128x128xf32, #tpu.memory_space<vmem>>, vector<1x128x128xf32>
    %42 = vector.shape_cast %41 : vector<1x128x128xf32> to vector<128x128xf32>
    %cst_18 = arith.constant dense<0.000000e+00> : vector<256x128xf32>
    %43 = tpu.matmul %40, %42, %cst_18 {dimension_numbers = #tpu.dot_dimension_numbers<[1], [0], [0], [1], [0, 0, 1, 1], [], []>} : vector<256x128xf32>, vector<128x128xf32>, vector<256x128xf32> -> vector<256x128xf32>
    %44 = vector.extract_strided_slice %2 {offsets = [2, 0], sizes = [1, 128], strides = [1, 1]} : vector<8x128xf32> to vector<1x128xf32>
    %45 = vector.broadcast %44 : vector<1x128xf32> to vector<256x128xf32>
    %46 = arith.addf %43, %45 : vector<256x128xf32>
    %47 = math.tanh %46 : vector<256x128xf32>
    %c2 = arith.constant 2 : index
    %c0_19 = arith.constant 0 : index
    %c0_20 = arith.constant 0 : index
    %48 = vector.load %arg4[%c2, %c0_19, %c0_20] : memref<4x128x128xf32, #tpu.memory_space<vmem>>, vector<1x128x128xf32>
    %49 = vector.shape_cast %48 : vector<1x128x128xf32> to vector<128x128xf32>
    %cst_21 = arith.constant dense<0.000000e+00> : vector<256x128xf32>
    %50 = tpu.matmul %47, %49, %cst_21 {dimension_numbers = #tpu.dot_dimension_numbers<[1], [0], [0], [1], [0, 0, 1, 1], [], []>} : vector<256x128xf32>, vector<128x128xf32>, vector<256x128xf32> -> vector<256x128xf32>
    %51 = vector.extract_strided_slice %2 {offsets = [3, 0], sizes = [1, 128], strides = [1, 1]} : vector<8x128xf32> to vector<1x128xf32>
    %52 = vector.broadcast %51 : vector<1x128xf32> to vector<256x128xf32>
    %53 = arith.addf %50, %52 : vector<256x128xf32>
    %54 = math.tanh %53 : vector<256x128xf32>
    %c3 = arith.constant 3 : index
    %c0_22 = arith.constant 0 : index
    %c0_23 = arith.constant 0 : index
    %55 = vector.load %arg4[%c3, %c0_22, %c0_23] : memref<4x128x128xf32, #tpu.memory_space<vmem>>, vector<1x128x128xf32>
    %56 = vector.shape_cast %55 : vector<1x128x128xf32> to vector<128x128xf32>
    %cst_24 = arith.constant dense<0.000000e+00> : vector<256x128xf32>
    %57 = tpu.matmul %54, %56, %cst_24 {dimension_numbers = #tpu.dot_dimension_numbers<[1], [0], [0], [1], [0, 0, 1, 1], [], []>} : vector<256x128xf32>, vector<128x128xf32>, vector<256x128xf32> -> vector<256x128xf32>
    %58 = vector.extract_strided_slice %2 {offsets = [4, 0], sizes = [1, 128], strides = [1, 1]} : vector<8x128xf32> to vector<1x128xf32>
    %59 = vector.broadcast %58 : vector<1x128xf32> to vector<256x128xf32>
    %60 = arith.addf %57, %59 : vector<256x128xf32>
    %61 = vector.broadcast %16 : vector<256x1xf32> to vector<256x128xf32>
    %62 = arith.mulf %60, %61 : vector<256x128xf32>
    %63 = arith.mulf %15, %15 : vector<256x1xf32>
    %64 = vector.broadcast %63 : vector<256x1xf32> to vector<256x128xf32>
    %65 = arith.mulf %0, %64 : vector<256x128xf32>
    %66 = arith.subf %62, %65 : vector<256x128xf32>
    %c0_25 = arith.constant 0 : index
    %c0_26 = arith.constant 0 : index
    %67 = vector.load %arg6[%c0_25, %c0_26] : memref<256x128xf32, #tpu.memory_space<vmem>>, vector<256x128xf32>
    tpu.vector_store %arg6[%c0_25, %c0_26], %66 {strides = array<i32>} : memref<256x128xf32, #tpu.memory_space<vmem>>, vector<256x128xf32>,
    return
  }
  func.func @transform_0(%arg0: i32) -> (i32, i32) {
    %c0_i32 = arith.constant 0 : i32
    %c0_i32_0 = arith.constant 0 : i32
    return %arg0, %c0_i32 : i32, i32
  }
  func.func @transform_1(%arg0: i32) -> (i32, i32) {
    %c0_i32 = arith.constant 0 : i32
    %c0_i32_0 = arith.constant 0 : i32
    return %arg0, %c0_i32 : i32, i32
  }
  func.func @transform_2(%arg0: i32) -> (i32, i32) {
    %c0_i32 = arith.constant 0 : i32
    %c0_i32_0 = arith.constant 0 : i32
    %c0_i32_1 = arith.constant 0 : i32
    return %c0_i32, %c0_i32_0 : i32, i32
  }
  func.func @transform_3(%arg0: i32) -> (i32, i32, i32) {
    %c0_i32 = arith.constant 0 : i32
    %c0_i32_0 = arith.constant 0 : i32
    %c0_i32_1 = arith.constant 0 : i32
    %c0_i32_2 = arith.constant 0 : i32
    return %c0_i32, %c0_i32_0, %c0_i32_1 : i32, i32, i32
  }
  func.func @transform_4(%arg0: i32) -> (i32, i32) {
    %c0_i32 = arith.constant 0 : i32
    %c0_i32_0 = arith.constant 0 : i32
    %c0_i32_1 = arith.constant 0 : i32
    return %c0_i32, %c0_i32_0 : i32, i32
  }
  func.func @transform_5(%arg0: i32) -> (i32, i32) {
    %c0_i32 = arith.constant 0 : i32
    %c0_i32_0 = arith.constant 0 : i32
    return %arg0, %c0_i32 : i32, i32
  }
}

</mosaic_0001>

<llo_original>
// kernel: tpu_custom_call.1
$region0: #{tpu_custom_call.1}
  #allocation0 [shape = 'u32[]', space=smem, size = 0x4, offset = 0x4, fixed_abs, tag = 'smem constant byte address 0x4 - core index']
  #allocation1 [shape = 'u32[144,128]{1,0:T(1,128)}', space=vmem, size = 0x12000, scoped, tag = 'internal scratch']
  %s0 = inlined_call_operand.vmem [shape: f32[256,128], index: 0, kind: input, shape index: {}]
  %s1 = inlined_call_operand.vmem [shape: f32[256,1], index: 1, kind: input, shape index: {}]
  %s2 = inlined_call_operand.hbm [shape: f32[128,128], index: 2, kind: input, shape index: {}]
  %s3 = inlined_call_operand.hbm [shape: f32[4,128,128], index: 3, kind: input, shape index: {}]
  %s4 = inlined_call_operand.vmem [shape: f32[8,128], index: 4, kind: input, shape index: {}]
  %s5 = inlined_call_operand.hbm [shape: f32[256,128], index: 5, kind: output, shape index: {}]
  %s6 = sld [smem:[#allocation0]]
  $region38: #{tpu_custom_call.1} parent=0
    _
  %s8 = ssub.s32 1, %s6
  %s9 = scalar_select 0, %s8, %s6
  $region1: #{tpu_custom_call.1} parent=0
    #allocation2 [shape = 'u8[65536]{0}', space=vmem, size = 0x10000, scoped, tag = 'input window, operand 2, single buffered']
    #allocation3 [shape = 's32[1]{0}', space=sflag, size = 0x4, scoped, tag = 'scoped memory for tpu_custom_call.1']
    #allocation4 [shape = 's32[1]{0}', space=sflag, size = 0x4, scoped, tag = 'scoped memory for tpu_custom_call.1']
    #allocation5 [shape = 'u8[262144]{0}', space=vmem, size = 0x40000, scoped, tag = 'input window, operand 3, single buffered']
    #allocation6 [shape = 's32[1]{0}', space=sflag, size = 0x4, scoped, tag = 'scoped memory for tpu_custom_call.1']
    #allocation7 [shape = 'u8[131072]{0}', space=vmem, size = 0x20000, scoped, tag = 'output window, operand 0, single buffered']
    %10 = vsyncpa [#allocation3], 0
    %11 = vsyncpa [#allocation6], 0
    %12 = vsyncpa [#allocation4], 0
    // Predicated region
    $region2: #{tpu_custom_call.1} parent=1 // pred_check
      _
    $region3: #{tpu_custom_call.1} parent=1 // pred_check_branch
      %14 = sbr.rel (0) target = $region5
    $region4: #{tpu_custom_call.1} parent=1 // pred_region
      _
    $region5: #{tpu_custom_call.1} parent=1 // pred_fallthru
      _
    // Predicated region
    $region6: #{tpu_custom_call.1} parent=1 // pred_check
      _
    $region7: #{tpu_custom_call.1} parent=1 // pred_check_branch
      %16 = sbr.rel (0) target = $region9
    $region8: #{tpu_custom_call.1} parent=1 // pred_region
      _
    $region9: #{tpu_custom_call.1} parent=1 // pred_fallthru
      _
    // Predicated region
    $region10: #{tpu_custom_call.1} parent=1 // pred_check
      _
    $region11: #{tpu_custom_call.1} parent=1 // pred_check_branch
      %18 = sbr.rel (0) target = $region13
    $region12: #{tpu_custom_call.1} parent=1 // pred_region
      %s20 = ssub.s32 2048, 2048
      %21 = vsyncadd [#allocation3], %s20
      %s22 = sshll.u32 [#allocation2], 4
      %s23 = int_to_ptr.vmem [resolvable:$true] %s22
      %28 = dma.hbm_to_vmem [thread:$0]  %s2, 2048, %s23, [#allocation3], 128, 128, 8
    $region13: #{tpu_custom_call.1} parent=1 // pred_fallthru
      _
    // Predicated region
    $region14: #{tpu_custom_call.1} parent=1 // pred_check
      _
    $region15: #{tpu_custom_call.1} parent=1 // pred_check_branch
      %30 = sbr.rel (0) target = $region17
    $region16: #{tpu_custom_call.1} parent=1 // pred_region
      %s32 = ssub.s32 8192, 8192
      %33 = vsyncadd [#allocation6], %s32
      %s34 = sshll.u32 [#allocation5], 4
      %s35 = int_to_ptr.vmem [resolvable:$true] %s34
      %40 = dma.hbm_to_vmem [thread:$0]  %s3, 8192, %s35, [#allocation6], 128, 128, 8
    $region17: #{tpu_custom_call.1} parent=1 // pred_fallthru
      _
    // Predicated region
    $region18: #{tpu_custom_call.1} parent=1 // pred_check
      _
    $region19: #{tpu_custom_call.1} parent=1 // pred_check_branch
      %42 = sbr.rel (0) target = $region21
    $region20: #{tpu_custom_call.1} parent=1 // pred_region
      _
    $region21: #{tpu_custom_call.1} parent=1 // pred_fallthru
      _
    // Predicated region
    $region22: #{tpu_custom_call.1} parent=1 // pred_check
      _
    $region23: #{tpu_custom_call.1} parent=1 // pred_check_branch
      %44 = sbr.rel (0) target = $region25
    $region24: #{tpu_custom_call.1} parent=1 // pred_region
      %45 = dma.done [#allocation3], 2048
    $region25: #{tpu_custom_call.1} parent=1 // pred_fallthru
      _
    // Predicated region
    $region26: #{tpu_custom_call.1} parent=1 // pred_check
      _
    $region27: #{tpu_custom_call.1} parent=1 // pred_check_branch
      %47 = sbr.rel (0) target = $region29
    $region28: #{tpu_custom_call.1} parent=1 // pred_region
      %48 = dma.done [#allocation6], 8192
    $region29: #{tpu_custom_call.1} parent=1 // pred_fallthru
      _
    %v49 = vld [vmem:[%s0] sm:$0xff]
    %v50 = vld [vmem:[%s0 + $0x8] sm:$0xff]
    %v51 = vld [vmem:[%s0 + $0x10] sm:$0xff]
    %v52 = vld [vmem:[%s0 + $0x18] sm:$0xff]
    %v53 = vld [vmem:[%s0 + $0x20] sm:$0xff]
    %v54 = vld [vmem:[%s0 + $0x28] sm:$0xff]
    %v55 = vld [vmem:[%s0 + $0x30] sm:$0xff]
    %v56 = vld [vmem:[%s0 + $0x38] sm:$0xff]
    %v57 = vld [vmem:[%s0 + $0x40] sm:$0xff]
    %v58 = vld [vmem:[%s0 + $0x48] sm:$0xff]
    %v59 = vld [vmem:[%s0 + $0x50] sm:$0xff]
    %v60 = vld [vmem:[%s0 + $0x58] sm:$0xff]
    %v61 = vld [vmem:[%s0 + $0x60] sm:$0xff]
    %v62 = vld [vmem:[%s0 + $0x68] sm:$0xff]
    %v63 = vld [vmem:[%s0 + $0x70] sm:$0xff]
    %v64 = vld [vmem:[%s0 + $0x78] sm:$0xff]
    %v65 = vld [vmem:[%s0 + $0x80] sm:$0xff]
    %v66 = vld [vmem:[%s0 + $0x88] sm:$0xff]
    %v67 = vld [vmem:[%s0 + $0x90] sm:$0xff]
    %v68 = vld [vmem:[%s0 + $0x98] sm:$0xff]
    %v69 = vld [vmem:[%s0 + $0xa0] sm:$0xff]
    %v70 = vld [vmem:[%s0 + $0xa8] sm:$0xff]
    %v71 = vld [vmem:[%s0 + $0xb0] sm:$0xff]
    %v72 = vld [vmem:[%s0 + $0xb8] sm:$0xff]
    %v73 = vld [vmem:[%s0 + $0xc0] sm:$0xff]
    %v74 = vld [vmem:[%s0 + $0xc8] sm:$0xff]
    %v75 = vld [vmem:[%s0 + $0xd0] sm:$0xff]
    %v76 = vld [vmem:[%s0 + $0xd8] sm:$0xff]
    %v77 = vld [vmem:[%s0 + $0xe0] sm:$0xff]
    %v78 = vld [vmem:[%s0 + $0xe8] sm:$0xff]
    %v79 = vld [vmem:[%s0 + $0xf0] sm:$0xff]
    %v80 = vld [vmem:[%s0 + $0xf8] sm:$0xff]
    %v81 = vld [vmem:[%s1] sm:$0xff]
    %v82 = vld [vmem:[%s1 + $0x8] sm:$0xff]
    %v83 = vld [vmem:[%s1 + $0x10] sm:$0xff]
    %v84 = vld [vmem:[%s1 + $0x18] sm:$0xff]
    %v85 = vld [vmem:[%s1 + $0x20] sm:$0xff]
    %v86 = vld [vmem:[%s1 + $0x28] sm:$0xff]
    %v87 = vld [vmem:[%s1 + $0x30] sm:$0xff]
    %v88 = vld [vmem:[%s1 + $0x38] sm:$0xff]
    %v89 = vld [vmem:[%s1 + $0x40] sm:$0xff]
    %v90 = vld [vmem:[%s1 + $0x48] sm:$0xff]
    %v91 = vld [vmem:[%s1 + $0x50] sm:$0xff]
    %v92 = vld [vmem:[%s1 + $0x58] sm:$0xff]
    %v93 = vld [vmem:[%s1 + $0x60] sm:$0xff]
    %v94 = vld [vmem:[%s1 + $0x68] sm:$0xff]
    %v95 = vld [vmem:[%s1 + $0x70] sm:$0xff]
    %v96 = vld [vmem:[%s1 + $0x78] sm:$0xff]
    %v97 = vld [vmem:[%s1 + $0x80] sm:$0xff]
    %v98 = vld [vmem:[%s1 + $0x88] sm:$0xff]
    %v99 = vld [vmem:[%s1 + $0x90] sm:$0xff]
    %v100 = vld [vmem:[%s1 + $0x98] sm:$0xff]
    %v101 = vld [vmem:[%s1 + $0xa0] sm:$0xff]
    %v102 = vld [vmem:[%s1 + $0xa8] sm:$0xff]
    %v103 = vld [vmem:[%s1 + $0xb0] sm:$0xff]
    %v104 = vld [vmem:[%s1 + $0xb8] sm:$0xff]
    %v105 = vld [vmem:[%s1 + $0xc0] sm:$0xff]
    %v106 = vld [vmem:[%s1 + $0xc8] sm:$0xff]
    %v107 = vld [vmem:[%s1 + $0xd0] sm:$0xff]
    %v108 = vld [vmem:[%s1 + $0xd8] sm:$0xff]
    %v109 = vld [vmem:[%s1 + $0xe0] sm:$0xff]
    %v110 = vld [vmem:[%s1 + $0xe8] sm:$0xff]
    %v111 = vld [vmem:[%s1 + $0xf0] sm:$0xff]
    %v112 = vld [vmem:[%s1 + $0xf8] sm:$0xff]
    %v113 = vld [vmem:[%s4] sm:$0xff]
    %v114 = vmul.f32 %v81, 6.437752
    %v115 = vmul.f32 %v82, 6.437752
    %v116 = vmul.f32 %v83, 6.437752
    %v117 = vmul.f32 %v84, 6.437752
    %v118 = vmul.f32 %v85, 6.437752
    %v119 = vmul.f32 %v86, 6.437752
    %v120 = vmul.f32 %v87, 6.437752
    %v121 = vmul.f32 %v88, 6.437752
    %v122 = vmul.f32 %v89, 6.437752
    %v123 = vmul.f32 %v90, 6.437752
    %v124 = vmul.f32 %v91, 6.437752
    %v125 = vmul.f32 %v92, 6.437752
    %v126 = vmul.f32 %v93, 6.437752
    %v127 = vmul.f32 %v94, 6.437752
    %v128 = vmul.f32 %v95, 6.437752
    %v129 = vmul.f32 %v96, 6.437752
    %v130 = vmul.f32 %v97, 6.437752
    %v131 = vmul.f32 %v98, 6.437752
    %v132 = vmul.f32 %v99, 6.437752
    %v133 = vmul.f32 %v100, 6.437752
    %v134 = vmul.f32 %v101, 6.437752
    %v135 = vmul.f32 %v102, 6.437752
    %v136 = vmul.f32 %v103, 6.437752
    %v137 = vmul.f32 %v104, 6.437752
    %v138 = vmul.f32 %v105, 6.437752
    %v139 = vmul.f32 %v106, 6.437752
    %v140 = vmul.f32 %v107, 6.437752
    %v141 = vmul.f32 %v108, 6.437752
    %v142 = vmul.f32 %v109, 6.437752
    %v143 = vmul.f32 %v110, 6.437752
    %v144 = vmul.f32 %v111, 6.437752
    %v145 = vmul.f32 %v112, 6.437752
    %v146 = vmul.f32 %v114, 1.442695
    %v147 = vpow.pop %v146
    %v148 = vmul.f32 %v115, 1.442695
    %v149 = vpow.pop %v148
    %v150 = vmul.f32 %v116, 1.442695
    %v151 = vpow.pop %v150
    %v152 = vmul.f32 %v117, 1.442695
    %v153 = vpow.pop %v152
    %v154 = vmul.f32 %v118, 1.442695
    %v155 = vpow.pop %v154
    %v156 = vmul.f32 %v119, 1.442695
    %v157 = vpow.pop %v156
    %v158 = vmul.f32 %v120, 1.442695
    %v159 = vpow.pop %v158
    %v160 = vmul.f32 %v121, 1.442695
    %v161 = vpow.pop %v160
    %v162 = vmul.f32 %v122, 1.442695
    %v163 = vpow.pop %v162
    %v164 = vmul.f32 %v123, 1.442695
    %v165 = vpow.pop %v164
    %v166 = vmul.f32 %v124, 1.442695
    %v167 = vpow.pop %v166
    %v168 = vmul.f32 %v125, 1.442695
    %v169 = vpow.pop %v168
    %v170 = vmul.f32 %v126, 1.442695
    %v171 = vpow.pop %v170
    %v172 = vmul.f32 %v127, 1.442695
    %v173 = vpow.pop %v172
    %v174 = vmul.f32 %v128, 1.442695
    %v175 = vpow.pop %v174
    %v176 = vmul.f32 %v129, 1.442695
    %v177 = vpow.pop %v176
    %v178 = vmul.f32 %v130, 1.442695
    %v179 = vpow.pop %v178
    %v180 = vmul.f32 %v131, 1.442695
    %v181 = vpow.pop %v180
    %v182 = vmul.f32 %v132, 1.442695
    %v183 = vpow.pop %v182
    %v184 = vmul.f32 %v133, 1.442695
    %v185 = vpow.pop %v184
    %v186 = vmul.f32 %v134, 1.442695
    %v187 = vpow.pop %v186
    %v188 = vmul.f32 %v135, 1.442695
    %v189 = vpow.pop %v188
    %v190 = vmul.f32 %v136, 1.442695
    %v191 = vpow.pop %v190
    %v192 = vmul.f32 %v137, 1.442695
    %v193 = vpow.pop %v192
    %v194 = vmul.f32 %v138, 1.442695
    %v195 = vpow.pop %v194
    %v196 = vmul.f32 %v139, 1.442695
    %v197 = vpow.pop %v196
    %v198 = vmul.f32 %v140, 1.442695
    %v199 = vpow.pop %v198
    %v200 = vmul.f32 %v141, 1.442695
    %v201 = vpow.pop %v200
    %v202 = vmul.f32 %v142, 1.442695
    %v203 = vpow.pop %v202
    %v204 = vmul.f32 %v143, 1.442695
    %v205 = vpow.pop %v204
    %v206 = vmul.f32 %v144, 1.442695
    %v207 = vpow.pop %v206
    %v208 = vmul.f32 %v145, 1.442695
    %v209 = vpow.pop %v208
    %v210 = vsub.f32 %v147, 1.0
    %v211 = vsub.f32 %v149, 1.0
    %v212 = vsub.f32 %v151, 1.0
    %v213 = vsub.f32 %v153, 1.0
    %v214 = vsub.f32 %v155, 1.0
    %v215 = vsub.f32 %v157, 1.0
    %v216 = vsub.f32 %v159, 1.0
    %v217 = vsub.f32 %v161, 1.0
    %v218 = vsub.f32 %v163, 1.0
    %v219 = vsub.f32 %v165, 1.0
    %v220 = vsub.f32 %v167, 1.0
    %v221 = vsub.f32 %v169, 1.0
    %v222 = vsub.f32 %v171, 1.0
    %v223 = vsub.f32 %v173, 1.0
    %v224 = vsub.f32 %v175, 1.0
    %v225 = vsub.f32 %v177, 1.0
    %v226 = vsub.f32 %v179, 1.0
    %v227 = vsub.f32 %v181, 1.0
    %v228 = vsub.f32 %v183, 1.0
    %v229 = vsub.f32 %v185, 1.0
    %v230 = vsub.f32 %v187, 1.0
    %v231 = vsub.f32 %v189, 1.0
    %v232 = vsub.f32 %v191, 1.0
    %v233 = vsub.f32 %v193, 1.0
    %v234 = vsub.f32 %v195, 1.0
    %v235 = vsub.f32 %v197, 1.0
    %v236 = vsub.f32 %v199, 1.0
    %v237 = vsub.f32 %v201, 1.0
    %v238 = vsub.f32 %v203, 1.0
    %v239 = vsub.f32 %v205, 1.0
    %v240 = vsub.f32 %v207, 1.0
    %v241 = vsub.f32 %v209, 1.0
    %v242 = vmul.f32 %v210, 0.15533373
    %v243 = vmul.f32 %v211, 0.15533373
    %v244 = vmul.f32 %v212, 0.15533373
    %v245 = vmul.f32 %v213, 0.15533373
    %v246 = vmul.f32 %v214, 0.15533373
    %v247 = vmul.f32 %v215, 0.15533373
    %v248 = vmul.f32 %v216, 0.15533373
    %v249 = vmul.f32 %v217, 0.15533373
    %v250 = vmul.f32 %v218, 0.15533373
    %v251 = vmul.f32 %v219, 0.15533373
    %v252 = vmul.f32 %v220, 0.15533373
    %v253 = vmul.f32 %v221, 0.15533373
    %v254 = vmul.f32 %v222, 0.15533373
    %v255 = vmul.f32 %v223, 0.15533373
    %v256 = vmul.f32 %v224, 0.15533373
    %v257 = vmul.f32 %v225, 0.15533373
    %v258 = vmul.f32 %v226, 0.15533373
    %v259 = vmul.f32 %v227, 0.15533373
    %v260 = vmul.f32 %v228, 0.15533373
    %v261 = vmul.f32 %v229, 0.15533373
    %v262 = vmul.f32 %v230, 0.15533373
    %v263 = vmul.f32 %v231, 0.15533373
    %v264 = vmul.f32 %v232, 0.15533373
    %v265 = vmul.f32 %v233, 0.15533373
    %v266 = vmul.f32 %v234, 0.15533373
    %v267 = vmul.f32 %v235, 0.15533373
    %v268 = vmul.f32 %v236, 0.15533373
    %v269 = vmul.f32 %v237, 0.15533373
    %v270 = vmul.f32 %v238, 0.15533373
    %v271 = vmul.f32 %v239, 0.15533373
    %v272 = vmul.f32 %v240, 0.15533373
    %v273 = vmul.f32 %v241, 0.15533373
    %v274 = vlog2.pop %v242
    %v275 = vmul.f32 %v274, 0.6931472
    %v276 = vlog2.pop %v243
    %v277 = vmul.f32 %v276, 0.6931472
    %v278 = vlog2.pop %v244
    %v279 = vmul.f32 %v278, 0.6931472
    %v280 = vlog2.pop %v245
    %v281 = vmul.f32 %v280, 0.6931472
    %v282 = vlog2.pop %v246
    %v283 = vmul.f32 %v282, 0.6931472
    %v284 = vlog2.pop %v247
    %v285 = vmul.f32 %v284, 0.6931472
    %v286 = vlog2.pop %v248
    %v287 = vmul.f32 %v286, 0.6931472
    %v288 = vlog2.pop %v249
    %v289 = vmul.f32 %v288, 0.6931472
    %v290 = vlog2.pop %v250
    %v291 = vmul.f32 %v290, 0.6931472
    %v292 = vlog2.pop %v251
    %v293 = vmul.f32 %v292, 0.6931472
    %v294 = vlog2.pop %v252
    %v295 = vmul.f32 %v294, 0.6931472
    %v296 = vlog2.pop %v253
    %v297 = vmul.f32 %v296, 0.6931472
    %v298 = vlog2.pop %v254
    %v299 = vmul.f32 %v298, 0.6931472
    %v300 = vlog2.pop %v255
    %v301 = vmul.f32 %v300, 0.6931472
    %v302 = vlog2.pop %v256
    %v303 = vmul.f32 %v302, 0.6931472
    %v304 = vlog2.pop %v257
    %v305 = vmul.f32 %v304, 0.6931472
    %v306 = vlog2.pop %v258
    %v307 = vmul.f32 %v306, 0.6931472
    %v308 = vlog2.pop %v259
    %v309 = vmul.f32 %v308, 0.6931472
    %v310 = vlog2.pop %v260
    %v311 = vmul.f32 %v310, 0.6931472
    %v312 = vlog2.pop %v261
    %v313 = vmul.f32 %v312, 0.6931472
    %v314 = vlog2.pop %v262
    %v315 = vmul.f32 %v314, 0.6931472
    %v316 = vlog2.pop %v263
    %v317 = vmul.f32 %v316, 0.6931472
    %v318 = vlog2.pop %v264
    %v319 = vmul.f32 %v318, 0.6931472
    %v320 = vlog2.pop %v265
    %v321 = vmul.f32 %v320, 0.6931472
    %v322 = vlog2.pop %v266
    %v323 = vmul.f32 %v322, 0.6931472
    %v324 = vlog2.pop %v267
    %v325 = vmul.f32 %v324, 0.6931472
    %v326 = vlog2.pop %v268
    %v327 = vmul.f32 %v326, 0.6931472
    %v328 = vlog2.pop %v269
    %v329 = vmul.f32 %v328, 0.6931472
    %v330 = vlog2.pop %v270
    %v331 = vmul.f32 %v330, 0.6931472
    %v332 = vlog2.pop %v271
    %v333 = vmul.f32 %v332, 0.6931472
    %v334 = vlog2.pop %v272
    %v335 = vmul.f32 %v334, 0.6931472
    %v336 = vlog2.pop %v273
    %v337 = vmul.f32 %v336, 0.6931472
    %v338 = vmul.f32 %v275, 0.125
    %v339 = vmul.f32 %v277, 0.125
    %v340 = vmul.f32 %v279, 0.125
    %v341 = vmul.f32 %v281, 0.125
    %v342 = vmul.f32 %v283, 0.125
    %v343 = vmul.f32 %v285, 0.125
    %v344 = vmul.f32 %v287, 0.125
    %v345 = vmul.f32 %v289, 0.125
    %v346 = vmul.f32 %v291, 0.125
    %v347 = vmul.f32 %v293, 0.125
    %v348 = vmul.f32 %v295, 0.125
    %v349 = vmul.f32 %v297, 0.125
    %v350 = vmul.f32 %v299, 0.125
    %v351 = vmul.f32 %v301, 0.125
    %v352 = vmul.f32 %v303, 0.125
    %v353 = vmul.f32 %v305, 0.125
    %v354 = vmul.f32 %v307, 0.125
    %v355 = vmul.f32 %v309, 0.125
    %v356 = vmul.f32 %v311, 0.125
    %v357 = vmul.f32 %v313, 0.125
    %v358 = vmul.f32 %v315, 0.125
    %v359 = vmul.f32 %v317, 0.125
    %v360 = vmul.f32 %v319, 0.125
    %v361 = vmul.f32 %v321, 0.125
    %v362 = vmul.f32 %v323, 0.125
    %v363 = vmul.f32 %v325, 0.125
    %v364 = vmul.f32 %v327, 0.125
    %v365 = vmul.f32 %v329, 0.125
    %v366 = vmul.f32 %v331, 0.125
    %v367 = vmul.f32 %v333, 0.125
    %v368 = vmul.f32 %v335, 0.125
    %v369 = vmul.f32 %v337, 0.125
    %v370 = vadd.f32 %v242, 1.0
    %v371 = vadd.f32 %v243, 1.0
    %v372 = vadd.f32 %v244, 1.0
    %v373 = vadd.f32 %v245, 1.0
    %v374 = vadd.f32 %v246, 1.0
    %v375 = vadd.f32 %v247, 1.0
    %v376 = vadd.f32 %v248, 1.0
    %v377 = vadd.f32 %v249, 1.0
    %v378 = vadd.f32 %v250, 1.0
    %v379 = vadd.f32 %v251, 1.0
    %v380 = vadd.f32 %v252, 1.0
    %v381 = vadd.f32 %v253, 1.0
    %v382 = vadd.f32 %v254, 1.0
    %v383 = vadd.f32 %v255, 1.0
    %v384 = vadd.f32 %v256, 1.0
    %v385 = vadd.f32 %v257, 1.0
    %v386 = vadd.f32 %v258, 1.0
    %v387 = vadd.f32 %v259, 1.0
    %v388 = vadd.f32 %v260, 1.0
    %v389 = vadd.f32 %v261, 1.0
    %v390 = vadd.f32 %v262, 1.0
    %v391 = vadd.f32 %v263, 1.0
    %v392 = vadd.f32 %v264, 1.0
    %v393 = vadd.f32 %v265, 1.0
    %v394 = vadd.f32 %v266, 1.0
    %v395 = vadd.f32 %v267, 1.0
    %v396 = vadd.f32 %v268, 1.0
    %v397 = vadd.f32 %v269, 1.0
    %v398 = vadd.f32 %v270, 1.0
    %v399 = vadd.f32 %v271, 1.0
    %v400 = vadd.f32 %v272, 1.0
    %v401 = vadd.f32 %v273, 1.0
    %v402 = vrsqrt.pop %v370
    %v403 = vrsqrt.pop %v371
    %v404 = vrsqrt.pop %v372
    %v405 = vrsqrt.pop %v373
    %v406 = vrsqrt.pop %v374
    %v407 = vrsqrt.pop %v375
    %v408 = vrsqrt.pop %v376
    %v409 = vrsqrt.pop %v377
    %v410 = vrsqrt.pop %v378
    %v411 = vrsqrt.pop %v379
    %v412 = vrsqrt.pop %v380
    %v413 = vrsqrt.pop %v381
    %v414 = vrsqrt.pop %v382
    %v415 = vrsqrt.pop %v383
    %v416 = vrsqrt.pop %v384
    %v417 = vrsqrt.pop %v385
    %v418 = vrsqrt.pop %v386
    %v419 = vrsqrt.pop %v387
    %v420 = vrsqrt.pop %v388
    %v421 = vrsqrt.pop %v389
    %v422 = vrsqrt.pop %v390
    %v423 = vrsqrt.pop %v391
    %v424 = vrsqrt.pop %v392
    %v425 = vrsqrt.pop %v393
    %v426 = vrsqrt.pop %v394
    %v427 = vrsqrt.pop %v395
    %v428 = vrsqrt.pop %v396
    %v429 = vrsqrt.pop %v397
    %v430 = vrsqrt.pop %v398
    %v431 = vrsqrt.pop %v399
    %v432 = vrsqrt.pop %v400
    %v433 = vrsqrt.pop %v401
    %v434 = vrsqrt.pop %v242
    %v435 = vrsqrt.pop %v243
    %v436 = vrsqrt.pop %v244
    %v437 = vrsqrt.pop %v245
    %v438 = vrsqrt.pop %v246
    %v439 = vrsqrt.pop %v247
    %v440 = vrsqrt.pop %v248
    %v441 = vrsqrt.pop %v249
    %v442 = vrsqrt.pop %v250
    %v443 = vrsqrt.pop %v251
    %v444 = vrsqrt.pop %v252
    %v445 = vrsqrt.pop %v253
    %v446 = vrsqrt.pop %v254
    %v447 = vrsqrt.pop %v255
    %v448 = vrsqrt.pop %v256
    %v449 = vrsqrt.pop %v257
    %v450 = vrsqrt.pop %v258
    %v451 = vrsqrt.pop %v259
    %v452 = vrsqrt.pop %v260
    %v453 = vrsqrt.pop %v261
    %v454 = vrsqrt.pop %v262
    %v455 = vrsqrt.pop %v263
    %v456 = vrsqrt.pop %v264
    %v457 = vrsqrt.pop %v265
    %v458 = vrsqrt.pop %v266
    %v459 = vrsqrt.pop %v267
    %v460 = vrsqrt.pop %v268
    %v461 = vrsqrt.pop %v269
    %v462 = vrsqrt.pop %v270
    %v463 = vrsqrt.pop %v271
    %v464 = vrsqrt.pop %v272
    %v465 = vrsqrt.pop %v273
    %467 = vset.pattern.permute.xlu0 0
    %468 = vperm.xlu0 %467, %v338
    %v469 = vpop.permute.xlu0 %468
    %472 = vset.pattern.permute.xlu0 0
    %473 = vperm.xlu0 %472, %v339
    %v474 = vpop.permute.xlu0 %473
    %477 = vset.pattern.permute.xlu0 0
    %478 = vperm.xlu0 %477, %v340
    %v479 = vpop.permute.xlu0 %478
    %482 = vset.pattern.permute.xlu0 0
    %483 = vperm.xlu0 %482, %v341
    %v484 = vpop.permute.xlu0 %483
    %487 = vset.pattern.permute.xlu0 0
    %488 = vperm.xlu0 %487, %v342
    %v489 = vpop.permute.xlu0 %488
    %492 = vset.pattern.permute.xlu0 0
    %493 = vperm.xlu0 %492, %v343
    %v494 = vpop.permute.xlu0 %493
    %497 = vset.pattern.permute.xlu0 0
    %498 = vperm.xlu0 %497, %v344
    %v499 = vpop.permute.xlu0 %498
    %502 = vset.pattern.permute.xlu0 0
    %503 = vperm.xlu0 %502, %v345
    %v504 = vpop.permute.xlu0 %503
    %507 = vset.pattern.permute.xlu0 0
    %508 = vperm.xlu0 %507, %v346
    %v509 = vpop.permute.xlu0 %508
    %512 = vset.pattern.permute.xlu0 0
    %513 = vperm.xlu0 %512, %v347
    %v514 = vpop.permute.xlu0 %513
    %517 = vset.pattern.permute.xlu0 0
    %518 = vperm.xlu0 %517, %v348
    %v519 = vpop.permute.xlu0 %518
    %522 = vset.pattern.permute.xlu0 0
    %523 = vperm.xlu0 %522, %v349
    %v524 = vpop.permute.xlu0 %523
    %527 = vset.pattern.permute.xlu0 0
    %528 = vperm.xlu0 %527, %v350
    %v529 = vpop.permute.xlu0 %528
    %532 = vset.pattern.permute.xlu0 0
    %533 = vperm.xlu0 %532, %v351
    %v534 = vpop.permute.xlu0 %533
    %537 = vset.pattern.permute.xlu0 0
    %538 = vperm.xlu0 %537, %v352
    %v539 = vpop.permute.xlu0 %538
    %542 = vset.pattern.permute.xlu0 0
    %543 = vperm.xlu0 %542, %v353
    %v544 = vpop.permute.xlu0 %543
    %547 = vset.pattern.permute.xlu0 0
    %548 = vperm.xlu0 %547, %v354
    %v549 = vpop.permute.xlu0 %548
    %552 = vset.pattern.permute.xlu0 0
    %553 = vperm.xlu0 %552, %v355
    %v554 = vpop.permute.xlu0 %553
    %557 = vset.pattern.permute.xlu0 0
    %558 = vperm.xlu0 %557, %v356
    %v559 = vpop.permute.xlu0 %558
    %562 = vset.pattern.permute.xlu0 0
    %563 = vperm.xlu0 %562, %v357
    %v564 = vpop.permute.xlu0 %563
    %567 = vset.pattern.permute.xlu0 0
    %568 = vperm.xlu0 %567, %v358
    %v569 = vpop.permute.xlu0 %568
    %572 = vset.pattern.permute.xlu0 0
    %573 = vperm.xlu0 %572, %v359
    %v574 = vpop.permute.xlu0 %573
    %577 = vset.pattern.permute.xlu0 0
    %578 = vperm.xlu0 %577, %v360
    %v579 = vpop.permute.xlu0 %578
    %582 = vset.pattern.permute.xlu0 0
    %583 = vperm.xlu0 %582, %v361
    %v584 = vpop.permute.xlu0 %583
    %587 = vset.pattern.permute.xlu0 0
    %588 = vperm.xlu0 %587, %v362
    %v589 = vpop.permute.xlu0 %588
    %592 = vset.pattern.permute.xlu0 0
    %593 = vperm.xlu0 %592, %v363
    %v594 = vpop.permute.xlu0 %593
    %597 = vset.pattern.permute.xlu0 0
    %598 = vperm.xlu0 %597, %v364
    %v599 = vpop.permute.xlu0 %598
    %602 = vset.pattern.permute.xlu0 0
    %603 = vperm.xlu0 %602, %v365
    %v604 = vpop.permute.xlu0 %603
    %607 = vset.pattern.permute.xlu0 0
    %608 = vperm.xlu0 %607, %v366
    %v609 = vpop.permute.xlu0 %608
    %612 = vset.pattern.permute.xlu0 0
    %613 = vperm.xlu0 %612, %v367
    %v614 = vpop.permute.xlu0 %613
    %617 = vset.pattern.permute.xlu0 0
    %618 = vperm.xlu0 %617, %v368
    %v619 = vpop.permute.xlu0 %618
    %622 = vset.pattern.permute.xlu0 0
    %623 = vperm.xlu0 %622, %v369
    %v624 = vpop.permute.xlu0 %623
    %v626 = vlaneseq
    %v627 = vshrl.u32 %v626, 7
    %v628 = vsub.s32 5, %v627
    %v629 = vrot.slane %v113, %v628
    %v630 = vmul.f32 %v469, %v629
    %v631 = vmul.f32 %v474, %v629
    %v632 = vmul.f32 %v479, %v629
    %v633 = vmul.f32 %v484, %v629
    %v634 = vmul.f32 %v489, %v629
    %v635 = vmul.f32 %v494, %v629
    %v636 = vmul.f32 %v499, %v629
    %v637 = vmul.f32 %v504, %v629
    %v638 = vmul.f32 %v509, %v629
    %v639 = vmul.f32 %v514, %v629
    %v640 = vmul.f32 %v519, %v629
    %v641 = vmul.f32 %v524, %v629
    %v642 = vmul.f32 %v529, %v629
    %v643 = vmul.f32 %v534, %v629
    %v644 = vmul.f32 %v539, %v629
    %v645 = vmul.f32 %v544, %v629
    %v646 = vmul.f32 %v549, %v629
    %v647 = vmul.f32 %v554, %v629
    %v648 = vmul.f32 %v559, %v629
    %v649 = vmul.f32 %v564, %v629
    %v650 = vmul.f32 %v569, %v629
    %v651 = vmul.f32 %v574, %v629
    %v652 = vmul.f32 %v579, %v629
    %v653 = vmul.f32 %v584, %v629
    %v654 = vmul.f32 %v589, %v629
    %v655 = vmul.f32 %v594, %v629
    %v656 = vmul.f32 %v599, %v629
    %v657 = vmul.f32 %v604, %v629
    %v658 = vmul.f32 %v609, %v629
    %v659 = vmul.f32 %v614, %v629
    %v660 = vmul.f32 %v619, %v629
    %v661 = vmul.f32 %v624, %v629
    %v662 = vlaneseq
    %v663 = vshrl.u32 %v662, 7
    %v664 = vsub.s32 6, %v663
    %v665 = vrot.slane %v113, %v664
    %v666 = vadd.f32 %v630, %v665
    %v667 = vadd.f32 %v631, %v665
    %v668 = vadd.f32 %v632, %v665
    %v669 = vadd.f32 %v633, %v665
    %v670 = vadd.f32 %v634, %v665
    %v671 = vadd.f32 %v635, %v665
    %v672 = vadd.f32 %v636, %v665
    %v673 = vadd.f32 %v637, %v665
    %v674 = vadd.f32 %v638, %v665
    %v675 = vadd.f32 %v639, %v665
    %v676 = vadd.f32 %v640, %v665
    %v677 = vadd.f32 %v641, %v665
    %v678 = vadd.f32 %v642, %v665
    %v679 = vadd.f32 %v643, %v665
    %v680 = vadd.f32 %v644, %v665
    %v681 = vadd.f32 %v645, %v665
    %v682 = vadd.f32 %v646, %v665
    %v683 = vadd.f32 %v647, %v665
    %v684 = vadd.f32 %v648, %v665
    %v685 = vadd.f32 %v649, %v665
    %v686 = vadd.f32 %v650, %v665
    %v687 = vadd.f32 %v651, %v665
    %v688 = vadd.f32 %v652, %v665
    %v689 = vadd.f32 %v653, %v665
    %v690 = vadd.f32 %v654, %v665
    %v691 = vadd.f32 %v655, %v665
    %v692 = vadd.f32 %v656, %v665
    %v693 = vadd.f32 %v657, %v665
    %v694 = vadd.f32 %v658, %v665
    %v695 = vadd.f32 %v659, %v665
    %v696 = vadd.f32 %v660, %v665
    %v697 = vadd.f32 %v661, %v665
    %v698 = vand.u32 2147483647, %v666
    %vm699 = vcmp.le.f32.partialorder %v698, 0.7853982
    %vm700 = vcmp.lt.s32.totalorder %v666, 0
    %v701 = vand.u32 %v666, 2139095040
    %v702 = vshrl.u32 %v701, 23
    %v703 = vsub.s32 %v702, 127
    %v704 = vand.u32 2147483647, %v666
    %v705 = vand.u32 %v704, 8388607
    %v706 = vor.u32 %v705, 8388608
    %v707 = vsub.s32 0, %v706
    %v708 = vadd.s32 %v703, 1
    %vm709 = vcmp.gt.s32.totalorder %v708, 0
    %v710 = vsel %vm709, %v708, 0
    %v711 = vshrl.u32 %v710, 5
    %v712 = vand.u32 %v710, 31
    %v713 = vsub.s32 32, %v712
    %v714 = vshrl.u32 683565275, %v713
    %v715 = vshll.u32 683565275, %v712
    %v716 = vshrl.u32 2475754826, %v713
    %v717 = vor.u32 %v715, %v716
    %v718 = vshll.u32 2475754826, %v712
    %v719 = vshrl.u32 2131351028, %v713
    %v720 = vor.u32 %v718, %v719
    %v721 = vshll.u32 2131351028, %v712
    %v722 = vshrl.u32 2102212464, %v713
    %v723 = vor.u32 %v721, %v722
    %v724 = vshll.u32 2102212464, %v712
    %v725 = vshrl.u32 920167782, %v713
    %v726 = vor.u32 %v724, %v725
    %v727 = vshll.u32 920167782, %v712
    %v728 = vshrl.u32 1326507024, %v713
    %v729 = vor.u32 %v727, %v728
    %vm730 = vcmp.lt.s32.totalorder %v711, 1
    %vm731 = vcmp.lt.s32.totalorder %v711, 2
    %vm732 = vcmp.lt.s32.totalorder %v711, 3
    %vm733 = vcmp.lt.s32.totalorder %v711, 4
    %v734 = vsel %vm730, %v714, %v717
    %v735 = vsel %vm733, %v723, 2102212464
    %v736 = vsel %vm732, %v720, %v735
    %v737 = vsel %vm731, %v734, %v736
    %v738 = vsel %vm730, %v717, %v720
    %v739 = vsel %vm733, %v726, 920167782
    %v740 = vsel %vm732, %v723, %v739
    %v741 = vsel %vm731, %v738, %v740
    %v742 = vsel %vm730, %v720, %v723
    %v743 = vsel %vm733, %v729, 1326507024
    %v744 = vsel %vm732, %v726, %v743
    %v745 = vsel %vm731, %v742, %v744
    %v746 = vshll.u32 %v706, 8
    %v747 = vmul.u32.u64.compose %v746, %v745
    %v748 = vextract.low.u32 %v747
    %v749 = vextract.high.u32 %v747
    %v750 = vmul.u32.u64.compose %v746, %v741
    %v751 = vextract.low.u32 %v750
    %v752 = vextract.high.u32 %v750
    %v753 = vmul.u32 %v746, %v737
    %v754 = vadd.s32 %v749, %v751
    %vm755 = vc.u32 %v749, %v751
    %v756 = vadd.s32 %v752, 1
    %v757 = vsel %vm755, %v756, %v752
    %v758 = vadd.s32 %v753, %v757
    %v759 = vadd.s32 %v758, 536870912
    %v760 = vshrl.u32 %v759, 30
    %v761 = vshll.u32 %v760, 30
    %v762 = vsub.s32 %v758, %v761
    %vm763 = vcmp.lt.s32.totalorder %v762, 0
    %v764 = vsub.s32 0, %v762
    %v765 = vsel %vm763, %v764, %v762
    %v766 = vclz %v765
    %v767 = vsub.s32 %v766, 2
    %vm768 = vcmp.gt.s32.totalorder 0, %v767
    %v769 = vsel %vm768, 0, %v767
    %v770 = vsub.s32 32, %v769
    %v771 = vshll.u32 %v762, %v769
    %v772 = vshrl.u32 %v754, %v770
    %v773 = vor.u32 %v771, %v772
    %v774 = vsub.s32 4294967266, %v769
    %v775 = vadd.s32 %v774, 127
    %v776 = vshll.u32 %v775, 23
    %v777 = vor.u32 4788187, %v776
    %v778 = vand.u32 2147483647, %v777
    %v780 = vcvt.s32.f32 %v773
    %v781 = vmul.f32 %v780, %v778
    %v782 = vxor.u32 %v781, 2147483648
    %v783 = vsel %vm700, %v782, %v781
    %v784 = vsub.s32 4, %v760
    %v785 = vsel %vm700, %v784, %v760
    %v786 = vsel %vm699, %v666, %v783
    %v787 = vsel %vm699, 0, %v785
    %v788 = vcosq.f32.pop %v786
    %v789 = vsinq.f32.pop %v786
    %vm790 = vweird.f32 %v666
    %v791 = vadd.s32 %v787, 3
    %v792 = vand.u32 %v791, 3
    %vm793 = vcmp.lt.s32.totalorder %v792, 2
    %vm794 = vcmp.eq.s32.totalorder %v792, 0
    %v795 = vxor.u32 %v789, 2147483648
    %v796 = vsel %vm794, %v788, %v795
    %vm797 = vcmp.eq.s32.totalorder %v792, 2
    %v798 = vxor.u32 %v788, 2147483648
    %v799 = vsel %vm797, %v798, %v789
    %v800 = vsel %vm793, %v796, %v799
    %v801 = vsel %vm790, nan, %v800
    %v802 = vand.u32 2147483647, %v667
    %vm803 = vcmp.le.f32.partialorder %v802, 0.7853982
    %vm804 = vcmp.lt.s32.totalorder %v667, 0
    %v805 = vand.u32 %v667, 2139095040
    %v806 = vshrl.u32 %v805, 23
    %v807 = vsub.s32 %v806, 127
    %v808 = vand.u32 2147483647, %v667
    %v809 = vand.u32 %v808, 8388607
    %v810 = vor.u32 %v809, 8388608
    %v811 = vsub.s32 0, %v810
    %v812 = vadd.s32 %v807, 1
    %vm813 = vcmp.gt.s32.totalorder %v812, 0
    %v814 = vsel %vm813, %v812, 0
    %v815 = vshrl.u32 %v814, 5
    %v816 = vand.u32 %v814, 31
    %v817 = vsub.s32 32, %v816
    %v818 = vshrl.u32 683565275, %v817
    %v819 = vshll.u32 683565275, %v816
    %v820 = vshrl.u32 2475754826, %v817
    %v821 = vor.u32 %v819, %v820
    %v822 = vshll.u32 2475754826, %v816
    %v823 = vshrl.u32 2131351028, %v817
    %v824 = vor.u32 %v822, %v823
    %v825 = vshll.u32 2131351028, %v816
    %v826 = vshrl.u32 2102212464, %v817
    %v827 = vor.u32 %v825, %v826
    %v828 = vshll.u32 2102212464, %v816
    %v829 = vshrl.u32 920167782, %v817
    %v830 = vor.u32 %v828, %v829
    %v831 = vshll.u32 920167782, %v816
    %v832 = vshrl.u32 1326507024, %v817
    %v833 = vor.u32 %v831, %v832
    %vm834 = vcmp.lt.s32.totalorder %v815, 1
    %vm835 = vcmp.lt.s32.totalorder %v815, 2
    %vm836 = vcmp.lt.s32.totalorder %v815, 3
    %vm837 = vcmp.lt.s32.totalorder %v815, 4
    %v838 = vsel %vm834, %v818, %v821
    %v839 = vsel %vm837, %v827, 2102212464
    %v840 = vsel %vm836, %v824, %v839
    %v841 = vsel %vm835, %v838, %v840
    %v842 = vsel %vm834, %v821, %v824
    %v843 = vsel %vm837, %v830, 920167782
    %v844 = vsel %vm836, %v827, %v843
    %v845 = vsel %vm835, %v842, %v844
    %v846 = vsel %vm834, %v824, %v827
    %v847 = vsel %vm837, %v833, 1326507024
    %v848 = vsel %vm836, %v830, %v847
    %v849 = vsel %vm835, %v846, %v848
    %v850 = vshll.u32 %v810, 8
    %v851 = vmul.u32.u64.compose %v850, %v849
    %v852 = vextract.low.u32 %v851
    %v853 = vextract.high.u32 %v851
    %v854 = vmul.u32.u64.compose %v850, %v845
    %v855 = vextract.low.u32 %v854
    %v856 = vextract.high.u32 %v854
    %v857 = vmul.u32 %v850, %v841
    %v858 = vadd.s32 %v853, %v855
    %vm859 = vc.u32 %v853, %v855
    %v860 = vadd.s32 %v856, 1
    %v861 = vsel %vm859, %v860, %v856
    %v862 = vadd.s32 %v857, %v861
    %v863 = vadd.s32 %v862, 536870912
    %v864 = vshrl.u32 %v863, 30
    %v865 = vshll.u32 %v864, 30
    %v866 = vsub.s32 %v862, %v865
    %vm867 = vcmp.lt.s32.totalorder %v866, 0
    %v868 = vsub.s32 0, %v866
    %v869 = vsel %vm867, %v868, %v866
    %v870 = vclz %v869
    %v871 = vsub.s32 %v870, 2
    %vm872 = vcmp.gt.s32.totalorder 0, %v871
    %v873 = vsel %vm872, 0, %v871
    %v874 = vsub.s32 32, %v873
    %v875 = vshll.u32 %v866, %v873
    %v876 = vshrl.u32 %v858, %v874
    %v877 = vor.u32 %v875, %v876
    %v878 = vsub.s32 4294967266, %v873
    %v879 = vadd.s32 %v878, 127
    %v880 = vshll.u32 %v879, 23
    %v881 = vor.u32 4788187, %v880
    %v882 = vand.u32 2147483647, %v881
    %v884 = vcvt.s32.f32 %v877
    %v885 = vmul.f32 %v884, %v882
    %v886 = vxor.u32 %v885, 2147483648
    %v887 = vsel %vm804, %v886, %v885
    %v888 = vsub.s32 4, %v864
    %v889 = vsel %vm804, %v888, %v864
    %v890 = vsel %vm803, %v667, %v887
    %v891 = vsel %vm803, 0, %v889
    %v892 = vcosq.f32.pop %v890
    %v893 = vsinq.f32.pop %v890
    %vm894 = vweird.f32 %v667
    %v895 = vadd.s32 %v891, 3
    %v896 = vand.u32 %v895, 3
    %vm897 = vcmp.lt.s32.totalorder %v896, 2
    %vm898 = vcmp.eq.s32.totalorder %v896, 0
    %v899 = vxor.u32 %v893, 2147483648
    %v900 = vsel %vm898, %v892, %v899
    %vm901 = vcmp.eq.s32.totalorder %v896, 2
    %v902 = vxor.u32 %v892, 2147483648
    %v903 = vsel %vm901, %v902, %v893
    %v904 = vsel %vm897, %v900, %v903
    %v905 = vsel %vm894, nan, %v904
    %v906 = vand.u32 2147483647, %v668
    %vm907 = vcmp.le.f32.partialorder %v906, 0.7853982
    %vm908 = vcmp.lt.s32.totalorder %v668, 0
    %v909 = vand.u32 %v668, 2139095040
    %v910 = vshrl.u32 %v909, 23
    %v911 = vsub.s32 %v910, 127
    %v912 = vand.u32 2147483647, %v668
    %v913 = vand.u32 %v912, 8388607
    %v914 = vor.u32 %v913, 8388608
    %v915 = vsub.s32 0, %v914
    %v916 = vadd.s32 %v911, 1
    %vm917 = vcmp.gt.s32.totalorder %v916, 0
    %v918 = vsel %vm917, %v916, 0
    %v919 = vshrl.u32 %v918, 5
    %v920 = vand.u32 %v918, 31
    %v921 = vsub.s32 32, %v920
    %v922 = vshrl.u32 683565275, %v921
    %v923 = vshll.u32 683565275, %v920
    %v924 = vshrl.u32 2475754826, %v921
    %v925 = vor.u32 %v923, %v924
    %v926 = vshll.u32 2475754826, %v920
    %v927 = vshrl.u32 2131351028, %v921
    %v928 = vor.u32 %v926, %v927
    %v929 = vshll.u32 2131351028, %v920
    %v930 = vshrl.u32 2102212464, %v921
    %v931 = vor.u32 %v929, %v930
    %v932 = vshll.u32 2102212464, %v920
    %v933 = vshrl.u32 920167782, %v921
    %v934 = vor.u32 %v932, %v933
    %v935 = vshll.u32 920167782, %v920
    %v936 = vshrl.u32 1326507024, %v921
    %v937 = vor.u32 %v935, %v936
    %vm938 = vcmp.lt.s32.totalorder %v919, 1
    %vm939 = vcmp.lt.s32.totalorder %v919, 2
    %vm940 = vcmp.lt.s32.totalorder %v919, 3
    %vm941 = vcmp.lt.s32.totalorder %v919, 4
    %v942 = vsel %vm938, %v922, %v925
    %v943 = vsel %vm941, %v931, 2102212464
    %v944 = vsel %vm940, %v928, %v943
    %v945 = vsel %vm939, %v942, %v944
    %v946 = vsel %vm938, %v925, %v928
    %v947 = vsel %vm941, %v934, 920167782
    %v948 = vsel %vm940, %v931, %v947
    %v949 = vsel %vm939, %v946, %v948
    %v950 = vsel %vm938, %v928, %v931
    %v951 = vsel %vm941, %v937, 1326507024
    %v952 = vsel %vm940, %v934, %v951
    %v953 = vsel %vm939, %v950, %v952
    %v954 = vshll.u32 %v914, 8
    %v955 = vmul.u32.u64.compose %v954, %v953
    %v956 = vextract.low.u32 %v955
    %v957 = vextract.high.u32 %v955
    %v958 = vmul.u32.u64.compose %v954, %v949
    %v959 = vextract.low.u32 %v958
    %v960 = vextract.high.u32 %v958
    %v961 = vmul.u32 %v954, %v945
    %v962 = vadd.s32 %v957, %v959
    %vm963 = vc.u32 %v957, %v959
    %v964 = vadd.s32 %v960, 1
    %v965 = vsel %vm963, %v964, %v960
    %v966 = vadd.s32 %v961, %v965
    %v967 = vadd.s32 %v966, 536870912
    %v968 = vshrl.u32 %v967, 30
    %v969 = vshll.u32 %v968, 30
    %v970 = vsub.s32 %v966, %v969
    %vm971 = vcmp.lt.s32.totalorder %v970, 0
    %v972 = vsub.s32 0, %v970
    %v973 = vsel %vm971, %v972, %v970
    %v974 = vclz %v973
    %v975 = vsub.s32 %v974, 2
    %vm976 = vcmp.gt.s32.totalorder 0, %v975
    %v977 = vsel %vm976, 0, %v975
    %v978 = vsub.s32 32, %v977
    %v979 = vshll.u32 %v970, %v977
    %v980 = vshrl.u32 %v962, %v978
    %v981 = vor.u32 %v979, %v980
    %v982 = vsub.s32 4294967266, %v977
    %v983 = vadd.s32 %v982, 127
    %v984 = vshll.u32 %v983, 23
    %v985 = vor.u32 4788187, %v984
    %v986 = vand.u32 2147483647, %v985
    %v988 = vcvt.s32.f32 %v981
    %v989 = vmul.f32 %v988, %v986
    %v990 = vxor.u32 %v989, 2147483648
    %v991 = vsel %vm908, %v990, %v989
    %v992 = vsub.s32 4, %v968
    %v993 = vsel %vm908, %v992, %v968
    %v994 = vsel %vm907, %v668, %v991
    %v995 = vsel %vm907, 0, %v993
    %v996 = vcosq.f32.pop %v994
    %v997 = vsinq.f32.pop %v994
    %vm998 = vweird.f32 %v668
    %v999 = vadd.s32 %v995, 3
    %v1000 = vand.u32 %v999, 3
    %vm1001 = vcmp.lt.s32.totalorder %v1000, 2
    %vm1002 = vcmp.eq.s32.totalorder %v1000, 0
    %v1003 = vxor.u32 %v997, 2147483648
    %v1004 = vsel %vm1002, %v996, %v1003
    %vm1005 = vcmp.eq.s32.totalorder %v1000, 2
    %v1006 = vxor.u32 %v996, 2147483648
    %v1007 = vsel %vm1005, %v1006, %v997
    %v1008 = vsel %vm1001, %v1004, %v1007
    %v1009 = vsel %vm998, nan, %v1008
    %v1010 = vand.u32 2147483647, %v669
    %vm1011 = vcmp.le.f32.partialorder %v1010, 0.7853982
    %vm1012 = vcmp.lt.s32.totalorder %v669, 0
    %v1013 = vand.u32 %v669, 2139095040
    %v1014 = vshrl.u32 %v1013, 23
    %v1015 = vsub.s32 %v1014, 127
    %v1016 = vand.u32 2147483647, %v669
    %v1017 = vand.u32 %v1016, 8388607
    %v1018 = vor.u32 %v1017, 8388608
    %v1019 = vsub.s32 0, %v1018
    %v1020 = vadd.s32 %v1015, 1
    %vm1021 = vcmp.gt.s32.totalorder %v1020, 0
    %v1022 = vsel %vm1021, %v1020, 0
    %v1023 = vshrl.u32 %v1022, 5
    %v1024 = vand.u32 %v1022, 31
    %v1025 = vsub.s32 32, %v1024
    %v1026 = vshrl.u32 683565275, %v1025
    %v1027 = vshll.u32 683565275, %v1024
    %v1028 = vshrl.u32 2475754826, %v1025
    %v1029 = vor.u32 %v1027, %v1028
    %v1030 = vshll.u32 2475754826, %v1024
    %v1031 = vshrl.u32 2131351028, %v1025
    %v1032 = vor.u32 %v1030, %v1031
    %v1033 = vshll.u32 2131351028, %v1024
    %v1034 = vshrl.u32 2102212464, %v1025
    %v1035 = vor.u32 %v1033, %v1034
    %v1036 = vshll.u32 2102212464, %v1024
    %v1037 = vshrl.u32 920167782, %v1025
    %v1038 = vor.u32 %v1036, %v1037
    %v1039 = vshll.u32 920167782, %v1024
    %v1040 = vshrl.u32 1326507024, %v1025
    %v1041 = vor.u32 %v1039, %v1040
    %vm1042 = vcmp.lt.s32.totalorder %v1023, 1
    %vm1043 = vcmp.lt.s32.totalorder %v1023, 2
    %vm1044 = vcmp.lt.s32.totalorder %v1023, 3
    %vm1045 = vcmp.lt.s32.totalorder %v1023, 4
    %v1046 = vsel %vm1042, %v1026, %v1029
    %v1047 = vsel %vm1045, %v1035, 2102212464
    %v1048 = vsel %vm1044, %v1032, %v1047
    %v1049 = vsel %vm1043, %v1046, %v1048
    %v1050 = vsel %vm1042, %v1029, %v1032
    %v1051 = vsel %vm1045, %v1038, 920167782
    %v1052 = vsel %vm1044, %v1035, %v1051
    %v1053 = vsel %vm1043, %v1050, %v1052
    %v1054 = vsel %vm1042, %v1032, %v1035
    %v1055 = vsel %vm1045, %v1041, 1326507024
    %v1056 = vsel %vm1044, %v1038, %v1055
    %v1057 = vsel %vm1043, %v1054, %v1056
    %v1058 = vshll.u32 %v1018, 8
    %v1059 = vmul.u32.u64.compose %v1058, %v1057
    %v1060 = vextract.low.u32 %v1059
    %v1061 = vextract.high.u32 %v1059
    %v1062 = vmul.u32.u64.compose %v1058, %v1053
    %v1063 = vextract.low.u32 %v1062
    %v1064 = vextract.high.u32 %v1062
    %v1065 = vmul.u32 %v1058, %v1049
    %v1066 = vadd.s32 %v1061, %v1063
    %vm1067 = vc.u32 %v1061, %v1063
    %v1068 = vadd.s32 %v1064, 1
    %v1069 = vsel %vm1067, %v1068, %v1064
    %v1070 = vadd.s32 %v1065, %v1069
    %v1071 = vadd.s32 %v1070, 536870912
    %v1072 = vshrl.u32 %v1071, 30
    %v1073 = vshll.u32 %v1072, 30
    %v1074 = vsub.s32 %v1070, %v1073
    %vm1075 = vcmp.lt.s32.totalorder %v1074, 0
    %v1076 = vsub.s32 0, %v1074
    %v1077 = vsel %vm1075, %v1076, %v1074
    %v1078 = vclz %v1077
    %v1079 = vsub.s32 %v1078, 2
    %vm1080 = vcmp.gt.s32.totalorder 0, %v1079
    %v1081 = vsel %vm1080, 0, %v1079
    %v1082 = vsub.s32 32, %v1081
    %v1083 = vshll.u32 %v1074, %v1081
    %v1084 = vshrl.u32 %v1066, %v1082
    %v1085 = vor.u32 %v1083, %v1084
    %v1086 = vsub.s32 4294967266, %v1081
    %v1087 = vadd.s32 %v1086, 127
    %v1088 = vshll.u32 %v1087, 23
    %v1089 = vor.u32 4788187, %v1088
    %v1090 = vand.u32 2147483647, %v1089
    %v1092 = vcvt.s32.f32 %v1085
    %v1093 = vmul.f32 %v1092, %v1090
    %v1094 = vxor.u32 %v1093, 2147483648
    %v1095 = vsel %vm1012, %v1094, %v1093
    %v1096 = vsub.s32 4, %v1072
    %v1097 = vsel %vm1012, %v1096, %v1072
    %v1098 = vsel %vm1011, %v669, %v1095
    %v1099 = vsel %vm1011, 0, %v1097
    %v1100 = vcosq.f32.pop %v1098
    %v1101 = vsinq.f32.pop %v1098
    %vm1102 = vweird.f32 %v669
    %v1103 = vadd.s32 %v1099, 3
    %v1104 = vand.u32 %v1103, 3
    %vm1105 = vcmp.lt.s32.totalorder %v1104, 2
    %vm1106 = vcmp.eq.s32.totalorder %v1104, 0
    %v1107 = vxor.u32 %v1101, 2147483648
    %v1108 = vsel %vm1106, %v1100, %v1107
    %vm1109 = vcmp.eq.s32.totalorder %v1104, 2
    %v1110 = vxor.u32 %v1100, 2147483648
    %v1111 = vsel %vm1109, %v1110, %v1101
    %v1112 = vsel %vm1105, %v1108, %v1111
    %v1113 = vsel %vm1102, nan, %v1112
    %v1114 = vand.u32 2147483647, %v670
    %vm1115 = vcmp.le.f32.partialorder %v1114, 0.7853982
    %vm1116 = vcmp.lt.s32.totalorder %v670, 0
    %v1117 = vand.u32 %v670, 2139095040
    %v1118 = vshrl.u32 %v1117, 23
    %v1119 = vsub.s32 %v1118, 127
    %v1120 = vand.u32 2147483647, %v670
    %v1121 = vand.u32 %v1120, 8388607
    %v1122 = vor.u32 %v1121, 8388608
    %v1123 = vsub.s32 0, %v1122
    %v1124 = vadd.s32 %v1119, 1
    %vm1125 = vcmp.gt.s32.totalorder %v1124, 0
    %v1126 = vsel %vm1125, %v1124, 0
    %v1127 = vshrl.u32 %v1126, 5
    %v1128 = vand.u32 %v1126, 31
    %v1129 = vsub.s32 32, %v1128
    %v1130 = vshrl.u32 683565275, %v1129
    %v1131 = vshll.u32 683565275, %v1128
    %v1132 = vshrl.u32 2475754826, %v1129
    %v1133 = vor.u32 %v1131, %v1132
    %v1134 = vshll.u32 2475754826, %v1128
    %v1135 = vshrl.u32 2131351028, %v1129
    %v1136 = vor.u32 %v1134, %v1135
    %v1137 = vshll.u32 2131351028, %v1128
    %v1138 = vshrl.u32 2102212464, %v1129
    %v1139 = vor.u32 %v1137, %v1138
    %v1140 = vshll.u32 2102212464, %v1128
    %v1141 = vshrl.u32 920167782, %v1129
    %v1142 = vor.u32 %v1140, %v1141
    %v1143 = vshll.u32 920167782, %v1128
    %v1144 = vshrl.u32 1326507024, %v1129
    %v1145 = vor.u32 %v1143, %v1144
    %vm1146 = vcmp.lt.s32.totalorder %v1127, 1
    %vm1147 = vcmp.lt.s32.totalorder %v1127, 2
    %vm1148 = vcmp.lt.s32.totalorder %v1127, 3
    %vm1149 = vcmp.lt.s32.totalorder %v1127, 4
    %v1150 = vsel %vm1146, %v1130, %v1133
    %v1151 = vsel %vm1149, %v1139, 2102212464
    %v1152 = vsel %vm1148, %v1136, %v1151
    %v1153 = vsel %vm1147, %v1150, %v1152
    %v1154 = vsel %vm1146, %v1133, %v1136
    %v1155 = vsel %vm1149, %v1142, 920167782
    %v1156 = vsel %vm1148, %v1139, %v1155
    %v1157 = vsel %vm1147, %v1154, %v1156
    %v1158 = vsel %vm1146, %v1136, %v1139
    %v1159 = vsel %vm1149, %v1145, 1326507024
    %v1160 = vsel %vm1148, %v1142, %v1159
    %v1161 = vsel %vm1147, %v1158, %v1160
    %v1162 = vshll.u32 %v1122, 8
    %v1163 = vmul.u32.u64.compose %v1162, %v1161
    %v1164 = vextract.low.u32 %v1163
    %v1165 = vextract.high.u32 %v1163
    %v1166 = vmul.u32.u64.compose %v1162, %v1157
    %v1167 = vextract.low.u32 %v1166
    %v1168 = vextract.high.u32 %v1166
    %v1169 = vmul.u32 %v1162, %v1153
    %v1170 = vadd.s32 %v1165, %v1167
    %vm1171 = vc.u32 %v1165, %v1167
    %v1172 = vadd.s32 %v1168, 1
    %v1173 = vsel %vm1171, %v1172, %v1168
    %v1174 = vadd.s32 %v1169, %v1173
    %v1175 = vadd.s32 %v1174, 536870912
    %v1176 = vshrl.u32 %v1175, 30
    %v1177 = vshll.u32 %v1176, 30
    %v1178 = vsub.s32 %v1174, %v1177
    %vm1179 = vcmp.lt.s32.totalorder %v1178, 0
    %v1180 = vsub.s32 0, %v1178
    %v1181 = vsel %vm1179, %v1180, %v1178
    %v1182 = vclz %v1181
    %v1183 = vsub.s32 %v1182, 2
    %vm1184 = vcmp.gt.s32.totalorder 0, %v1183
    %v1185 = vsel %vm1184, 0, %v1183
    %v1186 = vsub.s32 32, %v1185
    %v1187 = vshll.u32 %v1178, %v1185
    %v1188 = vshrl.u32 %v1170, %v1186
    %v1189 = vor.u32 %v1187, %v1188
    %v1190 = vsub.s32 4294967266, %v1185
    %v1191 = vadd.s32 %v1190, 127
    %v1192 = vshll.u32 %v1191, 23
    %v1193 = vor.u32 4788187, %v1192
    %v1194 = vand.u32 2147483647, %v1193
    %v1196 = vcvt.s32.f32 %v1189
    %v1197 = vmul.f32 %v1196, %v1194
    %v1198 = vxor.u32 %v1197, 2147483648
    %v1199 = vsel %vm1116, %v1198, %v1197
    %v1200 = vsub.s32 4, %v1176
    %v1201 = vsel %vm1116, %v1200, %v1176
    %v1202 = vsel %vm1115, %v670, %v1199
    %v1203 = vsel %vm1115, 0, %v1201
    %v1204 = vcosq.f32.pop %v1202
    %v1205 = vsinq.f32.pop %v1202
    %vm1206 = vweird.f32 %v670
    %v1207 = vadd.s32 %v1203, 3
    %v1208 = vand.u32 %v1207, 3
    %vm1209 = vcmp.lt.s32.totalorder %v1208, 2
    %vm1210 = vcmp.eq.s32.totalorder %v1208, 0
    %v1211 = vxor.u32 %v1205, 2147483648
    %v1212 = vsel %vm1210, %v1204, %v1211
    %vm1213 = vcmp.eq.s32.totalorder %v1208, 2
    %v1214 = vxor.u32 %v1204, 2147483648
    %v1215 = vsel %vm1213, %v1214, %v1205
    %v1216 = vsel %vm1209, %v1212, %v1215
    %v1217 = vsel %vm1206, nan, %v1216
    %v1218 = vand.u32 2147483647, %v671
    %vm1219 = vcmp.le.f32.partialorder %v1218, 0.7853982
    %vm1220 = vcmp.lt.s32.totalorder %v671, 0
    %v1221 = vand.u32 %v671, 2139095040
    %v1222 = vshrl.u32 %v1221, 23
    %v1223 = vsub.s32 %v1222, 127
    %v1224 = vand.u32 2147483647, %v671
    %v1225 = vand.u32 %v1224, 8388607
    %v1226 = vor.u32 %v1225, 8388608
    %v1227 = vsub.s32 0, %v1226
    %v1228 = vadd.s32 %v1223, 1
    %vm1229 = vcmp.gt.s32.totalorder %v1228, 0
    %v1230 = vsel %vm1229, %v1228, 0
    %v1231 = vshrl.u32 %v1230, 5
    %v1232 = vand.u32 %v1230, 31
    %v1233 = vsub.s32 32, %v1232
    %v1234 = vshrl.u32 683565275, %v1233
    %v1235 = vshll.u32 683565275, %v1232
    %v1236 = vshrl.u32 2475754826, %v1233
    %v1237 = vor.u32 %v1235, %v1236
    %v1238 = vshll.u32 2475754826, %v1232
    %v1239 = vshrl.u32 2131351028, %v1233
    %v1240 = vor.u32 %v1238, %v1239
    %v1241 = vshll.u32 2131351028, %v1232
    %v1242 = vshrl.u32 2102212464, %v1233
    %v1243 = vor.u32 %v1241, %v1242
    %v1244 = vshll.u32 2102212464, %v1232
    %v1245 = vshrl.u32 920167782, %v1233
    %v1246 = vor.u32 %v1244, %v1245
    %v1247 = vshll.u32 920167782, %v1232
    %v1248 = vshrl.u32 1326507024, %v1233
    %v1249 = vor.u32 %v1247, %v1248
    %vm1250 = vcmp.lt.s32.totalorder %v1231, 1
    %vm1251 = vcmp.lt.s32.totalorder %v1231, 2
    %vm1252 = vcmp.lt.s32.totalorder %v1231, 3
    %vm1253 = vcmp.lt.s32.totalorder %v1231, 4
    %v1254 = vsel %vm1250, %v1234, %v1237
    %v1255 = vsel %vm1253, %v1243, 2102212464
    %v1256 = vsel %vm1252, %v1240, %v1255
    %v1257 = vsel %vm1251, %v1254, %v1256
    %v1258 = vsel %vm1250, %v1237, %v1240
    %v1259 = vsel %vm1253, %v1246, 920167782
    %v1260 = vsel %vm1252, %v1243, %v1259
    %v1261 = vsel %vm1251, %v1258, %v1260
    %v1262 = vsel %vm1250, %v1240, %v1243
    %v1263 = vsel %vm1253, %v1249, 1326507024
    %v1264 = vsel %vm1252, %v1246, %v1263
    %v1265 = vsel %vm1251, %v1262, %v1264
    %v1266 = vshll.u32 %v1226, 8
    %v1267 = vmul.u32.u64.compose %v1266, %v1265
    %v1268 = vextract.low.u32 %v1267
    %v1269 = vextract.high.u32 %v1267
    %v1270 = vmul.u32.u64.compose %v1266, %v1261
    %v1271 = vextract.low.u32 %v1270
    %v1272 = vextract.high.u32 %v1270
    %v1273 = vmul.u32 %v1266, %v1257
    %v1274 = vadd.s32 %v1269, %v1271
    %vm1275 = vc.u32 %v1269, %v1271
    %v1276 = vadd.s32 %v1272, 1
    %v1277 = vsel %vm1275, %v1276, %v1272
    %v1278 = vadd.s32 %v1273, %v1277
    %v1279 = vadd.s32 %v1278, 536870912
    %v1280 = vshrl.u32 %v1279, 30
    %v1281 = vshll.u32 %v1280, 30
    %v1282 = vsub.s32 %v1278, %v1281
    %vm1283 = vcmp.lt.s32.totalorder %v1282, 0
    %v1284 = vsub.s32 0, %v1282
    %v1285 = vsel %vm1283, %v1284, %v1282
    %v1286 = vclz %v1285
    %v1287 = vsub.s32 %v1286, 2
    %vm1288 = vcmp.gt.s32.totalorder 0, %v1287
    %v1289 = vsel %vm1288, 0, %v1287
    %v1290 = vsub.s32 32, %v1289
    %v1291 = vshll.u32 %v1282, %v1289
    %v1292 = vshrl.u32 %v1274, %v1290
    %v1293 = vor.u32 %v1291, %v1292
    %v1294 = vsub.s32 4294967266, %v1289
    %v1295 = vadd.s32 %v1294, 127
    %v1296 = vshll.u32 %v1295, 23
    %v1297 = vor.u32 4788187, %v1296
    %v1298 = vand.u32 2147483647, %v1297
    %v1300 = vcvt.s32.f32 %v1293
    %v1301 = vmul.f32 %v1300, %v1298
    %v1302 = vxor.u32 %v1301, 2147483648
    %v1303 = vsel %vm1220, %v1302, %v1301
    %v1304 = vsub.s32 4, %v1280
    %v1305 = vsel %vm1220, %v1304, %v1280
    %v1306 = vsel %vm1219, %v671, %v1303
    %v1307 = vsel %vm1219, 0, %v1305
    %v1308 = vcosq.f32.pop %v1306
    %v1309 = vsinq.f32.pop %v1306
    %vm1310 = vweird.f32 %v671
    %v1311 = vadd.s32 %v1307, 3
    %v1312 = vand.u32 %v1311, 3
    %vm1313 = vcmp.lt.s32.totalorder %v1312, 2
    %vm1314 = vcmp.eq.s32.totalorder %v1312, 0
    %v1315 = vxor.u32 %v1309, 2147483648
    %v1316 = vsel %vm1314, %v1308, %v1315
    %vm1317 = vcmp.eq.s32.totalorder %v1312, 2
    %v1318 = vxor.u32 %v1308, 2147483648
    %v1319 = vsel %vm1317, %v1318, %v1309
    %v1320 = vsel %vm1313, %v1316, %v1319
    %v1321 = vsel %vm1310, nan, %v1320
    %v1322 = vand.u32 2147483647, %v672
    %vm1323 = vcmp.le.f32.partialorder %v1322, 0.7853982
    %vm1324 = vcmp.lt.s32.totalorder %v672, 0
    %v1325 = vand.u32 %v672, 2139095040
    %v1326 = vshrl.u32 %v1325, 23
    %v1327 = vsub.s32 %v1326, 127
    %v1328 = vand.u32 2147483647, %v672
    %v1329 = vand.u32 %v1328, 8388607
    %v1330 = vor.u32 %v1329, 8388608
    %v1331 = vsub.s32 0, %v1330
    %v1332 = vadd.s32 %v1327, 1
    %vm1333 = vcmp.gt.s32.totalorder %v1332, 0
    %v1334 = vsel %vm1333, %v1332, 0
    %v1335 = vshrl.u32 %v1334, 5
    %v1336 = vand.u32 %v1334, 31
    %v1337 = vsub.s32 32, %v1336
    %v1338 = vshrl.u32 683565275, %v1337
    %v1339 = vshll.u32 683565275, %v1336
    %v1340 = vshrl.u32 2475754826, %v1337
    %v1341 = vor.u32 %v1339, %v1340
    %v1342 = vshll.u32 2475754826, %v1336
    %v1343 = vshrl.u32 2131351028, %v1337
    %v1344 = vor.u32 %v1342, %v1343
    %v1345 = vshll.u32 2131351028, %v1336
    %v1346 = vshrl.u32 2102212464, %v1337
    %v1347 = vor.u32 %v1345, %v1346
    %v1348 = vshll.u32 2102212464, %v1336
    %v1349 = vshrl.u32 920167782, %v1337
    %v1350 = vor.u32 %v1348, %v1349
    %v1351 = vshll.u32 920167782, %v1336
    %v1352 = vshrl.u32 1326507024, %v1337
    %v1353 = vor.u32 %v1351, %v1352
    %vm1354 = vcmp.lt.s32.totalorder %v1335, 1
    %vm1355 = vcmp.lt.s32.totalorder %v1335, 2
    %vm1356 = vcmp.lt.s32.totalorder %v1335, 3
    %vm1357 = vcmp.lt.s32.totalorder %v1335, 4
    %v1358 = vsel %vm1354, %v1338, %v1341
    %v1359 = vsel %vm1357, %v1347, 2102212464
    %v1360 = vsel %vm1356, %v1344, %v1359
    %v1361 = vsel %vm1355, %v1358, %v1360
    %v1362 = vsel %vm1354, %v1341, %v1344
    %v1363 = vsel %vm1357, %v1350, 920167782
    %v1364 = vsel %vm1356, %v1347, %v1363
    %v1365 = vsel %vm1355, %v1362, %v1364
    %v1366 = vsel %vm1354, %v1344, %v1347
    %v1367 = vsel %vm1357, %v1353, 1326507024
    %v1368 = vsel %vm1356, %v1350, %v1367
    %v1369 = vsel %vm1355, %v1366, %v1368
    %v1370 = vshll.u32 %v1330, 8
    %v1371 = vmul.u32.u64.compose %v1370, %v1369
    %v1372 = vextract.low.u32 %v1371
    %v1373 = vextract.high.u32 %v1371
    %v1374 = vmul.u32.u64.compose %v1370, %v1365
    %v1375 = vextract.low.u32 %v1374
    %v1376 = vextract.high.u32 %v1374
    %v1377 = vmul.u32 %v1370, %v1361
    %v1378 = vadd.s32 %v1373, %v1375
    %vm1379 = vc.u32 %v1373, %v1375
    %v1380 = vadd.s32 %v1376, 1
    %v1381 = vsel %vm1379, %v1380, %v1376
    %v1382 = vadd.s32 %v1377, %v1381
    %v1383 = vadd.s32 %v1382, 536870912
    %v1384 = vshrl.u32 %v1383, 30
    %v1385 = vshll.u32 %v1384, 30
    %v1386 = vsub.s32 %v1382, %v1385
    %vm1387 = vcmp.lt.s32.totalorder %v1386, 0
    %v1388 = vsub.s32 0, %v1386
    %v1389 = vsel %vm1387, %v1388, %v1386
    %v1390 = vclz %v1389
    %v1391 = vsub.s32 %v1390, 2
    %vm1392 = vcmp.gt.s32.totalorder 0, %v1391
    %v1393 = vsel %vm1392, 0, %v1391
    %v1394 = vsub.s32 32, %v1393
    %v1395 = vshll.u32 %v1386, %v1393
    %v1396 = vshrl.u32 %v1378, %v1394
    %v1397 = vor.u32 %v1395, %v1396
    %v1398 = vsub.s32 4294967266, %v1393
    %v1399 = vadd.s32 %v1398, 127
    %v1400 = vshll.u32 %v1399, 23
    %v1401 = vor.u32 4788187, %v1400
    %v1402 = vand.u32 2147483647, %v1401
    %v1404 = vcvt.s32.f32 %v1397
    %v1405 = vmul.f32 %v1404, %v1402
    %v1406 = vxor.u32 %v1405, 2147483648
    %v1407 = vsel %vm1324, %v1406, %v1405
    %v1408 = vsub.s32 4, %v1384
    %v1409 = vsel %vm1324, %v1408, %v1384
    %v1410 = vsel %vm1323, %v672, %v1407
    %v1411 = vsel %vm1323, 0, %v1409
    %v1412 = vcosq.f32.pop %v1410
    %v1413 = vsinq.f32.pop %v1410
    %vm1414 = vweird.f32 %v672
    %v1415 = vadd.s32 %v1411, 3
    %v1416 = vand.u32 %v1415, 3
    %vm1417 = vcmp.lt.s32.totalorder %v1416, 2
    %vm1418 = vcmp.eq.s32.totalorder %v1416, 0
    %v1419 = vxor.u32 %v1413, 2147483648
    %v1420 = vsel %vm1418, %v1412, %v1419
    %vm1421 = vcmp.eq.s32.totalorder %v1416, 2
    %v1422 = vxor.u32 %v1412, 2147483648
    %v1423 = vsel %vm1421, %v1422, %v1413
    %v1424 = vsel %vm1417, %v1420, %v1423
    %v1425 = vsel %vm1414, nan, %v1424
    %v1426 = vand.u32 2147483647, %v673
    %vm1427 = vcmp.le.f32.partialorder %v1426, 0.7853982
    %vm1428 = vcmp.lt.s32.totalorder %v673, 0
    %v1429 = vand.u32 %v673, 2139095040
    %v1430 = vshrl.u32 %v1429, 23
    %v1431 = vsub.s32 %v1430, 127
    %v1432 = vand.u32 2147483647, %v673
    %v1433 = vand.u32 %v1432, 8388607
    %v1434 = vor.u32 %v1433, 8388608
    %v1435 = vsub.s32 0, %v1434
    %v1436 = vadd.s32 %v1431, 1
    %vm1437 = vcmp.gt.s32.totalorder %v1436, 0
    %v1438 = vsel %vm1437, %v1436, 0
    %v1439 = vshrl.u32 %v1438, 5
    %v1440 = vand.u32 %v1438, 31
    %v1441 = vsub.s32 32, %v1440
    %v1442 = vshrl.u32 683565275, %v1441
    %v1443 = vshll.u32 683565275, %v1440
    %v1444 = vshrl.u32 2475754826, %v1441
    %v1445 = vor.u32 %v1443, %v1444
    %v1446 = vshll.u32 2475754826, %v1440
    %v1447 = vshrl.u32 2131351028, %v1441
    %v1448 = vor.u32 %v1446, %v1447
    %v1449 = vshll.u32 2131351028, %v1440
    %v1450 = vshrl.u32 2102212464, %v1441
    %v1451 = vor.u32 %v1449, %v1450
    %v1452 = vshll.u32 2102212464, %v1440
    %v1453 = vshrl.u32 920167782, %v1441
    %v1454 = vor.u32 %v1452, %v1453
    %v1455 = vshll.u32 920167782, %v1440
    %v1456 = vshrl.u32 1326507024, %v1441
    %v1457 = vor.u32 %v1455, %v1456
    %vm1458 = vcmp.lt.s32.totalorder %v1439, 1
    %vm1459 = vcmp.lt.s32.totalorder %v1439, 2
    %vm1460 = vcmp.lt.s32.totalorder %v1439, 3
    %vm1461 = vcmp.lt.s32.totalorder %v1439, 4
    %v1462 = vsel %vm1458, %v1442, %v1445
    %v1463 = vsel %vm1461, %v1451, 2102212464
    %v1464 = vsel %vm1460, %v1448, %v1463
    %v1465 = vsel %vm1459, %v1462, %v1464
    %v1466 = vsel %vm1458, %v1445, %v1448
    %v1467 = vsel %vm1461, %v1454, 920167782
    %v1468 = vsel %vm1460, %v1451, %v1467
    %v1469 = vsel %vm1459, %v1466, %v1468
    %v1470 = vsel %vm1458, %v1448, %v1451
    %v1471 = vsel %vm1461, %v1457, 1326507024
    %v1472 = vsel %vm1460, %v1454, %v1471
    %v1473 = vsel %vm1459, %v1470, %v1472
    %v1474 = vshll.u32 %v1434, 8
    %v1475 = vmul.u32.u64.compose %v1474, %v1473
    %v1476 = vextract.low.u32 %v1475
    %v1477 = vextract.high.u32 %v1475
    %v1478 = vmul.u32.u64.compose %v1474, %v1469
    %v1479 = vextract.low.u32 %v1478
    %v1480 = vextract.high.u32 %v1478
    %v1481 = vmul.u32 %v1474, %v1465
    %v1482 = vadd.s32 %v1477, %v1479
    %vm1483 = vc.u32 %v1477, %v1479
    %v1484 = vadd.s32 %v1480, 1
    %v1485 = vsel %vm1483, %v1484, %v1480
    %v1486 = vadd.s32 %v1481, %v1485
    %v1487 = vadd.s32 %v1486, 536870912
    %v1488 = vshrl.u32 %v1487, 30
    %v1489 = vshll.u32 %v1488, 30
    %v1490 = vsub.s32 %v1486, %v1489
    %vm1491 = vcmp.lt.s32.totalorder %v1490, 0
    %v1492 = vsub.s32 0, %v1490
    %v1493 = vsel %vm1491, %v1492, %v1490
    %v1494 = vclz %v1493
    %v1495 = vsub.s32 %v1494, 2
    %vm1496 = vcmp.gt.s32.totalorder 0, %v1495
    %v1497 = vsel %vm1496, 0, %v1495
    %v1498 = vsub.s32 32, %v1497
    %v1499 = vshll.u32 %v1490, %v1497
    %v1500 = vshrl.u32 %v1482, %v1498
    %v1501 = vor.u32 %v1499, %v1500
    %v1502 = vsub.s32 4294967266, %v1497
    %v1503 = vadd.s32 %v1502, 127
    %v1504 = vshll.u32 %v1503, 23
    %v1505 = vor.u32 4788187, %v1504
    %v1506 = vand.u32 2147483647, %v1505
    %v1508 = vcvt.s32.f32 %v1501
    %v1509 = vmul.f32 %v1508, %v1506
    %v1510 = vxor.u32 %v1509, 2147483648
    %v1511 = vsel %vm1428, %v1510, %v1509
    %v1512 = vsub.s32 4, %v1488
    %v1513 = vsel %vm1428, %v1512, %v1488
    %v1514 = vsel %vm1427, %v673, %v1511
    %v1515 = vsel %vm1427, 0, %v1513
    %v1516 = vcosq.f32.pop %v1514
    %v1517 = vsinq.f32.pop %v1514
    %vm1518 = vweird.f32 %v673
    %v1519 = vadd.s32 %v1515, 3
    %v1520 = vand.u32 %v1519, 3
    %vm1521 = vcmp.lt.s32.totalorder %v1520, 2
    %vm1522 = vcmp.eq.s32.totalorder %v1520, 0
    %v1523 = vxor.u32 %v1517, 2147483648
    %v1524 = vsel %vm1522, %v1516, %v1523
    %vm1525 = vcmp.eq.s32.totalorder %v1520, 2
    %v1526 = vxor.u32 %v1516, 2147483648
    %v1527 = vsel %vm1525, %v1526, %v1517
    %v1528 = vsel %vm1521, %v1524, %v1527
    %v1529 = vsel %vm1518, nan, %v1528
    %v1530 = vand.u32 2147483647, %v674
    %vm1531 = vcmp.le.f32.partialorder %v1530, 0.7853982
    %vm1532 = vcmp.lt.s32.totalorder %v674, 0
    %v1533 = vand.u32 %v674, 2139095040
    %v1534 = vshrl.u32 %v1533, 23
    %v1535 = vsub.s32 %v1534, 127
    %v1536 = vand.u32 2147483647, %v674
    %v1537 = vand.u32 %v1536, 8388607
    %v1538 = vor.u32 %v1537, 8388608
    %v1539 = vsub.s32 0, %v1538
    %v1540 = vadd.s32 %v1535, 1
    %vm1541 = vcmp.gt.s32.totalorder %v1540, 0
    %v1542 = vsel %vm1541, %v1540, 0
    %v1543 = vshrl.u32 %v1542, 5
    %v1544 = vand.u32 %v1542, 31
    %v1545 = vsub.s32 32, %v1544
    %v1546 = vshrl.u32 683565275, %v1545
    %v1547 = vshll.u32 683565275, %v1544
    %v1548 = vshrl.u32 2475754826, %v1545
    %v1549 = vor.u32 %v1547, %v1548
    %v1550 = vshll.u32 2475754826, %v1544
    %v1551 = vshrl.u32 2131351028, %v1545
    %v1552 = vor.u32 %v1550, %v1551
    %v1553 = vshll.u32 2131351028, %v1544
    %v1554 = vshrl.u32 2102212464, %v1545
    %v1555 = vor.u32 %v1553, %v1554
    %v1556 = vshll.u32 2102212464, %v1544
    %v1557 = vshrl.u32 920167782, %v1545
    %v1558 = vor.u32 %v1556, %v1557
    %v1559 = vshll.u32 920167782, %v1544
    %v1560 = vshrl.u32 1326507024, %v1545
    %v1561 = vor.u32 %v1559, %v1560
    %vm1562 = vcmp.lt.s32.totalorder %v1543, 1
    %vm1563 = vcmp.lt.s32.totalorder %v1543, 2
    %vm1564 = vcmp.lt.s32.totalorder %v1543, 3
    %vm1565 = vcmp.lt.s32.totalorder %v1543, 4
    %v1566 = vsel %vm1562, %v1546, %v1549
    %v1567 = vsel %vm1565, %v1555, 2102212464
    %v1568 = vsel %vm1564, %v1552, %v1567
    %v1569 = vsel %vm1563, %v1566, %v1568
    %v1570 = vsel %vm1562, %v1549, %v1552
    %v1571 = vsel %vm1565, %v1558, 920167782
    %v1572 = vsel %vm1564, %v1555, %v1571
    %v1573 = vsel %vm1563, %v1570, %v1572
    %v1574 = vsel %vm1562, %v1552, %v1555
    %v1575 = vsel %vm1565, %v1561, 1326507024
    %v1576 = vsel %vm1564, %v1558, %v1575
    %v1577 = vsel %vm1563, %v1574, %v1576
    %v1578 = vshll.u32 %v1538, 8
    %v1579 = vmul.u32.u64.compose %v1578, %v1577
    %v1580 = vextract.low.u32 %v1579
    %v1581 = vextract.high.u32 %v1579
    %v1582 = vmul.u32.u64.compose %v1578, %v1573
    %v1583 = vextract.low.u32 %v1582
    %v1584 = vextract.high.u32 %v1582
    %v1585 = vmul.u32 %v1578, %v1569
    %v1586 = vadd.s32 %v1581, %v1583
    %vm1587 = vc.u32 %v1581, %v1583
    %v1588 = vadd.s32 %v1584, 1
    %v1589 = vsel %vm1587, %v1588, %v1584
    %v1590 = vadd.s32 %v1585, %v1589
    %v1591 = vadd.s32 %v1590, 536870912
    %v1592 = vshrl.u32 %v1591, 30
    %v1593 = vshll.u32 %v1592, 30
    %v1594 = vsub.s32 %v1590, %v1593
    %vm1595 = vcmp.lt.s32.totalorder %v1594, 0
    %v1596 = vsub.s32 0, %v1594
    %v1597 = vsel %vm1595, %v1596, %v1594
    %v1598 = vclz %v1597
    %v1599 = vsub.s32 %v1598, 2
    %vm1600 = vcmp.gt.s32.totalorder 0, %v1599
    %v1601 = vsel %vm1600, 0, %v1599
    %v1602 = vsub.s32 32, %v1601
    %v1603 = vshll.u32 %v1594, %v1601
    %v1604 = vshrl.u32 %v1586, %v1602
    %v1605 = vor.u32 %v1603, %v1604
    %v1606 = vsub.s32 4294967266, %v1601
    %v1607 = vadd.s32 %v1606, 127
    %v1608 = vshll.u32 %v1607, 23
    %v1609 = vor.u32 4788187, %v1608
    %v1610 = vand.u32 2147483647, %v1609
    %v1612 = vcvt.s32.f32 %v1605
    %v1613 = vmul.f32 %v1612, %v1610
    %v1614 = vxor.u32 %v1613, 2147483648
    %v1615 = vsel %vm1532, %v1614, %v1613
    %v1616 = vsub.s32 4, %v1592
    %v1617 = vsel %vm1532, %v1616, %v1592
    %v1618 = vsel %vm1531, %v674, %v1615
    %v1619 = vsel %vm1531, 0, %v1617
    %v1620 = vcosq.f32.pop %v1618
    %v1621 = vsinq.f32.pop %v1618
    %vm1622 = vweird.f32 %v674
    %v1623 = vadd.s32 %v1619, 3
    %v1624 = vand.u32 %v1623, 3
    %vm1625 = vcmp.lt.s32.totalorder %v1624, 2
    %vm1626 = vcmp.eq.s32.totalorder %v1624, 0
    %v1627 = vxor.u32 %v1621, 2147483648
    %v1628 = vsel %vm1626, %v1620, %v1627
    %vm1629 = vcmp.eq.s32.totalorder %v1624, 2
    %v1630 = vxor.u32 %v1620, 2147483648
    %v1631 = vsel %vm1629, %v1630, %v1621
    %v1632 = vsel %vm1625, %v1628, %v1631
    %v1633 = vsel %vm1622, nan, %v1632
    %v1634 = vand.u32 2147483647, %v675
    %vm1635 = vcmp.le.f32.partialorder %v1634, 0.7853982
    %vm1636 = vcmp.lt.s32.totalorder %v675, 0
    %v1637 = vand.u32 %v675, 2139095040
    %v1638 = vshrl.u32 %v1637, 23
    %v1639 = vsub.s32 %v1638, 127
    %v1640 = vand.u32 2147483647, %v675
    %v1641 = vand.u32 %v1640, 8388607
    %v1642 = vor.u32 %v1641, 8388608
    %v1643 = vsub.s32 0, %v1642
    %v1644 = vadd.s32 %v1639, 1
    %vm1645 = vcmp.gt.s32.totalorder %v1644, 0
    %v1646 = vsel %vm1645, %v1644, 0
    %v1647 = vshrl.u32 %v1646, 5
    %v1648 = vand.u32 %v1646, 31
    %v1649 = vsub.s32 32, %v1648
    %v1650 = vshrl.u32 683565275, %v1649
    %v1651 = vshll.u32 683565275, %v1648
    %v1652 = vshrl.u32 2475754826, %v1649
    %v1653 = vor.u32 %v1651, %v1652
    %v1654 = vshll.u32 2475754826, %v1648
    %v1655 = vshrl.u32 2131351028, %v1649
    %v1656 = vor.u32 %v1654, %v1655
    %v1657 = vshll.u32 2131351028, %v1648
    %v1658 = vshrl.u32 2102212464, %v1649
    %v1659 = vor.u32 %v1657, %v1658
    %v1660 = vshll.u32 2102212464, %v1648
    %v1661 = vshrl.u32 920167782, %v1649
    %v1662 = vor.u32 %v1660, %v1661
    %v1663 = vshll.u32 920167782, %v1648
    %v1664 = vshrl.u32 1326507024, %v1649
    %v1665 = vor.u32 %v1663, %v1664
    %vm1666 = vcmp.lt.s32.totalorder %v1647, 1
    %vm1667 = vcmp.lt.s32.totalorder %v1647, 2
    %vm1668 = vcmp.lt.s32.totalorder %v1647, 3
    %vm1669 = vcmp.lt.s32.totalorder %v1647, 4
    %v1670 = vsel %vm1666, %v1650, %v1653
    %v1671 = vsel %vm1669, %v1659, 2102212464
    %v1672 = vsel %vm1668, %v1656, %v1671
    %v1673 = vsel %vm1667, %v1670, %v1672
    %v1674 = vsel %vm1666, %v1653, %v1656
    %v1675 = vsel %vm1669, %v1662, 920167782
    %v1676 = vsel %vm1668, %v1659, %v1675
    %v1677 = vsel %vm1667, %v1674, %v1676
    %v1678 = vsel %vm1666, %v1656, %v1659
    %v1679 = vsel %vm1669, %v1665, 1326507024
    %v1680 = vsel %vm1668, %v1662, %v1679
    %v1681 = vsel %vm1667, %v1678, %v1680
    %v1682 = vshll.u32 %v1642, 8
    %v1683 = vmul.u32.u64.compose %v1682, %v1681
    %v1684 = vextract.low.u32 %v1683
    %v1685 = vextract.high.u32 %v1683
    %v1686 = vmul.u32.u64.compose %v1682, %v1677
    %v1687 = vextract.low.u32 %v1686
    %v1688 = vextract.high.u32 %v1686
    %v1689 = vmul.u32 %v1682, %v1673
    %v1690 = vadd.s32 %v1685, %v1687
    %vm1691 = vc.u32 %v1685, %v1687
    %v1692 = vadd.s32 %v1688, 1
    %v1693 = vsel %vm1691, %v1692, %v1688
    %v1694 = vadd.s32 %v1689, %v1693
    %v1695 = vadd.s32 %v1694, 536870912
    %v1696 = vshrl.u32 %v1695, 30
    %v1697 = vshll.u32 %v1696, 30
    %v1698 = vsub.s32 %v1694, %v1697
    %vm1699 = vcmp.lt.s32.totalorder %v1698, 0
    %v1700 = vsub.s32 0, %v1698
    %v1701 = vsel %vm1699, %v1700, %v1698
    %v1702 = vclz %v1701
    %v1703 = vsub.s32 %v1702, 2
    %vm1704 = vcmp.gt.s32.totalorder 0, %v1703
    %v1705 = vsel %vm1704, 0, %v1703
    %v1706 = vsub.s32 32, %v1705
    %v1707 = vshll.u32 %v1698, %v1705
    %v1708 = vshrl.u32 %v1690, %v1706
    %v1709 = vor.u32 %v1707, %v1708
    %v1710 = vsub.s32 4294967266, %v1705
    %v1711 = vadd.s32 %v1710, 127
    %v1712 = vshll.u32 %v1711, 23
    %v1713 = vor.u32 4788187, %v1712
    %v1714 = vand.u32 2147483647, %v1713
    %v1716 = vcvt.s32.f32 %v1709
    %v1717 = vmul.f32 %v1716, %v1714
    %v1718 = vxor.u32 %v1717, 2147483648
    %v1719 = vsel %vm1636, %v1718, %v1717
    %v1720 = vsub.s32 4, %v1696
    %v1721 = vsel %vm1636, %v1720, %v1696
    %v1722 = vsel %vm1635, %v675, %v1719
    %v1723 = vsel %vm1635, 0, %v1721
    %v1724 = vcosq.f32.pop %v1722
    %v1725 = vsinq.f32.pop %v1722
    %vm1726 = vweird.f32 %v675
    %v1727 = vadd.s32 %v1723, 3
    %v1728 = vand.u32 %v1727, 3
    %vm1729 = vcmp.lt.s32.totalorder %v1728, 2
    %vm1730 = vcmp.eq.s32.totalorder %v1728, 0
    %v1731 = vxor.u32 %v1725, 2147483648
    %v1732 = vsel %vm1730, %v1724, %v1731
    %vm1733 = vcmp.eq.s32.totalorder %v1728, 2
    %v1734 = vxor.u32 %v1724, 2147483648
    %v1735 = vsel %vm1733, %v1734, %v1725
    %v1736 = vsel %vm1729, %v1732, %v1735
    %v1737 = vsel %vm1726, nan, %v1736
    %v1738 = vand.u32 2147483647, %v676
    %vm1739 = vcmp.le.f32.partialorder %v1738, 0.7853982
    %vm1740 = vcmp.lt.s32.totalorder %v676, 0
    %v1741 = vand.u32 %v676, 2139095040
    %v1742 = vshrl.u32 %v1741, 23
    %v1743 = vsub.s32 %v1742, 127
    %v1744 = vand.u32 2147483647, %v676
    %v1745 = vand.u32 %v1744, 8388607
    %v1746 = vor.u32 %v1745, 8388608
    %v1747 = vsub.s32 0, %v1746
    %v1748 = vadd.s32 %v1743, 1
    %vm1749 = vcmp.gt.s32.totalorder %v1748, 0
    %v1750 = vsel %vm1749, %v1748, 0
    %v1751 = vshrl.u32 %v1750, 5
    %v1752 = vand.u32 %v1750, 31
    %v1753 = vsub.s32 32, %v1752
    %v1754 = vshrl.u32 683565275, %v1753
    %v1755 = vshll.u32 683565275, %v1752
    %v1756 = vshrl.u32 2475754826, %v1753
    %v1757 = vor.u32 %v1755, %v1756
    %v1758 = vshll.u32 2475754826, %v1752
    %v1759 = vshrl.u32 2131351028, %v1753
    %v1760 = vor.u32 %v1758, %v1759
    %v1761 = vshll.u32 2131351028, %v1752
    %v1762 = vshrl.u32 2102212464, %v1753
    %v1763 = vor.u32 %v1761, %v1762
    %v1764 = vshll.u32 2102212464, %v1752
    %v1765 = vshrl.u32 920167782, %v1753
    %v1766 = vor.u32 %v1764, %v1765
    %v1767 = vshll.u32 920167782, %v1752
    %v1768 = vshrl.u32 1326507024, %v1753
    %v1769 = vor.u32 %v1767, %v1768
    %vm1770 = vcmp.lt.s32.totalorder %v1751, 1
    %vm1771 = vcmp.lt.s32.totalorder %v1751, 2
    %vm1772 = vcmp.lt.s32.totalorder %v1751, 3
    %vm1773 = vcmp.lt.s32.totalorder %v1751, 4
    %v1774 = vsel %vm1770, %v1754, %v1757
    %v1775 = vsel %vm1773, %v1763, 2102212464
    %v1776 = vsel %vm1772, %v1760, %v1775
    %v1777 = vsel %vm1771, %v1774, %v1776
    %v1778 = vsel %vm1770, %v1757, %v1760
    %v1779 = vsel %vm1773, %v1766, 920167782
    %v1780 = vsel %vm1772, %v1763, %v1779
    %v1781 = vsel %vm1771, %v1778, %v1780
    %v1782 = vsel %vm1770, %v1760, %v1763
    %v1783 = vsel %vm1773, %v1769, 1326507024
    %v1784 = vsel %vm1772, %v1766, %v1783
    %v1785 = vsel %vm1771, %v1782, %v1784
    %v1786 = vshll.u32 %v1746, 8
    %v1787 = vmul.u32.u64.compose %v1786, %v1785
    %v1788 = vextract.low.u32 %v1787
    %v1789 = vextract.high.u32 %v1787
    %v1790 = vmul.u32.u64.compose %v1786, %v1781
    %v1791 = vextract.low.u32 %v1790
    %v1792 = vextract.high.u32 %v1790
    %v1793 = vmul.u32 %v1786, %v1777
    %v1794 = vadd.s32 %v1789, %v1791
    %vm1795 = vc.u32 %v1789, %v1791
    %v1796 = vadd.s32 %v1792, 1
    %v1797 = vsel %vm1795, %v1796, %v1792
    %v1798 = vadd.s32 %v1793, %v1797
    %v1799 = vadd.s32 %v1798, 536870912
    %v1800 = vshrl.u32 %v1799, 30
    %v1801 = vshll.u32 %v1800, 30
    %v1802 = vsub.s32 %v1798, %v1801
    %vm1803 = vcmp.lt.s32.totalorder %v1802, 0
    %v1804 = vsub.s32 0, %v1802
    %v1805 = vsel %vm1803, %v1804, %v1802
    %v1806 = vclz %v1805
    %v1807 = vsub.s32 %v1806, 2
    %vm1808 = vcmp.gt.s32.totalorder 0, %v1807
    %v1809 = vsel %vm1808, 0, %v1807
    %v1810 = vsub.s32 32, %v1809
    %v1811 = vshll.u32 %v1802, %v1809
    %v1812 = vshrl.u32 %v1794, %v1810
    %v1813 = vor.u32 %v1811, %v1812
    %v1814 = vsub.s32 4294967266, %v1809
    %v1815 = vadd.s32 %v1814, 127
    %v1816 = vshll.u32 %v1815, 23
    %v1817 = vor.u32 4788187, %v1816
    %v1818 = vand.u32 2147483647, %v1817
    %v1820 = vcvt.s32.f32 %v1813
    %v1821 = vmul.f32 %v1820, %v1818
    %v1822 = vxor.u32 %v1821, 2147483648
    %v1823 = vsel %vm1740, %v1822, %v1821
    %v1824 = vsub.s32 4, %v1800
    %v1825 = vsel %vm1740, %v1824, %v1800
    %v1826 = vsel %vm1739, %v676, %v1823
    %v1827 = vsel %vm1739, 0, %v1825
    %v1828 = vcosq.f32.pop %v1826
    %v1829 = vsinq.f32.pop %v1826
    %vm1830 = vweird.f32 %v676
    %v1831 = vadd.s32 %v1827, 3
    %v1832 = vand.u32 %v1831, 3
    %vm1833 = vcmp.lt.s32.totalorder %v1832, 2
    %vm1834 = vcmp.eq.s32.totalorder %v1832, 0
    %v1835 = vxor.u32 %v1829, 2147483648
    %v1836 = vsel %vm1834, %v1828, %v1835
    %vm1837 = vcmp.eq.s32.totalorder %v1832, 2
    %v1838 = vxor.u32 %v1828, 2147483648
    %v1839 = vsel %vm1837, %v1838, %v1829
    %v1840 = vsel %vm1833, %v1836, %v1839
    %v1841 = vsel %vm1830, nan, %v1840
    %v1842 = vand.u32 2147483647, %v677
    %vm1843 = vcmp.le.f32.partialorder %v1842, 0.7853982
    %vm1844 = vcmp.lt.s32.totalorder %v677, 0
    %v1845 = vand.u32 %v677, 2139095040
    %v1846 = vshrl.u32 %v1845, 23
    %v1847 = vsub.s32 %v1846, 127
    %v1848 = vand.u32 2147483647, %v677
    %v1849 = vand.u32 %v1848, 8388607
    %v1850 = vor.u32 %v1849, 8388608
    %v1851 = vsub.s32 0, %v1850
    %v1852 = vadd.s32 %v1847, 1
    %vm1853 = vcmp.gt.s32.totalorder %v1852, 0
    %v1854 = vsel %vm1853, %v1852, 0
    %v1855 = vshrl.u32 %v1854, 5
    %v1856 = vand.u32 %v1854, 31
    %v1857 = vsub.s32 32, %v1856
    %v1858 = vshrl.u32 683565275, %v1857
    %v1859 = vshll.u32 683565275, %v1856
    %v1860 = vshrl.u32 2475754826, %v1857
    %v1861 = vor.u32 %v1859, %v1860
    %v1862 = vshll.u32 2475754826, %v1856
    %v1863 = vshrl.u32 2131351028, %v1857
    %v1864 = vor.u32 %v1862, %v1863
    %v1865 = vshll.u32 2131351028, %v1856
    %v1866 = vshrl.u32 2102212464, %v1857
    %v1867 = vor.u32 %v1865, %v1866
    %v1868 = vshll.u32 2102212464, %v1856
    %v1869 = vshrl.u32 920167782, %v1857
    %v1870 = vor.u32 %v1868, %v1869
    %v1871 = vshll.u32 920167782, %v1856
    %v1872 = vshrl.u32 1326507024, %v1857
    %v1873 = vor.u32 %v1871, %v1872
    %vm1874 = vcmp.lt.s32.totalorder %v1855, 1
    %vm1875 = vcmp.lt.s32.totalorder %v1855, 2
    %vm1876 = vcmp.lt.s32.totalorder %v1855, 3
    %vm1877 = vcmp.lt.s32.totalorder %v1855, 4
    %v1878 = vsel %vm1874, %v1858, %v1861
    %v1879 = vsel %vm1877, %v1867, 2102212464
    %v1880 = vsel %vm1876, %v1864, %v1879
    %v1881 = vsel %vm1875, %v1878, %v1880
    %v1882 = vsel %vm1874, %v1861, %v1864
    %v1883 = vsel %vm1877, %v1870, 920167782
    %v1884 = vsel %vm1876, %v1867, %v1883
    %v1885 = vsel %vm1875, %v1882, %v1884
    %v1886 = vsel %vm1874, %v1864, %v1867
    %v1887 = vsel %vm1877, %v1873, 1326507024
    %v1888 = vsel %vm1876, %v1870, %v1887
    %v1889 = vsel %vm1875, %v1886, %v1888
    %v1890 = vshll.u32 %v1850, 8
    %v1891 = vmul.u32.u64.compose %v1890, %v1889
    %v1892 = vextract.low.u32 %v1891
    %v1893 = vextract.high.u32 %v1891
    %v1894 = vmul.u32.u64.compose %v1890, %v1885
    %v1895 = vextract.low.u32 %v1894
    %v1896 = vextract.high.u32 %v1894
    %v1897 = vmul.u32 %v1890, %v1881
    %v1898 = vadd.s32 %v1893, %v1895
    %vm1899 = vc.u32 %v1893, %v1895
    %v1900 = vadd.s32 %v1896, 1
    %v1901 = vsel %vm1899, %v1900, %v1896
    %v1902 = vadd.s32 %v1897, %v1901
    %v1903 = vadd.s32 %v1902, 536870912
    %v1904 = vshrl.u32 %v1903, 30
    %v1905 = vshll.u32 %v1904, 30
    %v1906 = vsub.s32 %v1902, %v1905
    %vm1907 = vcmp.lt.s32.totalorder %v1906, 0
    %v1908 = vsub.s32 0, %v1906
    %v1909 = vsel %vm1907, %v1908, %v1906
    %v1910 = vclz %v1909
    %v1911 = vsub.s32 %v1910, 2
    %vm1912 = vcmp.gt.s32.totalorder 0, %v1911
    %v1913 = vsel %vm1912, 0, %v1911
    %v1914 = vsub.s32 32, %v1913
    %v1915 = vshll.u32 %v1906, %v1913
    %v1916 = vshrl.u32 %v1898, %v1914
    %v1917 = vor.u32 %v1915, %v1916
    %v1918 = vsub.s32 4294967266, %v1913
    %v1919 = vadd.s32 %v1918, 127
    %v1920 = vshll.u32 %v1919, 23
    %v1921 = vor.u32 4788187, %v1920
    %v1922 = vand.u32 2147483647, %v1921
    %v1924 = vcvt.s32.f32 %v1917
    %v1925 = vmul.f32 %v1924, %v1922
    %v1926 = vxor.u32 %v1925, 2147483648
    %v1927 = vsel %vm1844, %v1926, %v1925
    %v1928 = vsub.s32 4, %v1904
    %v1929 = vsel %vm1844, %v1928, %v1904
    %v1930 = vsel %vm1843, %v677, %v1927
    %v1931 = vsel %vm1843, 0, %v1929
    %v1932 = vcosq.f32.pop %v1930
    %v1933 = vsinq.f32.pop %v1930
    %vm1934 = vweird.f32 %v677
    %v1935 = vadd.s32 %v1931, 3
    %v1936 = vand.u32 %v1935, 3
    %vm1937 = vcmp.lt.s32.totalorder %v1936, 2
    %vm1938 = vcmp.eq.s32.totalorder %v1936, 0
    %v1939 = vxor.u32 %v1933, 2147483648
    %v1940 = vsel %vm1938, %v1932, %v1939
    %vm1941 = vcmp.eq.s32.totalorder %v1936, 2
    %v1942 = vxor.u32 %v1932, 2147483648
    %v1943 = vsel %vm1941, %v1942, %v1933
    %v1944 = vsel %vm1937, %v1940, %v1943
    %v1945 = vsel %vm1934, nan, %v1944
    %v1946 = vand.u32 2147483647, %v678
    %vm1947 = vcmp.le.f32.partialorder %v1946, 0.7853982
    %vm1948 = vcmp.lt.s32.totalorder %v678, 0
    %v1949 = vand.u32 %v678, 2139095040
    %v1950 = vshrl.u32 %v1949, 23
    %v1951 = vsub.s32 %v1950, 127
    %v1952 = vand.u32 2147483647, %v678
    %v1953 = vand.u32 %v1952, 8388607
    %v1954 = vor.u32 %v1953, 8388608
    %v1955 = vsub.s32 0, %v1954
    %v1956 = vadd.s32 %v1951, 1
    %vm1957 = vcmp.gt.s32.totalorder %v1956, 0
    %v1958 = vsel %vm1957, %v1956, 0
    %v1959 = vshrl.u32 %v1958, 5
    %v1960 = vand.u32 %v1958, 31
    %v1961 = vsub.s32 32, %v1960
    %v1962 = vshrl.u32 683565275, %v1961
    %v1963 = vshll.u32 683565275, %v1960
    %v1964 = vshrl.u32 2475754826, %v1961
    %v1965 = vor.u32 %v1963, %v1964
    %v1966 = vshll.u32 2475754826, %v1960
    %v1967 = vshrl.u32 2131351028, %v1961
    %v1968 = vor.u32 %v1966, %v1967
    %v1969 = vshll.u32 2131351028, %v1960
    %v1970 = vshrl.u32 2102212464, %v1961
    %v1971 = vor.u32 %v1969, %v1970
    %v1972 = vshll.u32 2102212464, %v1960
    %v1973 = vshrl.u32 920167782, %v1961
    %v1974 = vor.u32 %v1972, %v1973
    %v1975 = vshll.u32 920167782, %v1960
    %v1976 = vshrl.u32 1326507024, %v1961
    %v1977 = vor.u32 %v1975, %v1976
    %vm1978 = vcmp.lt.s32.totalorder %v1959, 1
    %vm1979 = vcmp.lt.s32.totalorder %v1959, 2
    %vm1980 = vcmp.lt.s32.totalorder %v1959, 3
    %vm1981 = vcmp.lt.s32.totalorder %v1959, 4
    %v1982 = vsel %vm1978, %v1962, %v1965
    %v1983 = vsel %vm1981, %v1971, 2102212464
    %v1984 = vsel %vm1980, %v1968, %v1983
    %v1985 = vsel %vm1979, %v1982, %v1984
    %v1986 = vsel %vm1978, %v1965, %v1968
    %v1987 = vsel %vm1981, %v1974, 920167782
    %v1988 = vsel %vm1980, %v1971, %v1987
    %v1989 = vsel %vm1979, %v1986, %v1988
    %v1990 = vsel %vm1978, %v1968, %v1971
    %v1991 = vsel %vm1981, %v1977, 1326507024
    %v1992 = vsel %vm1980, %v1974, %v1991
    %v1993 = vsel %vm1979, %v1990, %v1992
    %v1994 = vshll.u32 %v1954, 8
    %v1995 = vmul.u32.u64.compose %v1994, %v1993
    %v1996 = vextract.low.u32 %v1995
    %v1997 = vextract.high.u32 %v1995
    %v1998 = vmul.u32.u64.compose %v1994, %v1989
    %v1999 = vextract.low.u32 %v1998
    %v2000 = vextract.high.u32 %v1998
    %v2001 = vmul.u32 %v1994, %v1985
    %v2002 = vadd.s32 %v1997, %v1999
    %vm2003 = vc.u32 %v1997, %v1999
    %v2004 = vadd.s32 %v2000, 1
    %v2005 = vsel %vm2003, %v2004, %v2000
    %v2006 = vadd.s32 %v2001, %v2005
    %v2007 = vadd.s32 %v2006, 536870912
    %v2008 = vshrl.u32 %v2007, 30
    %v2009 = vshll.u32 %v2008, 30
    %v2010 = vsub.s32 %v2006, %v2009
    %vm2011 = vcmp.lt.s32.totalorder %v2010, 0
    %v2012 = vsub.s32 0, %v2010
    %v2013 = vsel %vm2011, %v2012, %v2010
    %v2014 = vclz %v2013
    %v2015 = vsub.s32 %v2014, 2
    %vm2016 = vcmp.gt.s32.totalorder 0, %v2015
    %v2017 = vsel %vm2016, 0, %v2015
    %v2018 = vsub.s32 32, %v2017
    %v2019 = vshll.u32 %v2010, %v2017
    %v2020 = vshrl.u32 %v2002, %v2018
    %v2021 = vor.u32 %v2019, %v2020
    %v2022 = vsub.s32 4294967266, %v2017
    %v2023 = vadd.s32 %v2022, 127
    %v2024 = vshll.u32 %v2023, 23
    %v2025 = vor.u32 4788187, %v2024
    %v2026 = vand.u32 2147483647, %v2025
    %v2028 = vcvt.s32.f32 %v2021
    %v2029 = vmul.f32 %v2028, %v2026
    %v2030 = vxor.u32 %v2029, 2147483648
    %v2031 = vsel %vm1948, %v2030, %v2029
    %v2032 = vsub.s32 4, %v2008
    %v2033 = vsel %vm1948, %v2032, %v2008
    %v2034 = vsel %vm1947, %v678, %v2031
    %v2035 = vsel %vm1947, 0, %v2033
    %v2036 = vcosq.f32.pop %v2034
    %v2037 = vsinq.f32.pop %v2034
    %vm2038 = vweird.f32 %v678
    %v2039 = vadd.s32 %v2035, 3
    %v2040 = vand.u32 %v2039, 3
    %vm2041 = vcmp.lt.s32.totalorder %v2040, 2
    %vm2042 = vcmp.eq.s32.totalorder %v2040, 0
    %v2043 = vxor.u32 %v2037, 2147483648
    %v2044 = vsel %vm2042, %v2036, %v2043
    %vm2045 = vcmp.eq.s32.totalorder %v2040, 2
    %v2046 = vxor.u32 %v2036, 2147483648
    %v2047 = vsel %vm2045, %v2046, %v2037
    %v2048 = vsel %vm2041, %v2044, %v2047
    %v2049 = vsel %vm2038, nan, %v2048
    %v2050 = vand.u32 2147483647, %v679
    %vm2051 = vcmp.le.f32.partialorder %v2050, 0.7853982
    %vm2052 = vcmp.lt.s32.totalorder %v679, 0
    %v2053 = vand.u32 %v679, 2139095040
    %v2054 = vshrl.u32 %v2053, 23
    %v2055 = vsub.s32 %v2054, 127
    %v2056 = vand.u32 2147483647, %v679
    %v2057 = vand.u32 %v2056, 8388607
    %v2058 = vor.u32 %v2057, 8388608
    %v2059 = vsub.s32 0, %v2058
    %v2060 = vadd.s32 %v2055, 1
    %vm2061 = vcmp.gt.s32.totalorder %v2060, 0
    %v2062 = vsel %vm2061, %v2060, 0
    %v2063 = vshrl.u32 %v2062, 5
    %v2064 = vand.u32 %v2062, 31
    %v2065 = vsub.s32 32, %v2064
    %v2066 = vshrl.u32 683565275, %v2065
    %v2067 = vshll.u32 683565275, %v2064
    %v2068 = vshrl.u32 2475754826, %v2065
    %v2069 = vor.u32 %v2067, %v2068
    %v2070 = vshll.u32 2475754826, %v2064
    %v2071 = vshrl.u32 2131351028, %v2065
    %v2072 = vor.u32 %v2070, %v2071
    %v2073 = vshll.u32 2131351028, %v2064
    %v2074 = vshrl.u32 2102212464, %v2065
    %v2075 = vor.u32 %v2073, %v2074
    %v2076 = vshll.u32 2102212464, %v2064
    %v2077 = vshrl.u32 920167782, %v2065
    %v2078 = vor.u32 %v2076, %v2077
    %v2079 = vshll.u32 920167782, %v2064
    %v2080 = vshrl.u32 1326507024, %v2065
    %v2081 = vor.u32 %v2079, %v2080
    %vm2082 = vcmp.lt.s32.totalorder %v2063, 1
    %vm2083 = vcmp.lt.s32.totalorder %v2063, 2
    %vm2084 = vcmp.lt.s32.totalorder %v2063, 3
    %vm2085 = vcmp.lt.s32.totalorder %v2063, 4
    %v2086 = vsel %vm2082, %v2066, %v2069
    %v2087 = vsel %vm2085, %v2075, 2102212464
    %v2088 = vsel %vm2084, %v2072, %v2087
    %v2089 = vsel %vm2083, %v2086, %v2088
    %v2090 = vsel %vm2082, %v2069, %v2072
    %v2091 = vsel %vm2085, %v2078, 920167782
    %v2092 = vsel %vm2084, %v2075, %v2091
    %v2093 = vsel %vm2083, %v2090, %v2092
    %v2094 = vsel %vm2082, %v2072, %v2075
    %v2095 = vsel %vm2085, %v2081, 1326507024
    %v2096 = vsel %vm2084, %v2078, %v2095
    %v2097 = vsel %vm2083, %v2094, %v2096
    %v2098 = vshll.u32 %v2058, 8
    %v2099 = vmul.u32.u64.compose %v2098, %v2097
    %v2100 = vextract.low.u32 %v2099
    %v2101 = vextract.high.u32 %v2099
    %v2102 = vmul.u32.u64.compose %v2098, %v2093
    %v2103 = vextract.low.u32 %v2102
    %v2104 = vextract.high.u32 %v2102
    %v2105 = vmul.u32 %v2098, %v2089
    %v2106 = vadd.s32 %v2101, %v2103
    %vm2107 = vc.u32 %v2101, %v2103
    %v2108 = vadd.s32 %v2104, 1
    %v2109 = vsel %vm2107, %v2108, %v2104
    %v2110 = vadd.s32 %v2105, %v2109
    %v2111 = vadd.s32 %v2110, 536870912
    %v2112 = vshrl.u32 %v2111, 30
    %v2113 = vshll.u32 %v2112, 30
    %v2114 = vsub.s32 %v2110, %v2113
    %vm2115 = vcmp.lt.s32.totalorder %v2114, 0
    %v2116 = vsub.s32 0, %v2114
    %v2117 = vsel %vm2115, %v2116, %v2114
    %v2118 = vclz %v2117
    %v2119 = vsub.s32 %v2118, 2
    %vm2120 = vcmp.gt.s32.totalorder 0, %v2119
    %v2121 = vsel %vm2120, 0, %v2119
    %v2122 = vsub.s32 32, %v2121
    %v2123 = vshll.u32 %v2114, %v2121
    %v2124 = vshrl.u32 %v2106, %v2122
    %v2125 = vor.u32 %v2123, %v2124
    %v2126 = vsub.s32 4294967266, %v2121
    %v2127 = vadd.s32 %v2126, 127
    %v2128 = vshll.u32 %v2127, 23
    %v2129 = vor.u32 4788187, %v2128
    %v2130 = vand.u32 2147483647, %v2129
    %v2132 = vcvt.s32.f32 %v2125
    %v2133 = vmul.f32 %v2132, %v2130
    %v2134 = vxor.u32 %v2133, 2147483648
    %v2135 = vsel %vm2052, %v2134, %v2133
    %v2136 = vsub.s32 4, %v2112
    %v2137 = vsel %vm2052, %v2136, %v2112
    %v2138 = vsel %vm2051, %v679, %v2135
    %v2139 = vsel %vm2051, 0, %v2137
    %v2140 = vcosq.f32.pop %v2138
    %v2141 = vsinq.f32.pop %v2138
    %vm2142 = vweird.f32 %v679
    %v2143 = vadd.s32 %v2139, 3
    %v2144 = vand.u32 %v2143, 3
    %vm2145 = vcmp.lt.s32.totalorder %v2144, 2
    %vm2146 = vcmp.eq.s32.totalorder %v2144, 0
    %v2147 = vxor.u32 %v2141, 2147483648
    %v2148 = vsel %vm2146, %v2140, %v2147
    %vm2149 = vcmp.eq.s32.totalorder %v2144, 2
    %v2150 = vxor.u32 %v2140, 2147483648
    %v2151 = vsel %vm2149, %v2150, %v2141
    %v2152 = vsel %vm2145, %v2148, %v2151
    %v2153 = vsel %vm2142, nan, %v2152
    %v2154 = vand.u32 2147483647, %v680
    %vm2155 = vcmp.le.f32.partialorder %v2154, 0.7853982
    %vm2156 = vcmp.lt.s32.totalorder %v680, 0
    %v2157 = vand.u32 %v680, 2139095040
    %v2158 = vshrl.u32 %v2157, 23
    %v2159 = vsub.s32 %v2158, 127
    %v2160 = vand.u32 2147483647, %v680
    %v2161 = vand.u32 %v2160, 8388607
    %v2162 = vor.u32 %v2161, 8388608
    %v2163 = vsub.s32 0, %v2162
    %v2164 = vadd.s32 %v2159, 1
    %vm2165 = vcmp.gt.s32.totalorder %v2164, 0
    %v2166 = vsel %vm2165, %v2164, 0
    %v2167 = vshrl.u32 %v2166, 5
    %v2168 = vand.u32 %v2166, 31
    %v2169 = vsub.s32 32, %v2168
    %v2170 = vshrl.u32 683565275, %v2169
    %v2171 = vshll.u32 683565275, %v2168
    %v2172 = vshrl.u32 2475754826, %v2169
    %v2173 = vor.u32 %v2171, %v2172
    %v2174 = vshll.u32 2475754826, %v2168
    %v2175 = vshrl.u32 2131351028, %v2169
    %v2176 = vor.u32 %v2174, %v2175
    %v2177 = vshll.u32 2131351028, %v2168
    %v2178 = vshrl.u32 2102212464, %v2169
    %v2179 = vor.u32 %v2177, %v2178
    %v2180 = vshll.u32 2102212464, %v2168
    %v2181 = vshrl.u32 920167782, %v2169
    %v2182 = vor.u32 %v2180, %v2181
    %v2183 = vshll.u32 920167782, %v2168
    %v2184 = vshrl.u32 1326507024, %v2169
    %v2185 = vor.u32 %v2183, %v2184
    %vm2186 = vcmp.lt.s32.totalorder %v2167, 1
    %vm2187 = vcmp.lt.s32.totalorder %v2167, 2
    %vm2188 = vcmp.lt.s32.totalorder %v2167, 3
    %vm2189 = vcmp.lt.s32.totalorder %v2167, 4
    %v2190 = vsel %vm2186, %v2170, %v2173
    %v2191 = vsel %vm2189, %v2179, 2102212464
    %v2192 = vsel %vm2188, %v2176, %v2191
    %v2193 = vsel %vm2187, %v2190, %v2192
    %v2194 = vsel %vm2186, %v2173, %v2176
    %v2195 = vsel %vm2189, %v2182, 920167782
    %v2196 = vsel %vm2188, %v2179, %v2195
    %v2197 = vsel %vm2187, %v2194, %v2196
    %v2198 = vsel %vm2186, %v2176, %v2179
    %v2199 = vsel %vm2189, %v2185, 1326507024
    %v2200 = vsel %vm2188, %v2182, %v2199
    %v2201 = vsel %vm2187, %v2198, %v2200
    %v2202 = vshll.u32 %v2162, 8
    %v2203 = vmul.u32.u64.compose %v2202, %v2201
    %v2204 = vextract.low.u32 %v2203
    %v2205 = vextract.high.u32 %v2203
    %v2206 = vmul.u32.u64.compose %v2202, %v2197
    %v2207 = vextract.low.u32 %v2206
    %v2208 = vextract.high.u32 %v2206
    %v2209 = vmul.u32 %v2202, %v2193
    %v2210 = vadd.s32 %v2205, %v2207
    %vm2211 = vc.u32 %v2205, %v2207
    %v2212 = vadd.s32 %v2208, 1
    %v2213 = vsel %vm2211, %v2212, %v2208
    %v2214 = vadd.s32 %v2209, %v2213
    %v2215 = vadd.s32 %v2214, 536870912
    %v2216 = vshrl.u32 %v2215, 30
    %v2217 = vshll.u32 %v2216, 30
    %v2218 = vsub.s32 %v2214, %v2217
    %vm2219 = vcmp.lt.s32.totalorder %v2218, 0
    %v2220 = vsub.s32 0, %v2218
    %v2221 = vsel %vm2219, %v2220, %v2218
    %v2222 = vclz %v2221
    %v2223 = vsub.s32 %v2222, 2
    %vm2224 = vcmp.gt.s32.totalorder 0, %v2223
    %v2225 = vsel %vm2224, 0, %v2223
    %v2226 = vsub.s32 32, %v2225
    %v2227 = vshll.u32 %v2218, %v2225
    %v2228 = vshrl.u32 %v2210, %v2226
    %v2229 = vor.u32 %v2227, %v2228
    %v2230 = vsub.s32 4294967266, %v2225
    %v2231 = vadd.s32 %v2230, 127
    %v2232 = vshll.u32 %v2231, 23
    %v2233 = vor.u32 4788187, %v2232
    %v2234 = vand.u32 2147483647, %v2233
    %v2236 = vcvt.s32.f32 %v2229
    %v2237 = vmul.f32 %v2236, %v2234
    %v2238 = vxor.u32 %v2237, 2147483648
    %v2239 = vsel %vm2156, %v2238, %v2237
    %v2240 = vsub.s32 4, %v2216
    %v2241 = vsel %vm2156, %v2240, %v2216
    %v2242 = vsel %vm2155, %v680, %v2239
    %v2243 = vsel %vm2155, 0, %v2241
    %v2244 = vcosq.f32.pop %v2242
    %v2245 = vsinq.f32.pop %v2242
    %vm2246 = vweird.f32 %v680
    %v2247 = vadd.s32 %v2243, 3
    %v2248 = vand.u32 %v2247, 3
    %vm2249 = vcmp.lt.s32.totalorder %v2248, 2
    %vm2250 = vcmp.eq.s32.totalorder %v2248, 0
    %v2251 = vxor.u32 %v2245, 2147483648
    %v2252 = vsel %vm2250, %v2244, %v2251
    %vm2253 = vcmp.eq.s32.totalorder %v2248, 2
    %v2254 = vxor.u32 %v2244, 2147483648
    %v2255 = vsel %vm2253, %v2254, %v2245
    %v2256 = vsel %vm2249, %v2252, %v2255
    %v2257 = vsel %vm2246, nan, %v2256
    %v2258 = vand.u32 2147483647, %v681
    %vm2259 = vcmp.le.f32.partialorder %v2258, 0.7853982
    %vm2260 = vcmp.lt.s32.totalorder %v681, 0
    %v2261 = vand.u32 %v681, 2139095040
    %v2262 = vshrl.u32 %v2261, 23
    %v2263 = vsub.s32 %v2262, 127
    %v2264 = vand.u32 2147483647, %v681
    %v2265 = vand.u32 %v2264, 8388607
    %v2266 = vor.u32 %v2265, 8388608
    %v2267 = vsub.s32 0, %v2266
    %v2268 = vadd.s32 %v2263, 1
    %vm2269 = vcmp.gt.s32.totalorder %v2268, 0
    %v2270 = vsel %vm2269, %v2268, 0
    %v2271 = vshrl.u32 %v2270, 5
    %v2272 = vand.u32 %v2270, 31
    %v2273 = vsub.s32 32, %v2272
    %v2274 = vshrl.u32 683565275, %v2273
    %v2275 = vshll.u32 683565275, %v2272
    %v2276 = vshrl.u32 2475754826, %v2273
    %v2277 = vor.u32 %v2275, %v2276
    %v2278 = vshll.u32 2475754826, %v2272
    %v2279 = vshrl.u32 2131351028, %v2273
    %v2280 = vor.u32 %v2278, %v2279
    %v2281 = vshll.u32 2131351028, %v2272
    %v2282 = vshrl.u32 2102212464, %v2273
    %v2283 = vor.u32 %v2281, %v2282
    %v2284 = vshll.u32 2102212464, %v2272
    %v2285 = vshrl.u32 920167782, %v2273
    %v2286 = vor.u32 %v2284, %v2285
    %v2287 = vshll.u32 920167782, %v2272
    %v2288 = vshrl.u32 1326507024, %v2273
    %v2289 = vor.u32 %v2287, %v2288
    %vm2290 = vcmp.lt.s32.totalorder %v2271, 1
    %vm2291 = vcmp.lt.s32.totalorder %v2271, 2
    %vm2292 = vcmp.lt.s32.totalorder %v2271, 3
    %vm2293 = vcmp.lt.s32.totalorder %v2271, 4
    %v2294 = vsel %vm2290, %v2274, %v2277
    %v2295 = vsel %vm2293, %v2283, 2102212464
    %v2296 = vsel %vm2292, %v2280, %v2295
    %v2297 = vsel %vm2291, %v2294, %v2296
    %v2298 = vsel %vm2290, %v2277, %v2280
    %v2299 = vsel %vm2293, %v2286, 920167782
    %v2300 = vsel %vm2292, %v2283, %v2299
    %v2301 = vsel %vm2291, %v2298, %v2300
    %v2302 = vsel %vm2290, %v2280, %v2283
    %v2303 = vsel %vm2293, %v2289, 1326507024
    %v2304 = vsel %vm2292, %v2286, %v2303
    %v2305 = vsel %vm2291, %v2302, %v2304
    %v2306 = vshll.u32 %v2266, 8
    %v2307 = vmul.u32.u64.compose %v2306, %v2305
    %v2308 = vextract.low.u32 %v2307
    %v2309 = vextract.high.u32 %v2307
    %v2310 = vmul.u32.u64.compose %v2306, %v2301
    %v2311 = vextract.low.u32 %v2310
    %v2312 = vextract.high.u32 %v2310
    %v2313 = vmul.u32 %v2306, %v2297
    %v2314 = vadd.s32 %v2309, %v2311
    %vm2315 = vc.u32 %v2309, %v2311
    %v2316 = vadd.s32 %v2312, 1
    %v2317 = vsel %vm2315, %v2316, %v2312
    %v2318 = vadd.s32 %v2313, %v2317
    %v2319 = vadd.s32 %v2318, 536870912
    %v2320 = vshrl.u32 %v2319, 30
    %v2321 = vshll.u32 %v2320, 30
    %v2322 = vsub.s32 %v2318, %v2321
    %vm2323 = vcmp.lt.s32.totalorder %v2322, 0
    %v2324 = vsub.s32 0, %v2322
    %v2325 = vsel %vm2323, %v2324, %v2322
    %v2326 = vclz %v2325
    %v2327 = vsub.s32 %v2326, 2
    %vm2328 = vcmp.gt.s32.totalorder 0, %v2327
    %v2329 = vsel %vm2328, 0, %v2327
    %v2330 = vsub.s32 32, %v2329
    %v2331 = vshll.u32 %v2322, %v2329
    %v2332 = vshrl.u32 %v2314, %v2330
    %v2333 = vor.u32 %v2331, %v2332
    %v2334 = vsub.s32 4294967266, %v2329
    %v2335 = vadd.s32 %v2334, 127
    %v2336 = vshll.u32 %v2335, 23
    %v2337 = vor.u32 4788187, %v2336
    %v2338 = vand.u32 2147483647, %v2337
    %v2340 = vcvt.s32.f32 %v2333
    %v2341 = vmul.f32 %v2340, %v2338
    %v2342 = vxor.u32 %v2341, 2147483648
    %v2343 = vsel %vm2260, %v2342, %v2341
    %v2344 = vsub.s32 4, %v2320
    %v2345 = vsel %vm2260, %v2344, %v2320
    %v2346 = vsel %vm2259, %v681, %v2343
    %v2347 = vsel %vm2259, 0, %v2345
    %v2348 = vcosq.f32.pop %v2346
    %v2349 = vsinq.f32.pop %v2346
    %vm2350 = vweird.f32 %v681
    %v2351 = vadd.s32 %v2347, 3
    %v2352 = vand.u32 %v2351, 3
    %vm2353 = vcmp.lt.s32.totalorder %v2352, 2
    %vm2354 = vcmp.eq.s32.totalorder %v2352, 0
    %v2355 = vxor.u32 %v2349, 2147483648
    %v2356 = vsel %vm2354, %v2348, %v2355
    %vm2357 = vcmp.eq.s32.totalorder %v2352, 2
    %v2358 = vxor.u32 %v2348, 2147483648
    %v2359 = vsel %vm2357, %v2358, %v2349
    %v2360 = vsel %vm2353, %v2356, %v2359
    %v2361 = vsel %vm2350, nan, %v2360
    %v2362 = vand.u32 2147483647, %v682
    %vm2363 = vcmp.le.f32.partialorder %v2362, 0.7853982
    %vm2364 = vcmp.lt.s32.totalorder %v682, 0
    %v2365 = vand.u32 %v682, 2139095040
    %v2366 = vshrl.u32 %v2365, 23
    %v2367 = vsub.s32 %v2366, 127
    %v2368 = vand.u32 2147483647, %v682
    %v2369 = vand.u32 %v2368, 8388607
    %v2370 = vor.u32 %v2369, 8388608
    %v2371 = vsub.s32 0, %v2370
    %v2372 = vadd.s32 %v2367, 1
    %vm2373 = vcmp.gt.s32.totalorder %v2372, 0
    %v2374 = vsel %vm2373, %v2372, 0
    %v2375 = vshrl.u32 %v2374, 5
    %v2376 = vand.u32 %v2374, 31
    %v2377 = vsub.s32 32, %v2376
    %v2378 = vshrl.u32 683565275, %v2377
    %v2379 = vshll.u32 683565275, %v2376
    %v2380 = vshrl.u32 2475754826, %v2377
    %v2381 = vor.u32 %v2379, %v2380
    %v2382 = vshll.u32 2475754826, %v2376
    %v2383 = vshrl.u32 2131351028, %v2377
    %v2384 = vor.u32 %v2382, %v2383
    %v2385 = vshll.u32 2131351028, %v2376
    %v2386 = vshrl.u32 2102212464, %v2377
    %v2387 = vor.u32 %v2385, %v2386
    %v2388 = vshll.u32 2102212464, %v2376
    %v2389 = vshrl.u32 920167782, %v2377
    %v2390 = vor.u32 %v2388, %v2389
    %v2391 = vshll.u32 920167782, %v2376
    %v2392 = vshrl.u32 1326507024, %v2377
    %v2393 = vor.u32 %v2391, %v2392
    %vm2394 = vcmp.lt.s32.totalorder %v2375, 1
    %vm2395 = vcmp.lt.s32.totalorder %v2375, 2
    %vm2396 = vcmp.lt.s32.totalorder %v2375, 3
    %vm2397 = vcmp.lt.s32.totalorder %v2375, 4
    %v2398 = vsel %vm2394, %v2378, %v2381
    %v2399 = vsel %vm2397, %v2387, 2102212464
    %v2400 = vsel %vm2396, %v2384, %v2399
    %v2401 = vsel %vm2395, %v2398, %v2400
    %v2402 = vsel %vm2394, %v2381, %v2384
    %v2403 = vsel %vm2397, %v2390, 920167782
    %v2404 = vsel %vm2396, %v2387, %v2403
    %v2405 = vsel %vm2395, %v2402, %v2404
    %v2406 = vsel %vm2394, %v2384, %v2387
    %v2407 = vsel %vm2397, %v2393, 1326507024
    %v2408 = vsel %vm2396, %v2390, %v2407
    %v2409 = vsel %vm2395, %v2406, %v2408
    %v2410 = vshll.u32 %v2370, 8
    %v2411 = vmul.u32.u64.compose %v2410, %v2409
    %v2412 = vextract.low.u32 %v2411
    %v2413 = vextract.high.u32 %v2411
    %v2414 = vmul.u32.u64.compose %v2410, %v2405
    %v2415 = vextract.low.u32 %v2414
    %v2416 = vextract.high.u32 %v2414
    %v2417 = vmul.u32 %v2410, %v2401
    %v2418 = vadd.s32 %v2413, %v2415
    %vm2419 = vc.u32 %v2413, %v2415
    %v2420 = vadd.s32 %v2416, 1
    %v2421 = vsel %vm2419, %v2420, %v2416
    %v2422 = vadd.s32 %v2417, %v2421
    %v2423 = vadd.s32 %v2422, 536870912
    %v2424 = vshrl.u32 %v2423, 30
    %v2425 = vshll.u32 %v2424, 30
    %v2426 = vsub.s32 %v2422, %v2425
    %vm2427 = vcmp.lt.s32.totalorder %v2426, 0
    %v2428 = vsub.s32 0, %v2426
    %v2429 = vsel %vm2427, %v2428, %v2426
    %v2430 = vclz %v2429
    %v2431 = vsub.s32 %v2430, 2
    %vm2432 = vcmp.gt.s32.totalorder 0, %v2431
    %v2433 = vsel %vm2432, 0, %v2431
    %v2434 = vsub.s32 32, %v2433
    %v2435 = vshll.u32 %v2426, %v2433
    %v2436 = vshrl.u32 %v2418, %v2434
    %v2437 = vor.u32 %v2435, %v2436
    %v2438 = vsub.s32 4294967266, %v2433
    %v2439 = vadd.s32 %v2438, 127
    %v2440 = vshll.u32 %v2439, 23
    %v2441 = vor.u32 4788187, %v2440
    %v2442 = vand.u32 2147483647, %v2441
    %v2444 = vcvt.s32.f32 %v2437
    %v2445 = vmul.f32 %v2444, %v2442
    %v2446 = vxor.u32 %v2445, 2147483648
    %v2447 = vsel %vm2364, %v2446, %v2445
    %v2448 = vsub.s32 4, %v2424
    %v2449 = vsel %vm2364, %v2448, %v2424
    %v2450 = vsel %vm2363, %v682, %v2447
    %v2451 = vsel %vm2363, 0, %v2449
    %v2452 = vcosq.f32.pop %v2450
    %v2453 = vsinq.f32.pop %v2450
    %vm2454 = vweird.f32 %v682
    %v2455 = vadd.s32 %v2451, 3
    %v2456 = vand.u32 %v2455, 3
    %vm2457 = vcmp.lt.s32.totalorder %v2456, 2
    %vm2458 = vcmp.eq.s32.totalorder %v2456, 0
    %v2459 = vxor.u32 %v2453, 2147483648
    %v2460 = vsel %vm2458, %v2452, %v2459
    %vm2461 = vcmp.eq.s32.totalorder %v2456, 2
    %v2462 = vxor.u32 %v2452, 2147483648
    %v2463 = vsel %vm2461, %v2462, %v2453
    %v2464 = vsel %vm2457, %v2460, %v2463
    %v2465 = vsel %vm2454, nan, %v2464
    %v2466 = vand.u32 2147483647, %v683
    %vm2467 = vcmp.le.f32.partialorder %v2466, 0.7853982
    %vm2468 = vcmp.lt.s32.totalorder %v683, 0
    %v2469 = vand.u32 %v683, 2139095040
    %v2470 = vshrl.u32 %v2469, 23
    %v2471 = vsub.s32 %v2470, 127
    %v2472 = vand.u32 2147483647, %v683
    %v2473 = vand.u32 %v2472, 8388607
    %v2474 = vor.u32 %v2473, 8388608
    %v2475 = vsub.s32 0, %v2474
    %v2476 = vadd.s32 %v2471, 1
    %vm2477 = vcmp.gt.s32.totalorder %v2476, 0
    %v2478 = vsel %vm2477, %v2476, 0
    %v2479 = vshrl.u32 %v2478, 5
    %v2480 = vand.u32 %v2478, 31
    %v2481 = vsub.s32 32, %v2480
    %v2482 = vshrl.u32 683565275, %v2481
    %v2483 = vshll.u32 683565275, %v2480
    %v2484 = vshrl.u32 2475754826, %v2481
    %v2485 = vor.u32 %v2483, %v2484
    %v2486 = vshll.u32 2475754826, %v2480
    %v2487 = vshrl.u32 2131351028, %v2481
    %v2488 = vor.u32 %v2486, %v2487
    %v2489 = vshll.u32 2131351028, %v2480
    %v2490 = vshrl.u32 2102212464, %v2481
    %v2491 = vor.u32 %v2489, %v2490
    %v2492 = vshll.u32 2102212464, %v2480
    %v2493 = vshrl.u32 920167782, %v2481
    %v2494 = vor.u32 %v2492, %v2493
    %v2495 = vshll.u32 920167782, %v2480
    %v2496 = vshrl.u32 1326507024, %v2481
    %v2497 = vor.u32 %v2495, %v2496
    %vm2498 = vcmp.lt.s32.totalorder %v2479, 1
    %vm2499 = vcmp.lt.s32.totalorder %v2479, 2
    %vm2500 = vcmp.lt.s32.totalorder %v2479, 3
    %vm2501 = vcmp.lt.s32.totalorder %v2479, 4
    %v2502 = vsel %vm2498, %v2482, %v2485
    %v2503 = vsel %vm2501, %v2491, 2102212464
    %v2504 = vsel %vm2500, %v2488, %v2503
    %v2505 = vsel %vm2499, %v2502, %v2504
    %v2506 = vsel %vm2498, %v2485, %v2488
    %v2507 = vsel %vm2501, %v2494, 920167782
    %v2508 = vsel %vm2500, %v2491, %v2507
    %v2509 = vsel %vm2499, %v2506, %v2508
    %v2510 = vsel %vm2498, %v2488, %v2491
    %v2511 = vsel %vm2501, %v2497, 1326507024
    %v2512 = vsel %vm2500, %v2494, %v2511
    %v2513 = vsel %vm2499, %v2510, %v2512
    %v2514 = vshll.u32 %v2474, 8
    %v2515 = vmul.u32.u64.compose %v2514, %v2513
    %v2516 = vextract.low.u32 %v2515
    %v2517 = vextract.high.u32 %v2515
    %v2518 = vmul.u32.u64.compose %v2514, %v2509
    %v2519 = vextract.low.u32 %v2518
    %v2520 = vextract.high.u32 %v2518
    %v2521 = vmul.u32 %v2514, %v2505
    %v2522 = vadd.s32 %v2517, %v2519
    %vm2523 = vc.u32 %v2517, %v2519
    %v2524 = vadd.s32 %v2520, 1
    %v2525 = vsel %vm2523, %v2524, %v2520
    %v2526 = vadd.s32 %v2521, %v2525
    %v2527 = vadd.s32 %v2526, 536870912
    %v2528 = vshrl.u32 %v2527, 30
    %v2529 = vshll.u32 %v2528, 30
    %v2530 = vsub.s32 %v2526, %v2529
    %vm2531 = vcmp.lt.s32.totalorder %v2530, 0
    %v2532 = vsub.s32 0, %v2530
    %v2533 = vsel %vm2531, %v2532, %v2530
    %v2534 = vclz %v2533
    %v2535 = vsub.s32 %v2534, 2
    %vm2536 = vcmp.gt.s32.totalorder 0, %v2535
    %v2537 = vsel %vm2536, 0, %v2535
    %v2538 = vsub.s32 32, %v2537
    %v2539 = vshll.u32 %v2530, %v2537
    %v2540 = vshrl.u32 %v2522, %v2538
    %v2541 = vor.u32 %v2539, %v2540
    %v2542 = vsub.s32 4294967266, %v2537
    %v2543 = vadd.s32 %v2542, 127
    %v2544 = vshll.u32 %v2543, 23
    %v2545 = vor.u32 4788187, %v2544
    %v2546 = vand.u32 2147483647, %v2545
    %v2548 = vcvt.s32.f32 %v2541
    %v2549 = vmul.f32 %v2548, %v2546
    %v2550 = vxor.u32 %v2549, 2147483648
    %v2551 = vsel %vm2468, %v2550, %v2549
    %v2552 = vsub.s32 4, %v2528
    %v2553 = vsel %vm2468, %v2552, %v2528
    %v2554 = vsel %vm2467, %v683, %v2551
    %v2555 = vsel %vm2467, 0, %v2553
    %v2556 = vcosq.f32.pop %v2554
    %v2557 = vsinq.f32.pop %v2554
    %vm2558 = vweird.f32 %v683
    %v2559 = vadd.s32 %v2555, 3
    %v2560 = vand.u32 %v2559, 3
    %vm2561 = vcmp.lt.s32.totalorder %v2560, 2
    %vm2562 = vcmp.eq.s32.totalorder %v2560, 0
    %v2563 = vxor.u32 %v2557, 2147483648
    %v2564 = vsel %vm2562, %v2556, %v2563
    %vm2565 = vcmp.eq.s32.totalorder %v2560, 2
    %v2566 = vxor.u32 %v2556, 2147483648
    %v2567 = vsel %vm2565, %v2566, %v2557
    %v2568 = vsel %vm2561, %v2564, %v2567
    %v2569 = vsel %vm2558, nan, %v2568
    %v2570 = vand.u32 2147483647, %v684
    %vm2571 = vcmp.le.f32.partialorder %v2570, 0.7853982
    %vm2572 = vcmp.lt.s32.totalorder %v684, 0
    %v2573 = vand.u32 %v684, 2139095040
    %v2574 = vshrl.u32 %v2573, 23
    %v2575 = vsub.s32 %v2574, 127
    %v2576 = vand.u32 2147483647, %v684
    %v2577 = vand.u32 %v2576, 8388607
    %v2578 = vor.u32 %v2577, 8388608
    %v2579 = vsub.s32 0, %v2578
    %v2580 = vadd.s32 %v2575, 1
    %vm2581 = vcmp.gt.s32.totalorder %v2580, 0
    %v2582 = vsel %vm2581, %v2580, 0
    %v2583 = vshrl.u32 %v2582, 5
    %v2584 = vand.u32 %v2582, 31
    %v2585 = vsub.s32 32, %v2584
    %v2586 = vshrl.u32 683565275, %v2585
    %v2587 = vshll.u32 683565275, %v2584
    %v2588 = vshrl.u32 2475754826, %v2585
    %v2589 = vor.u32 %v2587, %v2588
    %v2590 = vshll.u32 2475754826, %v2584
    %v2591 = vshrl.u32 2131351028, %v2585
    %v2592 = vor.u32 %v2590, %v2591
    %v2593 = vshll.u32 2131351028, %v2584
    %v2594 = vshrl.u32 2102212464, %v2585
    %v2595 = vor.u32 %v2593, %v2594
    %v2596 = vshll.u32 2102212464, %v2584
    %v2597 = vshrl.u32 920167782, %v2585
    %v2598 = vor.u32 %v2596, %v2597
    %v2599 = vshll.u32 920167782, %v2584
    %v2600 = vshrl.u32 1326507024, %v2585
    %v2601 = vor.u32 %v2599, %v2600
    %vm2602 = vcmp.lt.s32.totalorder %v2583, 1
    %vm2603 = vcmp.lt.s32.totalorder %v2583, 2
    %vm2604 = vcmp.lt.s32.totalorder %v2583, 3
    %vm2605 = vcmp.lt.s32.totalorder %v2583, 4
    %v2606 = vsel %vm2602, %v2586, %v2589
    %v2607 = vsel %vm2605, %v2595, 2102212464
    %v2608 = vsel %vm2604, %v2592, %v2607
    %v2609 = vsel %vm2603, %v2606, %v2608
    %v2610 = vsel %vm2602, %v2589, %v2592
    %v2611 = vsel %vm2605, %v2598, 920167782
    %v2612 = vsel %vm2604, %v2595, %v2611
    %v2613 = vsel %vm2603, %v2610, %v2612
    %v2614 = vsel %vm2602, %v2592, %v2595
    %v2615 = vsel %vm2605, %v2601, 1326507024
    %v2616 = vsel %vm2604, %v2598, %v2615
    %v2617 = vsel %vm2603, %v2614, %v2616
    %v2618 = vshll.u32 %v2578, 8
    %v2619 = vmul.u32.u64.compose %v2618, %v2617
    %v2620 = vextract.low.u32 %v2619
    %v2621 = vextract.high.u32 %v2619
    %v2622 = vmul.u32.u64.compose %v2618, %v2613
    %v2623 = vextract.low.u32 %v2622
    %v2624 = vextract.high.u32 %v2622
    %v2625 = vmul.u32 %v2618, %v2609
    %v2626 = vadd.s32 %v2621, %v2623
    %vm2627 = vc.u32 %v2621, %v2623
    %v2628 = vadd.s32 %v2624, 1
    %v2629 = vsel %vm2627, %v2628, %v2624
    %v2630 = vadd.s32 %v2625, %v2629
    %v2631 = vadd.s32 %v2630, 536870912
    %v2632 = vshrl.u32 %v2631, 30
    %v2633 = vshll.u32 %v2632, 30
    %v2634 = vsub.s32 %v2630, %v2633
    %vm2635 = vcmp.lt.s32.totalorder %v2634, 0
    %v2636 = vsub.s32 0, %v2634
    %v2637 = vsel %vm2635, %v2636, %v2634
    %v2638 = vclz %v2637
    %v2639 = vsub.s32 %v2638, 2
    %vm2640 = vcmp.gt.s32.totalorder 0, %v2639
    %v2641 = vsel %vm2640, 0, %v2639
    %v2642 = vsub.s32 32, %v2641
    %v2643 = vshll.u32 %v2634, %v2641
    %v2644 = vshrl.u32 %v2626, %v2642
    %v2645 = vor.u32 %v2643, %v2644
    %v2646 = vsub.s32 4294967266, %v2641
    %v2647 = vadd.s32 %v2646, 127
    %v2648 = vshll.u32 %v2647, 23
    %v2649 = vor.u32 4788187, %v2648
    %v2650 = vand.u32 2147483647, %v2649
    %v2652 = vcvt.s32.f32 %v2645
    %v2653 = vmul.f32 %v2652, %v2650
    %v2654 = vxor.u32 %v2653, 2147483648
    %v2655 = vsel %vm2572, %v2654, %v2653
    %v2656 = vsub.s32 4, %v2632
    %v2657 = vsel %vm2572, %v2656, %v2632
    %v2658 = vsel %vm2571, %v684, %v2655
    %v2659 = vsel %vm2571, 0, %v2657
    %v2660 = vcosq.f32.pop %v2658
    %v2661 = vsinq.f32.pop %v2658
    %vm2662 = vweird.f32 %v684
    %v2663 = vadd.s32 %v2659, 3
    %v2664 = vand.u32 %v2663, 3
    %vm2665 = vcmp.lt.s32.totalorder %v2664, 2
    %vm2666 = vcmp.eq.s32.totalorder %v2664, 0
    %v2667 = vxor.u32 %v2661, 2147483648
    %v2668 = vsel %vm2666, %v2660, %v2667
    %vm2669 = vcmp.eq.s32.totalorder %v2664, 2
    %v2670 = vxor.u32 %v2660, 2147483648
    %v2671 = vsel %vm2669, %v2670, %v2661
    %v2672 = vsel %vm2665, %v2668, %v2671
    %v2673 = vsel %vm2662, nan, %v2672
    %v2674 = vand.u32 2147483647, %v685
    %vm2675 = vcmp.le.f32.partialorder %v2674, 0.7853982
    %vm2676 = vcmp.lt.s32.totalorder %v685, 0
    %v2677 = vand.u32 %v685, 2139095040
    %v2678 = vshrl.u32 %v2677, 23
    %v2679 = vsub.s32 %v2678, 127
    %v2680 = vand.u32 2147483647, %v685
    %v2681 = vand.u32 %v2680, 8388607
    %v2682 = vor.u32 %v2681, 8388608
    %v2683 = vsub.s32 0, %v2682
    %v2684 = vadd.s32 %v2679, 1
    %vm2685 = vcmp.gt.s32.totalorder %v2684, 0
    %v2686 = vsel %vm2685, %v2684, 0
    %v2687 = vshrl.u32 %v2686, 5
    %v2688 = vand.u32 %v2686, 31
    %v2689 = vsub.s32 32, %v2688
    %v2690 = vshrl.u32 683565275, %v2689
    %v2691 = vshll.u32 683565275, %v2688
    %v2692 = vshrl.u32 2475754826, %v2689
    %v2693 = vor.u32 %v2691, %v2692
    %v2694 = vshll.u32 2475754826, %v2688
    %v2695 = vshrl.u32 2131351028, %v2689
    %v2696 = vor.u32 %v2694, %v2695
    %v2697 = vshll.u32 2131351028, %v2688
    %v2698 = vshrl.u32 2102212464, %v2689
    %v2699 = vor.u32 %v2697, %v2698
    %v2700 = vshll.u32 2102212464, %v2688
    %v2701 = vshrl.u32 920167782, %v2689
    %v2702 = vor.u32 %v2700, %v2701
    %v2703 = vshll.u32 920167782, %v2688
    %v2704 = vshrl.u32 1326507024, %v2689
    %v2705 = vor.u32 %v2703, %v2704
    %vm2706 = vcmp.lt.s32.totalorder %v2687, 1
    %vm2707 = vcmp.lt.s32.totalorder %v2687, 2
    %vm2708 = vcmp.lt.s32.totalorder %v2687, 3
    %vm2709 = vcmp.lt.s32.totalorder %v2687, 4
    %v2710 = vsel %vm2706, %v2690, %v2693
    %v2711 = vsel %vm2709, %v2699, 2102212464
    %v2712 = vsel %vm2708, %v2696, %v2711
    %v2713 = vsel %vm2707, %v2710, %v2712
    %v2714 = vsel %vm2706, %v2693, %v2696
    %v2715 = vsel %vm2709, %v2702, 920167782
    %v2716 = vsel %vm2708, %v2699, %v2715
    %v2717 = vsel %vm2707, %v2714, %v2716
    %v2718 = vsel %vm2706, %v2696, %v2699
    %v2719 = vsel %vm2709, %v2705, 1326507024
    %v2720 = vsel %vm2708, %v2702, %v2719
    %v2721 = vsel %vm2707, %v2718, %v2720
    %v2722 = vshll.u32 %v2682, 8
    %v2723 = vmul.u32.u64.compose %v2722, %v2721
    %v2724 = vextract.low.u32 %v2723
    %v2725 = vextract.high.u32 %v2723
    %v2726 = vmul.u32.u64.compose %v2722, %v2717
    %v2727 = vextract.low.u32 %v2726
    %v2728 = vextract.high.u32 %v2726
    %v2729 = vmul.u32 %v2722, %v2713
    %v2730 = vadd.s32 %v2725, %v2727
    %vm2731 = vc.u32 %v2725, %v2727
    %v2732 = vadd.s32 %v2728, 1
    %v2733 = vsel %vm2731, %v2732, %v2728
    %v2734 = vadd.s32 %v2729, %v2733
    %v2735 = vadd.s32 %v2734, 536870912
    %v2736 = vshrl.u32 %v2735, 30
    %v2737 = vshll.u32 %v2736, 30
    %v2738 = vsub.s32 %v2734, %v2737
    %vm2739 = vcmp.lt.s32.totalorder %v2738, 0
    %v2740 = vsub.s32 0, %v2738
    %v2741 = vsel %vm2739, %v2740, %v2738
    %v2742 = vclz %v2741
    %v2743 = vsub.s32 %v2742, 2
    %vm2744 = vcmp.gt.s32.totalorder 0, %v2743
    %v2745 = vsel %vm2744, 0, %v2743
    %v2746 = vsub.s32 32, %v2745
    %v2747 = vshll.u32 %v2738, %v2745
    %v2748 = vshrl.u32 %v2730, %v2746
    %v2749 = vor.u32 %v2747, %v2748
    %v2750 = vsub.s32 4294967266, %v2745
    %v2751 = vadd.s32 %v2750, 127
    %v2752 = vshll.u32 %v2751, 23
    %v2753 = vor.u32 4788187, %v2752
    %v2754 = vand.u32 2147483647, %v2753
    %v2756 = vcvt.s32.f32 %v2749
    %v2757 = vmul.f32 %v2756, %v2754
    %v2758 = vxor.u32 %v2757, 2147483648
    %v2759 = vsel %vm2676, %v2758, %v2757
    %v2760 = vsub.s32 4, %v2736
    %v2761 = vsel %vm2676, %v2760, %v2736
    %v2762 = vsel %vm2675, %v685, %v2759
    %v2763 = vsel %vm2675, 0, %v2761
    %v2764 = vcosq.f32.pop %v2762
    %v2765 = vsinq.f32.pop %v2762
    %vm2766 = vweird.f32 %v685
    %v2767 = vadd.s32 %v2763, 3
    %v2768 = vand.u32 %v2767, 3
    %vm2769 = vcmp.lt.s32.totalorder %v2768, 2
    %vm2770 = vcmp.eq.s32.totalorder %v2768, 0
    %v2771 = vxor.u32 %v2765, 2147483648
    %v2772 = vsel %vm2770, %v2764, %v2771
    %vm2773 = vcmp.eq.s32.totalorder %v2768, 2
    %v2774 = vxor.u32 %v2764, 2147483648
    %v2775 = vsel %vm2773, %v2774, %v2765
    %v2776 = vsel %vm2769, %v2772, %v2775
    %v2777 = vsel %vm2766, nan, %v2776
    %v2778 = vand.u32 2147483647, %v686
    %vm2779 = vcmp.le.f32.partialorder %v2778, 0.7853982
    %vm2780 = vcmp.lt.s32.totalorder %v686, 0
    %v2781 = vand.u32 %v686, 2139095040
    %v2782 = vshrl.u32 %v2781, 23
    %v2783 = vsub.s32 %v2782, 127
    %v2784 = vand.u32 2147483647, %v686
    %v2785 = vand.u32 %v2784, 8388607
    %v2786 = vor.u32 %v2785, 8388608
    %v2787 = vsub.s32 0, %v2786
    %v2788 = vadd.s32 %v2783, 1
    %vm2789 = vcmp.gt.s32.totalorder %v2788, 0
    %v2790 = vsel %vm2789, %v2788, 0
    %v2791 = vshrl.u32 %v2790, 5
    %v2792 = vand.u32 %v2790, 31
    %v2793 = vsub.s32 32, %v2792
    %v2794 = vshrl.u32 683565275, %v2793
    %v2795 = vshll.u32 683565275, %v2792
    %v2796 = vshrl.u32 2475754826, %v2793
    %v2797 = vor.u32 %v2795, %v2796
    %v2798 = vshll.u32 2475754826, %v2792
    %v2799 = vshrl.u32 2131351028, %v2793
    %v2800 = vor.u32 %v2798, %v2799
    %v2801 = vshll.u32 2131351028, %v2792
    %v2802 = vshrl.u32 2102212464, %v2793
    %v2803 = vor.u32 %v2801, %v2802
    %v2804 = vshll.u32 2102212464, %v2792
    %v2805 = vshrl.u32 920167782, %v2793
    %v2806 = vor.u32 %v2804, %v2805
    %v2807 = vshll.u32 920167782, %v2792
    %v2808 = vshrl.u32 1326507024, %v2793
    %v2809 = vor.u32 %v2807, %v2808
    %vm2810 = vcmp.lt.s32.totalorder %v2791, 1
    %vm2811 = vcmp.lt.s32.totalorder %v2791, 2
    %vm2812 = vcmp.lt.s32.totalorder %v2791, 3
    %vm2813 = vcmp.lt.s32.totalorder %v2791, 4
    %v2814 = vsel %vm2810, %v2794, %v2797
    %v2815 = vsel %vm2813, %v2803, 2102212464
    %v2816 = vsel %vm2812, %v2800, %v2815
    %v2817 = vsel %vm2811, %v2814, %v2816
    %v2818 = vsel %vm2810, %v2797, %v2800
    %v2819 = vsel %vm2813, %v2806, 920167782
    %v2820 = vsel %vm2812, %v2803, %v2819
    %v2821 = vsel %vm2811, %v2818, %v2820
    %v2822 = vsel %vm2810, %v2800, %v2803
    %v2823 = vsel %vm2813, %v2809, 1326507024
    %v2824 = vsel %vm2812, %v2806, %v2823
    %v2825 = vsel %vm2811, %v2822, %v2824
    %v2826 = vshll.u32 %v2786, 8
    %v2827 = vmul.u32.u64.compose %v2826, %v2825
    %v2828 = vextract.low.u32 %v2827
    %v2829 = vextract.high.u32 %v2827
    %v2830 = vmul.u32.u64.compose %v2826, %v2821
    %v2831 = vextract.low.u32 %v2830
    %v2832 = vextract.high.u32 %v2830
    %v2833 = vmul.u32 %v2826, %v2817
    %v2834 = vadd.s32 %v2829, %v2831
    %vm2835 = vc.u32 %v2829, %v2831
    %v2836 = vadd.s32 %v2832, 1
    %v2837 = vsel %vm2835, %v2836, %v2832
    %v2838 = vadd.s32 %v2833, %v2837
    %v2839 = vadd.s32 %v2838, 536870912
    %v2840 = vshrl.u32 %v2839, 30
    %v2841 = vshll.u32 %v2840, 30
    %v2842 = vsub.s32 %v2838, %v2841
    %vm2843 = vcmp.lt.s32.totalorder %v2842, 0
    %v2844 = vsub.s32 0, %v2842
    %v2845 = vsel %vm2843, %v2844, %v2842
    %v2846 = vclz %v2845
    %v2847 = vsub.s32 %v2846, 2
    %vm2848 = vcmp.gt.s32.totalorder 0, %v2847
    %v2849 = vsel %vm2848, 0, %v2847
    %v2850 = vsub.s32 32, %v2849
    %v2851 = vshll.u32 %v2842, %v2849
    %v2852 = vshrl.u32 %v2834, %v2850
    %v2853 = vor.u32 %v2851, %v2852
    %v2854 = vsub.s32 4294967266, %v2849
    %v2855 = vadd.s32 %v2854, 127
    %v2856 = vshll.u32 %v2855, 23
    %v2857 = vor.u32 4788187, %v2856
    %v2858 = vand.u32 2147483647, %v2857
    %v2860 = vcvt.s32.f32 %v2853
    %v2861 = vmul.f32 %v2860, %v2858
    %v2862 = vxor.u32 %v2861, 2147483648
    %v2863 = vsel %vm2780, %v2862, %v2861
    %v2864 = vsub.s32 4, %v2840
    %v2865 = vsel %vm2780, %v2864, %v2840
    %v2866 = vsel %vm2779, %v686, %v2863
    %v2867 = vsel %vm2779, 0, %v2865
    %v2868 = vcosq.f32.pop %v2866
    %v2869 = vsinq.f32.pop %v2866
    %vm2870 = vweird.f32 %v686
    %v2871 = vadd.s32 %v2867, 3
    %v2872 = vand.u32 %v2871, 3
    %vm2873 = vcmp.lt.s32.totalorder %v2872, 2
    %vm2874 = vcmp.eq.s32.totalorder %v2872, 0
    %v2875 = vxor.u32 %v2869, 2147483648
    %v2876 = vsel %vm2874, %v2868, %v2875
    %vm2877 = vcmp.eq.s32.totalorder %v2872, 2
    %v2878 = vxor.u32 %v2868, 2147483648
    %v2879 = vsel %vm2877, %v2878, %v2869
    %v2880 = vsel %vm2873, %v2876, %v2879
    %v2881 = vsel %vm2870, nan, %v2880
    %v2882 = vand.u32 2147483647, %v687
    %vm2883 = vcmp.le.f32.partialorder %v2882, 0.7853982
    %vm2884 = vcmp.lt.s32.totalorder %v687, 0
    %v2885 = vand.u32 %v687, 2139095040
    %v2886 = vshrl.u32 %v2885, 23
    %v2887 = vsub.s32 %v2886, 127
    %v2888 = vand.u32 2147483647, %v687
    %v2889 = vand.u32 %v2888, 8388607
    %v2890 = vor.u32 %v2889, 8388608
    %v2891 = vsub.s32 0, %v2890
    %v2892 = vadd.s32 %v2887, 1
    %vm2893 = vcmp.gt.s32.totalorder %v2892, 0
    %v2894 = vsel %vm2893, %v2892, 0
    %v2895 = vshrl.u32 %v2894, 5
    %v2896 = vand.u32 %v2894, 31
    %v2897 = vsub.s32 32, %v2896
    %v2898 = vshrl.u32 683565275, %v2897
    %v2899 = vshll.u32 683565275, %v2896
    %v2900 = vshrl.u32 2475754826, %v2897
    %v2901 = vor.u32 %v2899, %v2900
    %v2902 = vshll.u32 2475754826, %v2896
    %v2903 = vshrl.u32 2131351028, %v2897
    %v2904 = vor.u32 %v2902, %v2903
    %v2905 = vshll.u32 2131351028, %v2896
    %v2906 = vshrl.u32 2102212464, %v2897
    %v2907 = vor.u32 %v2905, %v2906
    %v2908 = vshll.u32 2102212464, %v2896
    %v2909 = vshrl.u32 920167782, %v2897
    %v2910 = vor.u32 %v2908, %v2909
    %v2911 = vshll.u32 920167782, %v2896
    %v2912 = vshrl.u32 1326507024, %v2897
    %v2913 = vor.u32 %v2911, %v2912
    %vm2914 = vcmp.lt.s32.totalorder %v2895, 1
    %vm2915 = vcmp.lt.s32.totalorder %v2895, 2
    %vm2916 = vcmp.lt.s32.totalorder %v2895, 3
    %vm2917 = vcmp.lt.s32.totalorder %v2895, 4
    %v2918 = vsel %vm2914, %v2898, %v2901
    %v2919 = vsel %vm2917, %v2907, 2102212464
    %v2920 = vsel %vm2916, %v2904, %v2919
    %v2921 = vsel %vm2915, %v2918, %v2920
    %v2922 = vsel %vm2914, %v2901, %v2904
    %v2923 = vsel %vm2917, %v2910, 920167782
    %v2924 = vsel %vm2916, %v2907, %v2923
    %v2925 = vsel %vm2915, %v2922, %v2924
    %v2926 = vsel %vm2914, %v2904, %v2907
    %v2927 = vsel %vm2917, %v2913, 1326507024
    %v2928 = vsel %vm2916, %v2910, %v2927
    %v2929 = vsel %vm2915, %v2926, %v2928
    %v2930 = vshll.u32 %v2890, 8
    %v2931 = vmul.u32.u64.compose %v2930, %v2929
    %v2932 = vextract.low.u32 %v2931
    %v2933 = vextract.high.u32 %v2931
    %v2934 = vmul.u32.u64.compose %v2930, %v2925
    %v2935 = vextract.low.u32 %v2934
    %v2936 = vextract.high.u32 %v2934
    %v2937 = vmul.u32 %v2930, %v2921
    %v2938 = vadd.s32 %v2933, %v2935
    %vm2939 = vc.u32 %v2933, %v2935
    %v2940 = vadd.s32 %v2936, 1
    %v2941 = vsel %vm2939, %v2940, %v2936
    %v2942 = vadd.s32 %v2937, %v2941
    %v2943 = vadd.s32 %v2942, 536870912
    %v2944 = vshrl.u32 %v2943, 30
    %v2945 = vshll.u32 %v2944, 30
    %v2946 = vsub.s32 %v2942, %v2945
    %vm2947 = vcmp.lt.s32.totalorder %v2946, 0
    %v2948 = vsub.s32 0, %v2946
    %v2949 = vsel %vm2947, %v2948, %v2946
    %v2950 = vclz %v2949
    %v2951 = vsub.s32 %v2950, 2
    %vm2952 = vcmp.gt.s32.totalorder 0, %v2951
    %v2953 = vsel %vm2952, 0, %v2951
    %v2954 = vsub.s32 32, %v2953
    %v2955 = vshll.u32 %v2946, %v2953
    %v2956 = vshrl.u32 %v2938, %v2954
    %v2957 = vor.u32 %v2955, %v2956
    %v2958 = vsub.s32 4294967266, %v2953
    %v2959 = vadd.s32 %v2958, 127
    %v2960 = vshll.u32 %v2959, 23
    %v2961 = vor.u32 4788187, %v2960
    %v2962 = vand.u32 2147483647, %v2961
    %v2964 = vcvt.s32.f32 %v2957
    %v2965 = vmul.f32 %v2964, %v2962
    %v2966 = vxor.u32 %v2965, 2147483648
    %v2967 = vsel %vm2884, %v2966, %v2965
    %v2968 = vsub.s32 4, %v2944
    %v2969 = vsel %vm2884, %v2968, %v2944
    %v2970 = vsel %vm2883, %v687, %v2967
    %v2971 = vsel %vm2883, 0, %v2969
    %v2972 = vcosq.f32.pop %v2970
    %v2973 = vsinq.f32.pop %v2970
    %vm2974 = vweird.f32 %v687
    %v2975 = vadd.s32 %v2971, 3
    %v2976 = vand.u32 %v2975, 3
    %vm2977 = vcmp.lt.s32.totalorder %v2976, 2
    %vm2978 = vcmp.eq.s32.totalorder %v2976, 0
    %v2979 = vxor.u32 %v2973, 2147483648
    %v2980 = vsel %vm2978, %v2972, %v2979
    %vm2981 = vcmp.eq.s32.totalorder %v2976, 2
    %v2982 = vxor.u32 %v2972, 2147483648
    %v2983 = vsel %vm2981, %v2982, %v2973
    %v2984 = vsel %vm2977, %v2980, %v2983
    %v2985 = vsel %vm2974, nan, %v2984
    %v2986 = vand.u32 2147483647, %v688
    %vm2987 = vcmp.le.f32.partialorder %v2986, 0.7853982
    %vm2988 = vcmp.lt.s32.totalorder %v688, 0
    %v2989 = vand.u32 %v688, 2139095040
    %v2990 = vshrl.u32 %v2989, 23
    %v2991 = vsub.s32 %v2990, 127
    %v2992 = vand.u32 2147483647, %v688
    %v2993 = vand.u32 %v2992, 8388607
    %v2994 = vor.u32 %v2993, 8388608
    %v2995 = vsub.s32 0, %v2994
    %v2996 = vadd.s32 %v2991, 1
    %vm2997 = vcmp.gt.s32.totalorder %v2996, 0
    %v2998 = vsel %vm2997, %v2996, 0
    %v2999 = vshrl.u32 %v2998, 5
    %v3000 = vand.u32 %v2998, 31
    %v3001 = vsub.s32 32, %v3000
    %v3002 = vshrl.u32 683565275, %v3001
    %v3003 = vshll.u32 683565275, %v3000
    %v3004 = vshrl.u32 2475754826, %v3001
    %v3005 = vor.u32 %v3003, %v3004
    %v3006 = vshll.u32 2475754826, %v3000
    %v3007 = vshrl.u32 2131351028, %v3001
    %v3008 = vor.u32 %v3006, %v3007
    %v3009 = vshll.u32 2131351028, %v3000
    %v3010 = vshrl.u32 2102212464, %v3001
    %v3011 = vor.u32 %v3009, %v3010
    %v3012 = vshll.u32 2102212464, %v3000
    %v3013 = vshrl.u32 920167782, %v3001
    %v3014 = vor.u32 %v3012, %v3013
    %v3015 = vshll.u32 920167782, %v3000
    %v3016 = vshrl.u32 1326507024, %v3001
    %v3017 = vor.u32 %v3015, %v3016
    %vm3018 = vcmp.lt.s32.totalorder %v2999, 1
    %vm3019 = vcmp.lt.s32.totalorder %v2999, 2
    %vm3020 = vcmp.lt.s32.totalorder %v2999, 3
    %vm3021 = vcmp.lt.s32.totalorder %v2999, 4
    %v3022 = vsel %vm3018, %v3002, %v3005
    %v3023 = vsel %vm3021, %v3011, 2102212464
    %v3024 = vsel %vm3020, %v3008, %v3023
    %v3025 = vsel %vm3019, %v3022, %v3024
    %v3026 = vsel %vm3018, %v3005, %v3008
    %v3027 = vsel %vm3021, %v3014, 920167782
    %v3028 = vsel %vm3020, %v3011, %v3027
    %v3029 = vsel %vm3019, %v3026, %v3028
    %v3030 = vsel %vm3018, %v3008, %v3011
    %v3031 = vsel %vm3021, %v3017, 1326507024
    %v3032 = vsel %vm3020, %v3014, %v3031
    %v3033 = vsel %vm3019, %v3030, %v3032
    %v3034 = vshll.u32 %v2994, 8
    %v3035 = vmul.u32.u64.compose %v3034, %v3033
    %v3036 = vextract.low.u32 %v3035
    %v3037 = vextract.high.u32 %v3035
    %v3038 = vmul.u32.u64.compose %v3034, %v3029
    %v3039 = vextract.low.u32 %v3038
    %v3040 = vextract.high.u32 %v3038
    %v3041 = vmul.u32 %v3034, %v3025
    %v3042 = vadd.s32 %v3037, %v3039
    %vm3043 = vc.u32 %v3037, %v3039
    %v3044 = vadd.s32 %v3040, 1
    %v3045 = vsel %vm3043, %v3044, %v3040
    %v3046 = vadd.s32 %v3041, %v3045
    %v3047 = vadd.s32 %v3046, 536870912
    %v3048 = vshrl.u32 %v3047, 30
    %v3049 = vshll.u32 %v3048, 30
    %v3050 = vsub.s32 %v3046, %v3049
    %vm3051 = vcmp.lt.s32.totalorder %v3050, 0
    %v3052 = vsub.s32 0, %v3050
    %v3053 = vsel %vm3051, %v3052, %v3050
    %v3054 = vclz %v3053
    %v3055 = vsub.s32 %v3054, 2
    %vm3056 = vcmp.gt.s32.totalorder 0, %v3055
    %v3057 = vsel %vm3056, 0, %v3055
    %v3058 = vsub.s32 32, %v3057
    %v3059 = vshll.u32 %v3050, %v3057
    %v3060 = vshrl.u32 %v3042, %v3058
    %v3061 = vor.u32 %v3059, %v3060
    %v3062 = vsub.s32 4294967266, %v3057
    %v3063 = vadd.s32 %v3062, 127
    %v3064 = vshll.u32 %v3063, 23
    %v3065 = vor.u32 4788187, %v3064
    %v3066 = vand.u32 2147483647, %v3065
    %v3068 = vcvt.s32.f32 %v3061
    %v3069 = vmul.f32 %v3068, %v3066
    %v3070 = vxor.u32 %v3069, 2147483648
    %v3071 = vsel %vm2988, %v3070, %v3069
    %v3072 = vsub.s32 4, %v3048
    %v3073 = vsel %vm2988, %v3072, %v3048
    %v3074 = vsel %vm2987, %v688, %v3071
    %v3075 = vsel %vm2987, 0, %v3073
    %v3076 = vcosq.f32.pop %v3074
    %v3077 = vsinq.f32.pop %v3074
    %vm3078 = vweird.f32 %v688
    %v3079 = vadd.s32 %v3075, 3
    %v3080 = vand.u32 %v3079, 3
    %vm3081 = vcmp.lt.s32.totalorder %v3080, 2
    %vm3082 = vcmp.eq.s32.totalorder %v3080, 0
    %v3083 = vxor.u32 %v3077, 2147483648
    %v3084 = vsel %vm3082, %v3076, %v3083
    %vm3085 = vcmp.eq.s32.totalorder %v3080, 2
    %v3086 = vxor.u32 %v3076, 2147483648
    %v3087 = vsel %vm3085, %v3086, %v3077
    %v3088 = vsel %vm3081, %v3084, %v3087
    %v3089 = vsel %vm3078, nan, %v3088
    %v3090 = vand.u32 2147483647, %v689
    %vm3091 = vcmp.le.f32.partialorder %v3090, 0.7853982
    %vm3092 = vcmp.lt.s32.totalorder %v689, 0
    %v3093 = vand.u32 %v689, 2139095040
    %v3094 = vshrl.u32 %v3093, 23
    %v3095 = vsub.s32 %v3094, 127
    %v3096 = vand.u32 2147483647, %v689
    %v3097 = vand.u32 %v3096, 8388607
    %v3098 = vor.u32 %v3097, 8388608
    %v3099 = vsub.s32 0, %v3098
    %v3100 = vadd.s32 %v3095, 1
    %vm3101 = vcmp.gt.s32.totalorder %v3100, 0
    %v3102 = vsel %vm3101, %v3100, 0
    %v3103 = vshrl.u32 %v3102, 5
    %v3104 = vand.u32 %v3102, 31
    %v3105 = vsub.s32 32, %v3104
    %v3106 = vshrl.u32 683565275, %v3105
    %v3107 = vshll.u32 683565275, %v3104
    %v3108 = vshrl.u32 2475754826, %v3105
    %v3109 = vor.u32 %v3107, %v3108
    %v3110 = vshll.u32 2475754826, %v3104
    %v3111 = vshrl.u32 2131351028, %v3105
    %v3112 = vor.u32 %v3110, %v3111
    %v3113 = vshll.u32 2131351028, %v3104
    %v3114 = vshrl.u32 2102212464, %v3105
    %v3115 = vor.u32 %v3113, %v3114
    %v3116 = vshll.u32 2102212464, %v3104
    %v3117 = vshrl.u32 920167782, %v3105
    %v3118 = vor.u32 %v3116, %v3117
    %v3119 = vshll.u32 920167782, %v3104
    %v3120 = vshrl.u32 1326507024, %v3105
    %v3121 = vor.u32 %v3119, %v3120
    %vm3122 = vcmp.lt.s32.totalorder %v3103, 1
    %vm3123 = vcmp.lt.s32.totalorder %v3103, 2
    %vm3124 = vcmp.lt.s32.totalorder %v3103, 3
    %vm3125 = vcmp.lt.s32.totalorder %v3103, 4
    %v3126 = vsel %vm3122, %v3106, %v3109
    %v3127 = vsel %vm3125, %v3115, 2102212464
    %v3128 = vsel %vm3124, %v3112, %v3127
    %v3129 = vsel %vm3123, %v3126, %v3128
    %v3130 = vsel %vm3122, %v3109, %v3112
    %v3131 = vsel %vm3125, %v3118, 920167782
    %v3132 = vsel %vm3124, %v3115, %v3131
    %v3133 = vsel %vm3123, %v3130, %v3132
    %v3134 = vsel %vm3122, %v3112, %v3115
    %v3135 = vsel %vm3125, %v3121, 1326507024
    %v3136 = vsel %vm3124, %v3118, %v3135
    %v3137 = vsel %vm3123, %v3134, %v3136
    %v3138 = vshll.u32 %v3098, 8
    %v3139 = vmul.u32.u64.compose %v3138, %v3137
    %v3140 = vextract.low.u32 %v3139
    %v3141 = vextract.high.u32 %v3139
    %v3142 = vmul.u32.u64.compose %v3138, %v3133
    %v3143 = vextract.low.u32 %v3142
    %v3144 = vextract.high.u32 %v3142
    %v3145 = vmul.u32 %v3138, %v3129
    %v3146 = vadd.s32 %v3141, %v3143
    %vm3147 = vc.u32 %v3141, %v3143
    %v3148 = vadd.s32 %v3144, 1
    %v3149 = vsel %vm3147, %v3148, %v3144
    %v3150 = vadd.s32 %v3145, %v3149
    %v3151 = vadd.s32 %v3150, 536870912
    %v3152 = vshrl.u32 %v3151, 30
    %v3153 = vshll.u32 %v3152, 30
    %v3154 = vsub.s32 %v3150, %v3153
    %vm3155 = vcmp.lt.s32.totalorder %v3154, 0
    %v3156 = vsub.s32 0, %v3154
    %v3157 = vsel %vm3155, %v3156, %v3154
    %v3158 = vclz %v3157
    %v3159 = vsub.s32 %v3158, 2
    %vm3160 = vcmp.gt.s32.totalorder 0, %v3159
    %v3161 = vsel %vm3160, 0, %v3159
    %v3162 = vsub.s32 32, %v3161
    %v3163 = vshll.u32 %v3154, %v3161
    %v3164 = vshrl.u32 %v3146, %v3162
    %v3165 = vor.u32 %v3163, %v3164
    %v3166 = vsub.s32 4294967266, %v3161
    %v3167 = vadd.s32 %v3166, 127
    %v3168 = vshll.u32 %v3167, 23
    %v3169 = vor.u32 4788187, %v3168
    %v3170 = vand.u32 2147483647, %v3169
    %v3172 = vcvt.s32.f32 %v3165
    %v3173 = vmul.f32 %v3172, %v3170
    %v3174 = vxor.u32 %v3173, 2147483648
    %v3175 = vsel %vm3092, %v3174, %v3173
    %v3176 = vsub.s32 4, %v3152
    %v3177 = vsel %vm3092, %v3176, %v3152
    %v3178 = vsel %vm3091, %v689, %v3175
    %v3179 = vsel %vm3091, 0, %v3177
    %v3180 = vcosq.f32.pop %v3178
    %v3181 = vsinq.f32.pop %v3178
    %vm3182 = vweird.f32 %v689
    %v3183 = vadd.s32 %v3179, 3
    %v3184 = vand.u32 %v3183, 3
    %vm3185 = vcmp.lt.s32.totalorder %v3184, 2
    %vm3186 = vcmp.eq.s32.totalorder %v3184, 0
    %v3187 = vxor.u32 %v3181, 2147483648
    %v3188 = vsel %vm3186, %v3180, %v3187
    %vm3189 = vcmp.eq.s32.totalorder %v3184, 2
    %v3190 = vxor.u32 %v3180, 2147483648
    %v3191 = vsel %vm3189, %v3190, %v3181
    %v3192 = vsel %vm3185, %v3188, %v3191
    %v3193 = vsel %vm3182, nan, %v3192
    %v3194 = vand.u32 2147483647, %v690
    %vm3195 = vcmp.le.f32.partialorder %v3194, 0.7853982
    %vm3196 = vcmp.lt.s32.totalorder %v690, 0
    %v3197 = vand.u32 %v690, 2139095040
    %v3198 = vshrl.u32 %v3197, 23
    %v3199 = vsub.s32 %v3198, 127
    %v3200 = vand.u32 2147483647, %v690
    %v3201 = vand.u32 %v3200, 8388607
    %v3202 = vor.u32 %v3201, 8388608
    %v3203 = vsub.s32 0, %v3202
    %v3204 = vadd.s32 %v3199, 1
    %vm3205 = vcmp.gt.s32.totalorder %v3204, 0
    %v3206 = vsel %vm3205, %v3204, 0
    %v3207 = vshrl.u32 %v3206, 5
    %v3208 = vand.u32 %v3206, 31
    %v3209 = vsub.s32 32, %v3208
    %v3210 = vshrl.u32 683565275, %v3209
    %v3211 = vshll.u32 683565275, %v3208
    %v3212 = vshrl.u32 2475754826, %v3209
    %v3213 = vor.u32 %v3211, %v3212
    %v3214 = vshll.u32 2475754826, %v3208
    %v3215 = vshrl.u32 2131351028, %v3209
    %v3216 = vor.u32 %v3214, %v3215
    %v3217 = vshll.u32 2131351028, %v3208
    %v3218 = vshrl.u32 2102212464, %v3209
    %v3219 = vor.u32 %v3217, %v3218
    %v3220 = vshll.u32 2102212464, %v3208
    %v3221 = vshrl.u32 920167782, %v3209
    %v3222 = vor.u32 %v3220, %v3221
    %v3223 = vshll.u32 920167782, %v3208
    %v3224 = vshrl.u32 1326507024, %v3209
    %v3225 = vor.u32 %v3223, %v3224
    %vm3226 = vcmp.lt.s32.totalorder %v3207, 1
    %vm3227 = vcmp.lt.s32.totalorder %v3207, 2
    %vm3228 = vcmp.lt.s32.totalorder %v3207, 3
    %vm3229 = vcmp.lt.s32.totalorder %v3207, 4
    %v3230 = vsel %vm3226, %v3210, %v3213
    %v3231 = vsel %vm3229, %v3219, 2102212464
    %v3232 = vsel %vm3228, %v3216, %v3231
    %v3233 = vsel %vm3227, %v3230, %v3232
    %v3234 = vsel %vm3226, %v3213, %v3216
    %v3235 = vsel %vm3229, %v3222, 920167782
    %v3236 = vsel %vm3228, %v3219, %v3235
    %v3237 = vsel %vm3227, %v3234, %v3236
    %v3238 = vsel %vm3226, %v3216, %v3219
    %v3239 = vsel %vm3229, %v3225, 1326507024
    %v3240 = vsel %vm3228, %v3222, %v3239
    %v3241 = vsel %vm3227, %v3238, %v3240
    %v3242 = vshll.u32 %v3202, 8
    %v3243 = vmul.u32.u64.compose %v3242, %v3241
    %v3244 = vextract.low.u32 %v3243
    %v3245 = vextract.high.u32 %v3243
    %v3246 = vmul.u32.u64.compose %v3242, %v3237
    %v3247 = vextract.low.u32 %v3246
    %v3248 = vextract.high.u32 %v3246
    %v3249 = vmul.u32 %v3242, %v3233
    %v3250 = vadd.s32 %v3245, %v3247
    %vm3251 = vc.u32 %v3245, %v3247
    %v3252 = vadd.s32 %v3248, 1
    %v3253 = vsel %vm3251, %v3252, %v3248
    %v3254 = vadd.s32 %v3249, %v3253
    %v3255 = vadd.s32 %v3254, 536870912
    %v3256 = vshrl.u32 %v3255, 30
    %v3257 = vshll.u32 %v3256, 30
    %v3258 = vsub.s32 %v3254, %v3257
    %vm3259 = vcmp.lt.s32.totalorder %v3258, 0
    %v3260 = vsub.s32 0, %v3258
    %v3261 = vsel %vm3259, %v3260, %v3258
    %v3262 = vclz %v3261
    %v3263 = vsub.s32 %v3262, 2
    %vm3264 = vcmp.gt.s32.totalorder 0, %v3263
    %v3265 = vsel %vm3264, 0, %v3263
    %v3266 = vsub.s32 32, %v3265
    %v3267 = vshll.u32 %v3258, %v3265
    %v3268 = vshrl.u32 %v3250, %v3266
    %v3269 = vor.u32 %v3267, %v3268
    %v3270 = vsub.s32 4294967266, %v3265
    %v3271 = vadd.s32 %v3270, 127
    %v3272 = vshll.u32 %v3271, 23
    %v3273 = vor.u32 4788187, %v3272
    %v3274 = vand.u32 2147483647, %v3273
    %v3276 = vcvt.s32.f32 %v3269
    %v3277 = vmul.f32 %v3276, %v3274
    %v3278 = vxor.u32 %v3277, 2147483648
    %v3279 = vsel %vm3196, %v3278, %v3277
    %v3280 = vsub.s32 4, %v3256
    %v3281 = vsel %vm3196, %v3280, %v3256
    %v3282 = vsel %vm3195, %v690, %v3279
    %v3283 = vsel %vm3195, 0, %v3281
    %v3284 = vcosq.f32.pop %v3282
    %v3285 = vsinq.f32.pop %v3282
    %vm3286 = vweird.f32 %v690
    %v3287 = vadd.s32 %v3283, 3
    %v3288 = vand.u32 %v3287, 3
    %vm3289 = vcmp.lt.s32.totalorder %v3288, 2
    %vm3290 = vcmp.eq.s32.totalorder %v3288, 0
    %v3291 = vxor.u32 %v3285, 2147483648
    %v3292 = vsel %vm3290, %v3284, %v3291
    %vm3293 = vcmp.eq.s32.totalorder %v3288, 2
    %v3294 = vxor.u32 %v3284, 2147483648
    %v3295 = vsel %vm3293, %v3294, %v3285
    %v3296 = vsel %vm3289, %v3292, %v3295
    %v3297 = vsel %vm3286, nan, %v3296
    %v3298 = vand.u32 2147483647, %v691
    %vm3299 = vcmp.le.f32.partialorder %v3298, 0.7853982
    %vm3300 = vcmp.lt.s32.totalorder %v691, 0
    %v3301 = vand.u32 %v691, 2139095040
    %v3302 = vshrl.u32 %v3301, 23
    %v3303 = vsub.s32 %v3302, 127
    %v3304 = vand.u32 2147483647, %v691
    %v3305 = vand.u32 %v3304, 8388607
    %v3306 = vor.u32 %v3305, 8388608
    %v3307 = vsub.s32 0, %v3306
    %v3308 = vadd.s32 %v3303, 1
    %vm3309 = vcmp.gt.s32.totalorder %v3308, 0
    %v3310 = vsel %vm3309, %v3308, 0
    %v3311 = vshrl.u32 %v3310, 5
    %v3312 = vand.u32 %v3310, 31
    %v3313 = vsub.s32 32, %v3312
    %v3314 = vshrl.u32 683565275, %v3313
    %v3315 = vshll.u32 683565275, %v3312
    %v3316 = vshrl.u32 2475754826, %v3313
    %v3317 = vor.u32 %v3315, %v3316
    %v3318 = vshll.u32 2475754826, %v3312
    %v3319 = vshrl.u32 2131351028, %v3313
    %v3320 = vor.u32 %v3318, %v3319
    %v3321 = vshll.u32 2131351028, %v3312
    %v3322 = vshrl.u32 2102212464, %v3313
    %v3323 = vor.u32 %v3321, %v3322
    %v3324 = vshll.u32 2102212464, %v3312
    %v3325 = vshrl.u32 920167782, %v3313
    %v3326 = vor.u32 %v3324, %v3325
    %v3327 = vshll.u32 920167782, %v3312
    %v3328 = vshrl.u32 1326507024, %v3313
    %v3329 = vor.u32 %v3327, %v3328
    %vm3330 = vcmp.lt.s32.totalorder %v3311, 1
    %vm3331 = vcmp.lt.s32.totalorder %v3311, 2
    %vm3332 = vcmp.lt.s32.totalorder %v3311, 3
    %vm3333 = vcmp.lt.s32.totalorder %v3311, 4
    %v3334 = vsel %vm3330, %v3314, %v3317
    %v3335 = vsel %vm3333, %v3323, 2102212464
    %v3336 = vsel %vm3332, %v3320, %v3335
    %v3337 = vsel %vm3331, %v3334, %v3336
    %v3338 = vsel %vm3330, %v3317, %v3320
    %v3339 = vsel %vm3333, %v3326, 920167782
    %v3340 = vsel %vm3332, %v3323, %v3339
    %v3341 = vsel %vm3331, %v3338, %v3340
    %v3342 = vsel %vm3330, %v3320, %v3323
    %v3343 = vsel %vm3333, %v3329, 1326507024
    %v3344 = vsel %vm3332, %v3326, %v3343
    %v3345 = vsel %vm3331, %v3342, %v3344
    %v3346 = vshll.u32 %v3306, 8
    %v3347 = vmul.u32.u64.compose %v3346, %v3345
    %v3348 = vextract.low.u32 %v3347
    %v3349 = vextract.high.u32 %v3347
    %v3350 = vmul.u32.u64.compose %v3346, %v3341
    %v3351 = vextract.low.u32 %v3350
    %v3352 = vextract.high.u32 %v3350
    %v3353 = vmul.u32 %v3346, %v3337
    %v3354 = vadd.s32 %v3349, %v3351
    %vm3355 = vc.u32 %v3349, %v3351
    %v3356 = vadd.s32 %v3352, 1
    %v3357 = vsel %vm3355, %v3356, %v3352
    %v3358 = vadd.s32 %v3353, %v3357
    %v3359 = vadd.s32 %v3358, 536870912
    %v3360 = vshrl.u32 %v3359, 30
    %v3361 = vshll.u32 %v3360, 30
    %v3362 = vsub.s32 %v3358, %v3361
    %vm3363 = vcmp.lt.s32.totalorder %v3362, 0
    %v3364 = vsub.s32 0, %v3362
    %v3365 = vsel %vm3363, %v3364, %v3362
    %v3366 = vclz %v3365
    %v3367 = vsub.s32 %v3366, 2
    %vm3368 = vcmp.gt.s32.totalorder 0, %v3367
    %v3369 = vsel %vm3368, 0, %v3367
    %v3370 = vsub.s32 32, %v3369
    %v3371 = vshll.u32 %v3362, %v3369
    %v3372 = vshrl.u32 %v3354, %v3370
    %v3373 = vor.u32 %v3371, %v3372
    %v3374 = vsub.s32 4294967266, %v3369
    %v3375 = vadd.s32 %v3374, 127
    %v3376 = vshll.u32 %v3375, 23
    %v3377 = vor.u32 4788187, %v3376
    %v3378 = vand.u32 2147483647, %v3377
    %v3380 = vcvt.s32.f32 %v3373
    %v3381 = vmul.f32 %v3380, %v3378
    %v3382 = vxor.u32 %v3381, 2147483648
    %v3383 = vsel %vm3300, %v3382, %v3381
    %v3384 = vsub.s32 4, %v3360
    %v3385 = vsel %vm3300, %v3384, %v3360
    %v3386 = vsel %vm3299, %v691, %v3383
    %v3387 = vsel %vm3299, 0, %v3385
    %v3388 = vcosq.f32.pop %v3386
    %v3389 = vsinq.f32.pop %v3386
    %vm3390 = vweird.f32 %v691
    %v3391 = vadd.s32 %v3387, 3
    %v3392 = vand.u32 %v3391, 3
    %vm3393 = vcmp.lt.s32.totalorder %v3392, 2
    %vm3394 = vcmp.eq.s32.totalorder %v3392, 0
    %v3395 = vxor.u32 %v3389, 2147483648
    %v3396 = vsel %vm3394, %v3388, %v3395
    %vm3397 = vcmp.eq.s32.totalorder %v3392, 2
    %v3398 = vxor.u32 %v3388, 2147483648
    %v3399 = vsel %vm3397, %v3398, %v3389
    %v3400 = vsel %vm3393, %v3396, %v3399
    %v3401 = vsel %vm3390, nan, %v3400
    %v3402 = vand.u32 2147483647, %v692
    %vm3403 = vcmp.le.f32.partialorder %v3402, 0.7853982
    %vm3404 = vcmp.lt.s32.totalorder %v692, 0
    %v3405 = vand.u32 %v692, 2139095040
    %v3406 = vshrl.u32 %v3405, 23
    %v3407 = vsub.s32 %v3406, 127
    %v3408 = vand.u32 2147483647, %v692
    %v3409 = vand.u32 %v3408, 8388607
    %v3410 = vor.u32 %v3409, 8388608
    %v3411 = vsub.s32 0, %v3410
    %v3412 = vadd.s32 %v3407, 1
    %vm3413 = vcmp.gt.s32.totalorder %v3412, 0
    %v3414 = vsel %vm3413, %v3412, 0
    %v3415 = vshrl.u32 %v3414, 5
    %v3416 = vand.u32 %v3414, 31
    %v3417 = vsub.s32 32, %v3416
    %v3418 = vshrl.u32 683565275, %v3417
    %v3419 = vshll.u32 683565275, %v3416
    %v3420 = vshrl.u32 2475754826, %v3417
    %v3421 = vor.u32 %v3419, %v3420
    %v3422 = vshll.u32 2475754826, %v3416
    %v3423 = vshrl.u32 2131351028, %v3417
    %v3424 = vor.u32 %v3422, %v3423
    %v3425 = vshll.u32 2131351028, %v3416
    %v3426 = vshrl.u32 2102212464, %v3417
    %v3427 = vor.u32 %v3425, %v3426
    %v3428 = vshll.u32 2102212464, %v3416
    %v3429 = vshrl.u32 920167782, %v3417
    %v3430 = vor.u32 %v3428, %v3429
    %v3431 = vshll.u32 920167782, %v3416
    %v3432 = vshrl.u32 1326507024, %v3417
    %v3433 = vor.u32 %v3431, %v3432
    %vm3434 = vcmp.lt.s32.totalorder %v3415, 1
    %vm3435 = vcmp.lt.s32.totalorder %v3415, 2
    %vm3436 = vcmp.lt.s32.totalorder %v3415, 3
    %vm3437 = vcmp.lt.s32.totalorder %v3415, 4
    %v3438 = vsel %vm3434, %v3418, %v3421
    %v3439 = vsel %vm3437, %v3427, 2102212464
    %v3440 = vsel %vm3436, %v3424, %v3439
    %v3441 = vsel %vm3435, %v3438, %v3440
    %v3442 = vsel %vm3434, %v3421, %v3424
    %v3443 = vsel %vm3437, %v3430, 920167782
    %v3444 = vsel %vm3436, %v3427, %v3443
    %v3445 = vsel %vm3435, %v3442, %v3444
    %v3446 = vsel %vm3434, %v3424, %v3427
    %v3447 = vsel %vm3437, %v3433, 1326507024
    %v3448 = vsel %vm3436, %v3430, %v3447
    %v3449 = vsel %vm3435, %v3446, %v3448
    %v3450 = vshll.u32 %v3410, 8
    %v3451 = vmul.u32.u64.compose %v3450, %v3449
    %v3452 = vextract.low.u32 %v3451
    %v3453 = vextract.high.u32 %v3451
    %v3454 = vmul.u32.u64.compose %v3450, %v3445
    %v3455 = vextract.low.u32 %v3454
    %v3456 = vextract.high.u32 %v3454
    %v3457 = vmul.u32 %v3450, %v3441
    %v3458 = vadd.s32 %v3453, %v3455
    %vm3459 = vc.u32 %v3453, %v3455
    %v3460 = vadd.s32 %v3456, 1
    %v3461 = vsel %vm3459, %v3460, %v3456
    %v3462 = vadd.s32 %v3457, %v3461
    %v3463 = vadd.s32 %v3462, 536870912
    %v3464 = vshrl.u32 %v3463, 30
    %v3465 = vshll.u32 %v3464, 30
    %v3466 = vsub.s32 %v3462, %v3465
    %vm3467 = vcmp.lt.s32.totalorder %v3466, 0
    %v3468 = vsub.s32 0, %v3466
    %v3469 = vsel %vm3467, %v3468, %v3466
    %v3470 = vclz %v3469
    %v3471 = vsub.s32 %v3470, 2
    %vm3472 = vcmp.gt.s32.totalorder 0, %v3471
    %v3473 = vsel %vm3472, 0, %v3471
    %v3474 = vsub.s32 32, %v3473
    %v3475 = vshll.u32 %v3466, %v3473
    %v3476 = vshrl.u32 %v3458, %v3474
    %v3477 = vor.u32 %v3475, %v3476
    %v3478 = vsub.s32 4294967266, %v3473
    %v3479 = vadd.s32 %v3478, 127
    %v3480 = vshll.u32 %v3479, 23
    %v3481 = vor.u32 4788187, %v3480
    %v3482 = vand.u32 2147483647, %v3481
    %v3484 = vcvt.s32.f32 %v3477
    %v3485 = vmul.f32 %v3484, %v3482
    %v3486 = vxor.u32 %v3485, 2147483648
    %v3487 = vsel %vm3404, %v3486, %v3485
    %v3488 = vsub.s32 4, %v3464
    %v3489 = vsel %vm3404, %v3488, %v3464
    %v3490 = vsel %vm3403, %v692, %v3487
    %v3491 = vsel %vm3403, 0, %v3489
    %v3492 = vcosq.f32.pop %v3490
    %v3493 = vsinq.f32.pop %v3490
    %vm3494 = vweird.f32 %v692
    %v3495 = vadd.s32 %v3491, 3
    %v3496 = vand.u32 %v3495, 3
    %vm3497 = vcmp.lt.s32.totalorder %v3496, 2
    %vm3498 = vcmp.eq.s32.totalorder %v3496, 0
    %v3499 = vxor.u32 %v3493, 2147483648
    %v3500 = vsel %vm3498, %v3492, %v3499
    %vm3501 = vcmp.eq.s32.totalorder %v3496, 2
    %v3502 = vxor.u32 %v3492, 2147483648
    %v3503 = vsel %vm3501, %v3502, %v3493
    %v3504 = vsel %vm3497, %v3500, %v3503
    %v3505 = vsel %vm3494, nan, %v3504
    %v3506 = vand.u32 2147483647, %v693
    %vm3507 = vcmp.le.f32.partialorder %v3506, 0.7853982
    %vm3508 = vcmp.lt.s32.totalorder %v693, 0
    %v3509 = vand.u32 %v693, 2139095040
    %v3510 = vshrl.u32 %v3509, 23
    %v3511 = vsub.s32 %v3510, 127
    %v3512 = vand.u32 2147483647, %v693
    %v3513 = vand.u32 %v3512, 8388607
    %v3514 = vor.u32 %v3513, 8388608
    %v3515 = vsub.s32 0, %v3514
    %v3516 = vadd.s32 %v3511, 1
    %vm3517 = vcmp.gt.s32.totalorder %v3516, 0
    %v3518 = vsel %vm3517, %v3516, 0
    %v3519 = vshrl.u32 %v3518, 5
    %v3520 = vand.u32 %v3518, 31
    %v3521 = vsub.s32 32, %v3520
    %v3522 = vshrl.u32 683565275, %v3521
    %v3523 = vshll.u32 683565275, %v3520
    %v3524 = vshrl.u32 2475754826, %v3521
    %v3525 = vor.u32 %v3523, %v3524
    %v3526 = vshll.u32 2475754826, %v3520
    %v3527 = vshrl.u32 2131351028, %v3521
    %v3528 = vor.u32 %v3526, %v3527
    %v3529 = vshll.u32 2131351028, %v3520
    %v3530 = vshrl.u32 2102212464, %v3521
    %v3531 = vor.u32 %v3529, %v3530
    %v3532 = vshll.u32 2102212464, %v3520
    %v3533 = vshrl.u32 920167782, %v3521
    %v3534 = vor.u32 %v3532, %v3533
    %v3535 = vshll.u32 920167782, %v3520
    %v3536 = vshrl.u32 1326507024, %v3521
    %v3537 = vor.u32 %v3535, %v3536
    %vm3538 = vcmp.lt.s32.totalorder %v3519, 1
    %vm3539 = vcmp.lt.s32.totalorder %v3519, 2
    %vm3540 = vcmp.lt.s32.totalorder %v3519, 3
    %vm3541 = vcmp.lt.s32.totalorder %v3519, 4
    %v3542 = vsel %vm3538, %v3522, %v3525
    %v3543 = vsel %vm3541, %v3531, 2102212464
    %v3544 = vsel %vm3540, %v3528, %v3543
    %v3545 = vsel %vm3539, %v3542, %v3544
    %v3546 = vsel %vm3538, %v3525, %v3528
    %v3547 = vsel %vm3541, %v3534, 920167782
    %v3548 = vsel %vm3540, %v3531, %v3547
    %v3549 = vsel %vm3539, %v3546, %v3548
    %v3550 = vsel %vm3538, %v3528, %v3531
    %v3551 = vsel %vm3541, %v3537, 1326507024
    %v3552 = vsel %vm3540, %v3534, %v3551
    %v3553 = vsel %vm3539, %v3550, %v3552
    %v3554 = vshll.u32 %v3514, 8
    %v3555 = vmul.u32.u64.compose %v3554, %v3553
    %v3556 = vextract.low.u32 %v3555
    %v3557 = vextract.high.u32 %v3555
    %v3558 = vmul.u32.u64.compose %v3554, %v3549
    %v3559 = vextract.low.u32 %v3558
    %v3560 = vextract.high.u32 %v3558
    %v3561 = vmul.u32 %v3554, %v3545
    %v3562 = vadd.s32 %v3557, %v3559
    %vm3563 = vc.u32 %v3557, %v3559
    %v3564 = vadd.s32 %v3560, 1
    %v3565 = vsel %vm3563, %v3564, %v3560
    %v3566 = vadd.s32 %v3561, %v3565
    %v3567 = vadd.s32 %v3566, 536870912
    %v3568 = vshrl.u32 %v3567, 30
    %v3569 = vshll.u32 %v3568, 30
    %v3570 = vsub.s32 %v3566, %v3569
    %vm3571 = vcmp.lt.s32.totalorder %v3570, 0
    %v3572 = vsub.s32 0, %v3570
    %v3573 = vsel %vm3571, %v3572, %v3570
    %v3574 = vclz %v3573
    %v3575 = vsub.s32 %v3574, 2
    %vm3576 = vcmp.gt.s32.totalorder 0, %v3575
    %v3577 = vsel %vm3576, 0, %v3575
    %v3578 = vsub.s32 32, %v3577
    %v3579 = vshll.u32 %v3570, %v3577
    %v3580 = vshrl.u32 %v3562, %v3578
    %v3581 = vor.u32 %v3579, %v3580
    %v3582 = vsub.s32 4294967266, %v3577
    %v3583 = vadd.s32 %v3582, 127
    %v3584 = vshll.u32 %v3583, 23
    %v3585 = vor.u32 4788187, %v3584
    %v3586 = vand.u32 2147483647, %v3585
    %v3588 = vcvt.s32.f32 %v3581
    %v3589 = vmul.f32 %v3588, %v3586
    %v3590 = vxor.u32 %v3589, 2147483648
    %v3591 = vsel %vm3508, %v3590, %v3589
    %v3592 = vsub.s32 4, %v3568
    %v3593 = vsel %vm3508, %v3592, %v3568
    %v3594 = vsel %vm3507, %v693, %v3591
    %v3595 = vsel %vm3507, 0, %v3593
    %v3596 = vcosq.f32.pop %v3594
    %v3597 = vsinq.f32.pop %v3594
    %vm3598 = vweird.f32 %v693
    %v3599 = vadd.s32 %v3595, 3
    %v3600 = vand.u32 %v3599, 3
    %vm3601 = vcmp.lt.s32.totalorder %v3600, 2
    %vm3602 = vcmp.eq.s32.totalorder %v3600, 0
    %v3603 = vxor.u32 %v3597, 2147483648
    %v3604 = vsel %vm3602, %v3596, %v3603
    %vm3605 = vcmp.eq.s32.totalorder %v3600, 2
    %v3606 = vxor.u32 %v3596, 2147483648
    %v3607 = vsel %vm3605, %v3606, %v3597
    %v3608 = vsel %vm3601, %v3604, %v3607
    %v3609 = vsel %vm3598, nan, %v3608
    %v3610 = vand.u32 2147483647, %v694
    %vm3611 = vcmp.le.f32.partialorder %v3610, 0.7853982
    %vm3612 = vcmp.lt.s32.totalorder %v694, 0
    %v3613 = vand.u32 %v694, 2139095040
    %v3614 = vshrl.u32 %v3613, 23
    %v3615 = vsub.s32 %v3614, 127
    %v3616 = vand.u32 2147483647, %v694
    %v3617 = vand.u32 %v3616, 8388607
    %v3618 = vor.u32 %v3617, 8388608
    %v3619 = vsub.s32 0, %v3618
    %v3620 = vadd.s32 %v3615, 1
    %vm3621 = vcmp.gt.s32.totalorder %v3620, 0
    %v3622 = vsel %vm3621, %v3620, 0
    %v3623 = vshrl.u32 %v3622, 5
    %v3624 = vand.u32 %v3622, 31
    %v3625 = vsub.s32 32, %v3624
    %v3626 = vshrl.u32 683565275, %v3625
    %v3627 = vshll.u32 683565275, %v3624
    %v3628 = vshrl.u32 2475754826, %v3625
    %v3629 = vor.u32 %v3627, %v3628
    %v3630 = vshll.u32 2475754826, %v3624
    %v3631 = vshrl.u32 2131351028, %v3625
    %v3632 = vor.u32 %v3630, %v3631
    %v3633 = vshll.u32 2131351028, %v3624
    %v3634 = vshrl.u32 2102212464, %v3625
    %v3635 = vor.u32 %v3633, %v3634
    %v3636 = vshll.u32 2102212464, %v3624
    %v3637 = vshrl.u32 920167782, %v3625
    %v3638 = vor.u32 %v3636, %v3637
    %v3639 = vshll.u32 920167782, %v3624
    %v3640 = vshrl.u32 1326507024, %v3625
    %v3641 = vor.u32 %v3639, %v3640
    %vm3642 = vcmp.lt.s32.totalorder %v3623, 1
    %vm3643 = vcmp.lt.s32.totalorder %v3623, 2
    %vm3644 = vcmp.lt.s32.totalorder %v3623, 3
    %vm3645 = vcmp.lt.s32.totalorder %v3623, 4
    %v3646 = vsel %vm3642, %v3626, %v3629
    %v3647 = vsel %vm3645, %v3635, 2102212464
    %v3648 = vsel %vm3644, %v3632, %v3647
    %v3649 = vsel %vm3643, %v3646, %v3648
    %v3650 = vsel %vm3642, %v3629, %v3632
    %v3651 = vsel %vm3645, %v3638, 920167782
    %v3652 = vsel %vm3644, %v3635, %v3651
    %v3653 = vsel %vm3643, %v3650, %v3652
    %v3654 = vsel %vm3642, %v3632, %v3635
    %v3655 = vsel %vm3645, %v3641, 1326507024
    %v3656 = vsel %vm3644, %v3638, %v3655
    %v3657 = vsel %vm3643, %v3654, %v3656
    %v3658 = vshll.u32 %v3618, 8
    %v3659 = vmul.u32.u64.compose %v3658, %v3657
    %v3660 = vextract.low.u32 %v3659
    %v3661 = vextract.high.u32 %v3659
    %v3662 = vmul.u32.u64.compose %v3658, %v3653
    %v3663 = vextract.low.u32 %v3662
    %v3664 = vextract.high.u32 %v3662
    %v3665 = vmul.u32 %v3658, %v3649
    %v3666 = vadd.s32 %v3661, %v3663
    %vm3667 = vc.u32 %v3661, %v3663
    %v3668 = vadd.s32 %v3664, 1
    %v3669 = vsel %vm3667, %v3668, %v3664
    %v3670 = vadd.s32 %v3665, %v3669
    %v3671 = vadd.s32 %v3670, 536870912
    %v3672 = vshrl.u32 %v3671, 30
    %v3673 = vshll.u32 %v3672, 30
    %v3674 = vsub.s32 %v3670, %v3673
    %vm3675 = vcmp.lt.s32.totalorder %v3674, 0
    %v3676 = vsub.s32 0, %v3674
    %v3677 = vsel %vm3675, %v3676, %v3674
    %v3678 = vclz %v3677
    %v3679 = vsub.s32 %v3678, 2
    %vm3680 = vcmp.gt.s32.totalorder 0, %v3679
    %v3681 = vsel %vm3680, 0, %v3679
    %v3682 = vsub.s32 32, %v3681
    %v3683 = vshll.u32 %v3674, %v3681
    %v3684 = vshrl.u32 %v3666, %v3682
    %v3685 = vor.u32 %v3683, %v3684
    %v3686 = vsub.s32 4294967266, %v3681
    %v3687 = vadd.s32 %v3686, 127
    %v3688 = vshll.u32 %v3687, 23
    %v3689 = vor.u32 4788187, %v3688
    %v3690 = vand.u32 2147483647, %v3689
    %v3692 = vcvt.s32.f32 %v3685
    %v3693 = vmul.f32 %v3692, %v3690
    %v3694 = vxor.u32 %v3693, 2147483648
    %v3695 = vsel %vm3612, %v3694, %v3693
    %v3696 = vsub.s32 4, %v3672
    %v3697 = vsel %vm3612, %v3696, %v3672
    %v3698 = vsel %vm3611, %v694, %v3695
    %v3699 = vsel %vm3611, 0, %v3697
    %v3700 = vcosq.f32.pop %v3698
    %v3701 = vsinq.f32.pop %v3698
    %vm3702 = vweird.f32 %v694
    %v3703 = vadd.s32 %v3699, 3
    %v3704 = vand.u32 %v3703, 3
    %vm3705 = vcmp.lt.s32.totalorder %v3704, 2
    %vm3706 = vcmp.eq.s32.totalorder %v3704, 0
    %v3707 = vxor.u32 %v3701, 2147483648
    %v3708 = vsel %vm3706, %v3700, %v3707
    %vm3709 = vcmp.eq.s32.totalorder %v3704, 2
    %v3710 = vxor.u32 %v3700, 2147483648
    %v3711 = vsel %vm3709, %v3710, %v3701
    %v3712 = vsel %vm3705, %v3708, %v3711
    %v3713 = vsel %vm3702, nan, %v3712
    %v3714 = vand.u32 2147483647, %v695
    %vm3715 = vcmp.le.f32.partialorder %v3714, 0.7853982
    %vm3716 = vcmp.lt.s32.totalorder %v695, 0
    %v3717 = vand.u32 %v695, 2139095040
    %v3718 = vshrl.u32 %v3717, 23
    %v3719 = vsub.s32 %v3718, 127
    %v3720 = vand.u32 2147483647, %v695
    %v3721 = vand.u32 %v3720, 8388607
    %v3722 = vor.u32 %v3721, 8388608
    %v3723 = vsub.s32 0, %v3722
    %v3724 = vadd.s32 %v3719, 1
    %vm3725 = vcmp.gt.s32.totalorder %v3724, 0
    %v3726 = vsel %vm3725, %v3724, 0
    %v3727 = vshrl.u32 %v3726, 5
    %v3728 = vand.u32 %v3726, 31
    %v3729 = vsub.s32 32, %v3728
    %v3730 = vshrl.u32 683565275, %v3729
    %v3731 = vshll.u32 683565275, %v3728
    %v3732 = vshrl.u32 2475754826, %v3729
    %v3733 = vor.u32 %v3731, %v3732
    %v3734 = vshll.u32 2475754826, %v3728
    %v3735 = vshrl.u32 2131351028, %v3729
    %v3736 = vor.u32 %v3734, %v3735
    %v3737 = vshll.u32 2131351028, %v3728
    %v3738 = vshrl.u32 2102212464, %v3729
    %v3739 = vor.u32 %v3737, %v3738
    %v3740 = vshll.u32 2102212464, %v3728
    %v3741 = vshrl.u32 920167782, %v3729
    %v3742 = vor.u32 %v3740, %v3741
    %v3743 = vshll.u32 920167782, %v3728
    %v3744 = vshrl.u32 1326507024, %v3729
    %v3745 = vor.u32 %v3743, %v3744
    %vm3746 = vcmp.lt.s32.totalorder %v3727, 1
    %vm3747 = vcmp.lt.s32.totalorder %v3727, 2
    %vm3748 = vcmp.lt.s32.totalorder %v3727, 3
    %vm3749 = vcmp.lt.s32.totalorder %v3727, 4
    %v3750 = vsel %vm3746, %v3730, %v3733
    %v3751 = vsel %vm3749, %v3739, 2102212464
    %v3752 = vsel %vm3748, %v3736, %v3751
    %v3753 = vsel %vm3747, %v3750, %v3752
    %v3754 = vsel %vm3746, %v3733, %v3736
    %v3755 = vsel %vm3749, %v3742, 920167782
    %v3756 = vsel %vm3748, %v3739, %v3755
    %v3757 = vsel %vm3747, %v3754, %v3756
    %v3758 = vsel %vm3746, %v3736, %v3739
    %v3759 = vsel %vm3749, %v3745, 1326507024
    %v3760 = vsel %vm3748, %v3742, %v3759
    %v3761 = vsel %vm3747, %v3758, %v3760
    %v3762 = vshll.u32 %v3722, 8
    %v3763 = vmul.u32.u64.compose %v3762, %v3761
    %v3764 = vextract.low.u32 %v3763
    %v3765 = vextract.high.u32 %v3763
    %v3766 = vmul.u32.u64.compose %v3762, %v3757
    %v3767 = vextract.low.u32 %v3766
    %v3768 = vextract.high.u32 %v3766
    %v3769 = vmul.u32 %v3762, %v3753
    %v3770 = vadd.s32 %v3765, %v3767
    %vm3771 = vc.u32 %v3765, %v3767
    %v3772 = vadd.s32 %v3768, 1
    %v3773 = vsel %vm3771, %v3772, %v3768
    %v3774 = vadd.s32 %v3769, %v3773
    %v3775 = vadd.s32 %v3774, 536870912
    %v3776 = vshrl.u32 %v3775, 30
    %v3777 = vshll.u32 %v3776, 30
    %v3778 = vsub.s32 %v3774, %v3777
    %vm3779 = vcmp.lt.s32.totalorder %v3778, 0
    %v3780 = vsub.s32 0, %v3778
    %v3781 = vsel %vm3779, %v3780, %v3778
    %v3782 = vclz %v3781
    %v3783 = vsub.s32 %v3782, 2
    %vm3784 = vcmp.gt.s32.totalorder 0, %v3783
    %v3785 = vsel %vm3784, 0, %v3783
    %v3786 = vsub.s32 32, %v3785
    %v3787 = vshll.u32 %v3778, %v3785
    %v3788 = vshrl.u32 %v3770, %v3786
    %v3789 = vor.u32 %v3787, %v3788
    %v3790 = vsub.s32 4294967266, %v3785
    %v3791 = vadd.s32 %v3790, 127
    %v3792 = vshll.u32 %v3791, 23
    %v3793 = vor.u32 4788187, %v3792
    %v3794 = vand.u32 2147483647, %v3793
    %v3796 = vcvt.s32.f32 %v3789
    %v3797 = vmul.f32 %v3796, %v3794
    %v3798 = vxor.u32 %v3797, 2147483648
    %v3799 = vsel %vm3716, %v3798, %v3797
    %v3800 = vsub.s32 4, %v3776
    %v3801 = vsel %vm3716, %v3800, %v3776
    %v3802 = vsel %vm3715, %v695, %v3799
    %v3803 = vsel %vm3715, 0, %v3801
    %v3804 = vcosq.f32.pop %v3802
    %v3805 = vsinq.f32.pop %v3802
    %vm3806 = vweird.f32 %v695
    %v3807 = vadd.s32 %v3803, 3
    %v3808 = vand.u32 %v3807, 3
    %vm3809 = vcmp.lt.s32.totalorder %v3808, 2
    %vm3810 = vcmp.eq.s32.totalorder %v3808, 0
    %v3811 = vxor.u32 %v3805, 2147483648
    %v3812 = vsel %vm3810, %v3804, %v3811
    %vm3813 = vcmp.eq.s32.totalorder %v3808, 2
    %v3814 = vxor.u32 %v3804, 2147483648
    %v3815 = vsel %vm3813, %v3814, %v3805
    %v3816 = vsel %vm3809, %v3812, %v3815
    %v3817 = vsel %vm3806, nan, %v3816
    %v3818 = vand.u32 2147483647, %v696
    %vm3819 = vcmp.le.f32.partialorder %v3818, 0.7853982
    %vm3820 = vcmp.lt.s32.totalorder %v696, 0
    %v3821 = vand.u32 %v696, 2139095040
    %v3822 = vshrl.u32 %v3821, 23
    %v3823 = vsub.s32 %v3822, 127
    %v3824 = vand.u32 2147483647, %v696
    %v3825 = vand.u32 %v3824, 8388607
    %v3826 = vor.u32 %v3825, 8388608
    %v3827 = vsub.s32 0, %v3826
    %v3828 = vadd.s32 %v3823, 1
    %vm3829 = vcmp.gt.s32.totalorder %v3828, 0
    %v3830 = vsel %vm3829, %v3828, 0
    %v3831 = vshrl.u32 %v3830, 5
    %v3832 = vand.u32 %v3830, 31
    %v3833 = vsub.s32 32, %v3832
    %v3834 = vshrl.u32 683565275, %v3833
    %v3835 = vshll.u32 683565275, %v3832
    %v3836 = vshrl.u32 2475754826, %v3833
    %v3837 = vor.u32 %v3835, %v3836
    %v3838 = vshll.u32 2475754826, %v3832
    %v3839 = vshrl.u32 2131351028, %v3833
    %v3840 = vor.u32 %v3838, %v3839
    %v3841 = vshll.u32 2131351028, %v3832
    %v3842 = vshrl.u32 2102212464, %v3833
    %v3843 = vor.u32 %v3841, %v3842
    %v3844 = vshll.u32 2102212464, %v3832
    %v3845 = vshrl.u32 920167782, %v3833
    %v3846 = vor.u32 %v3844, %v3845
    %v3847 = vshll.u32 920167782, %v3832
    %v3848 = vshrl.u32 1326507024, %v3833
    %v3849 = vor.u32 %v3847, %v3848
    %vm3850 = vcmp.lt.s32.totalorder %v3831, 1
    %vm3851 = vcmp.lt.s32.totalorder %v3831, 2
    %vm3852 = vcmp.lt.s32.totalorder %v3831, 3
    %vm3853 = vcmp.lt.s32.totalorder %v3831, 4
    %v3854 = vsel %vm3850, %v3834, %v3837
    %v3855 = vsel %vm3853, %v3843, 2102212464
    %v3856 = vsel %vm3852, %v3840, %v3855
    %v3857 = vsel %vm3851, %v3854, %v3856
    %v3858 = vsel %vm3850, %v3837, %v3840
    %v3859 = vsel %vm3853, %v3846, 920167782
    %v3860 = vsel %vm3852, %v3843, %v3859
    %v3861 = vsel %vm3851, %v3858, %v3860
    %v3862 = vsel %vm3850, %v3840, %v3843
    %v3863 = vsel %vm3853, %v3849, 1326507024
    %v3864 = vsel %vm3852, %v3846, %v3863
    %v3865 = vsel %vm3851, %v3862, %v3864
    %v3866 = vshll.u32 %v3826, 8
    %v3867 = vmul.u32.u64.compose %v3866, %v3865
    %v3868 = vextract.low.u32 %v3867
    %v3869 = vextract.high.u32 %v3867
    %v3870 = vmul.u32.u64.compose %v3866, %v3861
    %v3871 = vextract.low.u32 %v3870
    %v3872 = vextract.high.u32 %v3870
    %v3873 = vmul.u32 %v3866, %v3857
    %v3874 = vadd.s32 %v3869, %v3871
    %vm3875 = vc.u32 %v3869, %v3871
    %v3876 = vadd.s32 %v3872, 1
    %v3877 = vsel %vm3875, %v3876, %v3872
    %v3878 = vadd.s32 %v3873, %v3877
    %v3879 = vadd.s32 %v3878, 536870912
    %v3880 = vshrl.u32 %v3879, 30
    %v3881 = vshll.u32 %v3880, 30
    %v3882 = vsub.s32 %v3878, %v3881
    %vm3883 = vcmp.lt.s32.totalorder %v3882, 0
    %v3884 = vsub.s32 0, %v3882
    %v3885 = vsel %vm3883, %v3884, %v3882
    %v3886 = vclz %v3885
    %v3887 = vsub.s32 %v3886, 2
    %vm3888 = vcmp.gt.s32.totalorder 0, %v3887
    %v3889 = vsel %vm3888, 0, %v3887
    %v3890 = vsub.s32 32, %v3889
    %v3891 = vshll.u32 %v3882, %v3889
    %v3892 = vshrl.u32 %v3874, %v3890
    %v3893 = vor.u32 %v3891, %v3892
    %v3894 = vsub.s32 4294967266, %v3889
    %v3895 = vadd.s32 %v3894, 127
    %v3896 = vshll.u32 %v3895, 23
    %v3897 = vor.u32 4788187, %v3896
    %v3898 = vand.u32 2147483647, %v3897
    %v3900 = vcvt.s32.f32 %v3893
    %v3901 = vmul.f32 %v3900, %v3898
    %v3902 = vxor.u32 %v3901, 2147483648
    %v3903 = vsel %vm3820, %v3902, %v3901
    %v3904 = vsub.s32 4, %v3880
    %v3905 = vsel %vm3820, %v3904, %v3880
    %v3906 = vsel %vm3819, %v696, %v3903
    %v3907 = vsel %vm3819, 0, %v3905
    %v3908 = vcosq.f32.pop %v3906
    %v3909 = vsinq.f32.pop %v3906
    %vm3910 = vweird.f32 %v696
    %v3911 = vadd.s32 %v3907, 3
    %v3912 = vand.u32 %v3911, 3
    %vm3913 = vcmp.lt.s32.totalorder %v3912, 2
    %vm3914 = vcmp.eq.s32.totalorder %v3912, 0
    %v3915 = vxor.u32 %v3909, 2147483648
    %v3916 = vsel %vm3914, %v3908, %v3915
    %vm3917 = vcmp.eq.s32.totalorder %v3912, 2
    %v3918 = vxor.u32 %v3908, 2147483648
    %v3919 = vsel %vm3917, %v3918, %v3909
    %v3920 = vsel %vm3913, %v3916, %v3919
    %v3921 = vsel %vm3910, nan, %v3920
    %v3922 = vand.u32 2147483647, %v697
    %vm3923 = vcmp.le.f32.partialorder %v3922, 0.7853982
    %vm3924 = vcmp.lt.s32.totalorder %v697, 0
    %v3925 = vand.u32 %v697, 2139095040
    %v3926 = vshrl.u32 %v3925, 23
    %v3927 = vsub.s32 %v3926, 127
    %v3928 = vand.u32 2147483647, %v697
    %v3929 = vand.u32 %v3928, 8388607
    %v3930 = vor.u32 %v3929, 8388608
    %v3931 = vsub.s32 0, %v3930
    %v3932 = vadd.s32 %v3927, 1
    %vm3933 = vcmp.gt.s32.totalorder %v3932, 0
    %v3934 = vsel %vm3933, %v3932, 0
    %v3935 = vshrl.u32 %v3934, 5
    %v3936 = vand.u32 %v3934, 31
    %v3937 = vsub.s32 32, %v3936
    %v3938 = vshrl.u32 683565275, %v3937
    %v3939 = vshll.u32 683565275, %v3936
    %v3940 = vshrl.u32 2475754826, %v3937
    %v3941 = vor.u32 %v3939, %v3940
    %v3942 = vshll.u32 2475754826, %v3936
    %v3943 = vshrl.u32 2131351028, %v3937
    %v3944 = vor.u32 %v3942, %v3943
    %v3945 = vshll.u32 2131351028, %v3936
    %v3946 = vshrl.u32 2102212464, %v3937
    %v3947 = vor.u32 %v3945, %v3946
    %v3948 = vshll.u32 2102212464, %v3936
    %v3949 = vshrl.u32 920167782, %v3937
    %v3950 = vor.u32 %v3948, %v3949
    %v3951 = vshll.u32 920167782, %v3936
    %v3952 = vshrl.u32 1326507024, %v3937
    %v3953 = vor.u32 %v3951, %v3952
    %vm3954 = vcmp.lt.s32.totalorder %v3935, 1
    %vm3955 = vcmp.lt.s32.totalorder %v3935, 2
    %vm3956 = vcmp.lt.s32.totalorder %v3935, 3
    %vm3957 = vcmp.lt.s32.totalorder %v3935, 4
    %v3958 = vsel %vm3954, %v3938, %v3941
    %v3959 = vsel %vm3957, %v3947, 2102212464
    %v3960 = vsel %vm3956, %v3944, %v3959
    %v3961 = vsel %vm3955, %v3958, %v3960
    %v3962 = vsel %vm3954, %v3941, %v3944
    %v3963 = vsel %vm3957, %v3950, 920167782
    %v3964 = vsel %vm3956, %v3947, %v3963
    %v3965 = vsel %vm3955, %v3962, %v3964
    %v3966 = vsel %vm3954, %v3944, %v3947
    %v3967 = vsel %vm3957, %v3953, 1326507024
    %v3968 = vsel %vm3956, %v3950, %v3967
    %v3969 = vsel %vm3955, %v3966, %v3968
    %v3970 = vshll.u32 %v3930, 8
    %v3971 = vmul.u32.u64.compose %v3970, %v3969
    %v3972 = vextract.low.u32 %v3971
    %v3973 = vextract.high.u32 %v3971
    %v3974 = vmul.u32.u64.compose %v3970, %v3965
    %v3975 = vextract.low.u32 %v3974
    %v3976 = vextract.high.u32 %v3974
    %v3977 = vmul.u32 %v3970, %v3961
    %v3978 = vadd.s32 %v3973, %v3975
    %vm3979 = vc.u32 %v3973, %v3975
    %v3980 = vadd.s32 %v3976, 1
    %v3981 = vsel %vm3979, %v3980, %v3976
    %v3982 = vadd.s32 %v3977, %v3981
    %v3983 = vadd.s32 %v3982, 536870912
    %v3984 = vshrl.u32 %v3983, 30
    %v3985 = vshll.u32 %v3984, 30
    %v3986 = vsub.s32 %v3982, %v3985
    %vm3987 = vcmp.lt.s32.totalorder %v3986, 0
    %v3988 = vsub.s32 0, %v3986
    %v3989 = vsel %vm3987, %v3988, %v3986
    %v3990 = vclz %v3989
    %v3991 = vsub.s32 %v3990, 2
    %vm3992 = vcmp.gt.s32.totalorder 0, %v3991
    %v3993 = vsel %vm3992, 0, %v3991
    %v3994 = vsub.s32 32, %v3993
    %v3995 = vshll.u32 %v3986, %v3993
    %v3996 = vshrl.u32 %v3978, %v3994
    %v3997 = vor.u32 %v3995, %v3996
    %v3998 = vsub.s32 4294967266, %v3993
    %v3999 = vadd.s32 %v3998, 127
    %v4000 = vshll.u32 %v3999, 23
    %v4001 = vor.u32 4788187, %v4000
    %v4002 = vand.u32 2147483647, %v4001
    %v4004 = vcvt.s32.f32 %v3997
    %v4005 = vmul.f32 %v4004, %v4002
    %v4006 = vxor.u32 %v4005, 2147483648
    %v4007 = vsel %vm3924, %v4006, %v4005
    %v4008 = vsub.s32 4, %v3984
    %v4009 = vsel %vm3924, %v4008, %v3984
    %v4010 = vsel %vm3923, %v697, %v4007
    %v4011 = vsel %vm3923, 0, %v4009
    %v4012 = vcosq.f32.pop %v4010
    %v4013 = vsinq.f32.pop %v4010
    %vm4014 = vweird.f32 %v697
    %v4015 = vadd.s32 %v4011, 3
    %v4016 = vand.u32 %v4015, 3
    %vm4017 = vcmp.lt.s32.totalorder %v4016, 2
    %vm4018 = vcmp.eq.s32.totalorder %v4016, 0
    %v4019 = vxor.u32 %v4013, 2147483648
    %v4020 = vsel %vm4018, %v4012, %v4019
    %vm4021 = vcmp.eq.s32.totalorder %v4016, 2
    %v4022 = vxor.u32 %v4012, 2147483648
    %v4023 = vsel %vm4021, %v4022, %v4013
    %v4024 = vsel %vm4017, %v4020, %v4023
    %v4025 = vsel %vm4014, nan, %v4024
    %4027 = vset.pattern.permute.xlu0 0
    %4028 = vperm.xlu0 %4027, %v402
    %v4029 = vpop.permute.xlu0 %4028
    %4032 = vset.pattern.permute.xlu0 0
    %4033 = vperm.xlu0 %4032, %v403
    %v4034 = vpop.permute.xlu0 %4033
    %4037 = vset.pattern.permute.xlu0 0
    %4038 = vperm.xlu0 %4037, %v404
    %v4039 = vpop.permute.xlu0 %4038
    %4042 = vset.pattern.permute.xlu0 0
    %4043 = vperm.xlu0 %4042, %v405
    %v4044 = vpop.permute.xlu0 %4043
    %4047 = vset.pattern.permute.xlu0 0
    %4048 = vperm.xlu0 %4047, %v406
    %v4049 = vpop.permute.xlu0 %4048
    %4052 = vset.pattern.permute.xlu0 0
    %4053 = vperm.xlu0 %4052, %v407
    %v4054 = vpop.permute.xlu0 %4053
    %4057 = vset.pattern.permute.xlu0 0
    %4058 = vperm.xlu0 %4057, %v408
    %v4059 = vpop.permute.xlu0 %4058
    %4062 = vset.pattern.permute.xlu0 0
    %4063 = vperm.xlu0 %4062, %v409
    %v4064 = vpop.permute.xlu0 %4063
    %4067 = vset.pattern.permute.xlu0 0
    %4068 = vperm.xlu0 %4067, %v410
    %v4069 = vpop.permute.xlu0 %4068
    %4072 = vset.pattern.permute.xlu0 0
    %4073 = vperm.xlu0 %4072, %v411
    %v4074 = vpop.permute.xlu0 %4073
    %4077 = vset.pattern.permute.xlu0 0
    %4078 = vperm.xlu0 %4077, %v412
    %v4079 = vpop.permute.xlu0 %4078
    %4082 = vset.pattern.permute.xlu0 0
    %4083 = vperm.xlu0 %4082, %v413
    %v4084 = vpop.permute.xlu0 %4083
    %4087 = vset.pattern.permute.xlu0 0
    %4088 = vperm.xlu0 %4087, %v414
    %v4089 = vpop.permute.xlu0 %4088
    %4092 = vset.pattern.permute.xlu0 0
    %4093 = vperm.xlu0 %4092, %v415
    %v4094 = vpop.permute.xlu0 %4093
    %4097 = vset.pattern.permute.xlu0 0
    %4098 = vperm.xlu0 %4097, %v416
    %v4099 = vpop.permute.xlu0 %4098
    %4102 = vset.pattern.permute.xlu0 0
    %4103 = vperm.xlu0 %4102, %v417
    %v4104 = vpop.permute.xlu0 %4103
    %4107 = vset.pattern.permute.xlu0 0
    %4108 = vperm.xlu0 %4107, %v418
    %v4109 = vpop.permute.xlu0 %4108
    %4112 = vset.pattern.permute.xlu0 0
    %4113 = vperm.xlu0 %4112, %v419
    %v4114 = vpop.permute.xlu0 %4113
    %4117 = vset.pattern.permute.xlu0 0
    %4118 = vperm.xlu0 %4117, %v420
    %v4119 = vpop.permute.xlu0 %4118
    %4122 = vset.pattern.permute.xlu0 0
    %4123 = vperm.xlu0 %4122, %v421
    %v4124 = vpop.permute.xlu0 %4123
    %4127 = vset.pattern.permute.xlu0 0
    %4128 = vperm.xlu0 %4127, %v422
    %v4129 = vpop.permute.xlu0 %4128
    %4132 = vset.pattern.permute.xlu0 0
    %4133 = vperm.xlu0 %4132, %v423
    %v4134 = vpop.permute.xlu0 %4133
    %4137 = vset.pattern.permute.xlu0 0
    %4138 = vperm.xlu0 %4137, %v424
    %v4139 = vpop.permute.xlu0 %4138
    %4142 = vset.pattern.permute.xlu0 0
    %4143 = vperm.xlu0 %4142, %v425
    %v4144 = vpop.permute.xlu0 %4143
    %4147 = vset.pattern.permute.xlu0 0
    %4148 = vperm.xlu0 %4147, %v426
    %v4149 = vpop.permute.xlu0 %4148
    %4152 = vset.pattern.permute.xlu0 0
    %4153 = vperm.xlu0 %4152, %v427
    %v4154 = vpop.permute.xlu0 %4153
    %4157 = vset.pattern.permute.xlu0 0
    %4158 = vperm.xlu0 %4157, %v428
    %v4159 = vpop.permute.xlu0 %4158
    %4162 = vset.pattern.permute.xlu0 0
    %4163 = vperm.xlu0 %4162, %v429
    %v4164 = vpop.permute.xlu0 %4163
    %4167 = vset.pattern.permute.xlu0 0
    %4168 = vperm.xlu0 %4167, %v430
    %v4169 = vpop.permute.xlu0 %4168
    %4172 = vset.pattern.permute.xlu0 0
    %4173 = vperm.xlu0 %4172, %v431
    %v4174 = vpop.permute.xlu0 %4173
    %4177 = vset.pattern.permute.xlu0 0
    %4178 = vperm.xlu0 %4177, %v432
    %v4179 = vpop.permute.xlu0 %4178
    %4182 = vset.pattern.permute.xlu0 0
    %4183 = vperm.xlu0 %4182, %v433
    %v4184 = vpop.permute.xlu0 %4183
    %v4186 = vmul.f32 %v49, %v4029
    %v4187 = vmul.f32 %v50, %v4034
    %v4188 = vmul.f32 %v51, %v4039
    %v4189 = vmul.f32 %v52, %v4044
    %v4190 = vmul.f32 %v53, %v4049
    %v4191 = vmul.f32 %v54, %v4054
    %v4192 = vmul.f32 %v55, %v4059
    %v4193 = vmul.f32 %v56, %v4064
    %v4194 = vmul.f32 %v57, %v4069
    %v4195 = vmul.f32 %v58, %v4074
    %v4196 = vmul.f32 %v59, %v4079
    %v4197 = vmul.f32 %v60, %v4084
    %v4198 = vmul.f32 %v61, %v4089
    %v4199 = vmul.f32 %v62, %v4094
    %v4200 = vmul.f32 %v63, %v4099
    %v4201 = vmul.f32 %v64, %v4104
    %v4202 = vmul.f32 %v65, %v4109
    %v4203 = vmul.f32 %v66, %v4114
    %v4204 = vmul.f32 %v67, %v4119
    %v4205 = vmul.f32 %v68, %v4124
    %v4206 = vmul.f32 %v69, %v4129
    %v4207 = vmul.f32 %v70, %v4134
    %v4208 = vmul.f32 %v71, %v4139
    %v4209 = vmul.f32 %v72, %v4144
    %v4210 = vmul.f32 %v73, %v4149
    %v4211 = vmul.f32 %v74, %v4154
    %v4212 = vmul.f32 %v75, %v4159
    %v4213 = vmul.f32 %v76, %v4164
    %v4214 = vmul.f32 %v77, %v4169
    %v4215 = vmul.f32 %v78, %v4174
    %v4216 = vmul.f32 %v79, %v4179
    %v4217 = vmul.f32 %v80, %v4184
    %v4218 = vadd.f32 %v4186, %v801
    %v4219 = vadd.f32 %v4187, %v905
    %v4220 = vadd.f32 %v4188, %v1009
    %v4221 = vadd.f32 %v4189, %v1113
    %v4222 = vadd.f32 %v4190, %v1217
    %v4223 = vadd.f32 %v4191, %v1321
    %v4224 = vadd.f32 %v4192, %v1425
    %v4225 = vadd.f32 %v4193, %v1529
    %v4226 = vadd.f32 %v4194, %v1633
    %v4227 = vadd.f32 %v4195, %v1737
    %v4228 = vadd.f32 %v4196, %v1841
    %v4229 = vadd.f32 %v4197, %v1945
    %v4230 = vadd.f32 %v4198, %v2049
    %v4231 = vadd.f32 %v4199, %v2153
    %v4232 = vadd.f32 %v4200, %v2257
    %v4233 = vadd.f32 %v4201, %v2361
    %v4234 = vadd.f32 %v4202, %v2465
    %v4235 = vadd.f32 %v4203, %v2569
    %v4236 = vadd.f32 %v4204, %v2673
    %v4237 = vadd.f32 %v4205, %v2777
    %v4238 = vadd.f32 %v4206, %v2881
    %v4239 = vadd.f32 %v4207, %v2985
    %v4240 = vadd.f32 %v4208, %v3089
    %v4241 = vadd.f32 %v4209, %v3193
    %v4242 = vadd.f32 %v4210, %v3297
    %v4243 = vadd.f32 %v4211, %v3401
    %v4244 = vadd.f32 %v4212, %v3505
    %v4245 = vadd.f32 %v4213, %v3609
    %v4246 = vadd.f32 %v4214, %v3713
    %v4247 = vadd.f32 %v4215, %v3817
    %v4248 = vadd.f32 %v4216, %v3921
    %v4249 = vadd.f32 %v4217, %v4025
    %v4250 = vld [vmem:[#allocation2] sm:$0xff]
    %v4251 = vld [vmem:[#allocation2 + $0x8] sm:$0xff]
    %v4252 = vld [vmem:[#allocation2 + $0x10] sm:$0xff]
    %v4253 = vld [vmem:[#allocation2 + $0x18] sm:$0xff]
    %v4254 = vld [vmem:[#allocation2 + $0x20] sm:$0xff]
    %v4255 = vld [vmem:[#allocation2 + $0x28] sm:$0xff]
    %v4256 = vld [vmem:[#allocation2 + $0x30] sm:$0xff]
    %v4257 = vld [vmem:[#allocation2 + $0x38] sm:$0xff]
    %v4258 = vld [vmem:[#allocation2 + $0x40] sm:$0xff]
    %v4259 = vld [vmem:[#allocation2 + $0x48] sm:$0xff]
    %v4260 = vld [vmem:[#allocation2 + $0x50] sm:$0xff]
    %v4261 = vld [vmem:[#allocation2 + $0x58] sm:$0xff]
    %v4262 = vld [vmem:[#allocation2 + $0x60] sm:$0xff]
    %v4263 = vld [vmem:[#allocation2 + $0x68] sm:$0xff]
    %v4264 = vld [vmem:[#allocation2 + $0x70] sm:$0xff]
    %v4265 = vld [vmem:[#allocation2 + $0x78] sm:$0xff]
    %v4266 = vlaneseq
    %v4267 = vshrl.u32 %v4266, 7
    %v4268 = vsub.s32 0, %v4267
    %v4269 = vrot.slane %v113, %v4268
    %4270 = vmatprep.subr.mxu0 0.0
    %4271 = vmatpush1.msra.mxu0 %v4250
    %4272 = vmatprep.subr.mxu0 0.0
    %4273 = vmatpush1.msra.mxu0 %v4251
    %4274 = vmatprep.subr.mxu0 0.0
    %4275 = vmatpush1.msra.mxu0 %v4252
    %4276 = vmatprep.subr.mxu0 0.0
    %4277 = vmatpush1.msra.mxu0 %v4253
    %4278 = vmatprep.subr.mxu0 0.0
    %4279 = vmatpush1.msra.mxu0 %v4254
    %4280 = vmatprep.subr.mxu0 0.0
    %4281 = vmatpush1.msra.mxu0 %v4255
    %4282 = vmatprep.subr.mxu0 0.0
    %4283 = vmatpush1.msra.mxu0 %v4256
    %4284 = vmatprep.subr.mxu0 0.0
    %4285 = vmatpush1.msra.mxu0 %v4257
    %4286 = vmatprep.subr.mxu0 0.0
    %4287 = vmatpush1.msra.mxu0 %v4258
    %4288 = vmatprep.subr.mxu0 0.0
    %4289 = vmatpush1.msra.mxu0 %v4259
    %4290 = vmatprep.subr.mxu0 0.0
    %4291 = vmatpush1.msra.mxu0 %v4260
    %4292 = vmatprep.subr.mxu0 0.0
    %4293 = vmatpush1.msra.mxu0 %v4261
    %4294 = vmatprep.subr.mxu0 0.0
    %4295 = vmatpush1.msra.mxu0 %v4262
    %4296 = vmatprep.subr.mxu0 0.0
    %4297 = vmatpush1.msra.mxu0 %v4263
    %4298 = vmatprep.subr.mxu0 0.0
    %4299 = vmatpush1.msra.mxu0 %v4264
    %4300 = vmatprep.subr.mxu0 0.0
    %4301 = vmatpush1.msra.mxu0 %v4265
    %4302 = vmatprep.subr.mxu0 0.0
    %4303 = vmatpush1.msra.mxu0 0.0
    %4304 = vmatprep.subr.mxu0 0.0
    %4305 = vmatpush1.msra.mxu0 0.0
    %4306 = vmatprep.subr.mxu0 0.0
    %4307 = vmatpush1.msra.mxu0 0.0
    %4308 = vmatprep.subr.mxu0 0.0
    %4309 = vmatpush1.msra.mxu0 0.0
    %4310 = vmatprep.subr.mxu0 0.0
    %4311 = vmatpush1.msra.mxu0 0.0
    %4312 = vmatprep.subr.mxu0 0.0
    %4313 = vmatpush1.msra.mxu0 0.0
    %4314 = vmatprep.subr.mxu0 0.0
    %4315 = vmatpush1.msra.mxu0 0.0
    %4316 = vmatprep.subr.mxu0 0.0
    %4317 = vmatpush1.msra.mxu0 0.0
    %4318 = vmatprep.subr.mxu0 0.0
    %4319 = vmatpush1.msra.mxu0 0.0
    %4320 = vmatprep.subr.mxu0 0.0
    %4321 = vmatpush1.msra.mxu0 0.0
    %4322 = vmatprep.subr.mxu0 0.0
    %4323 = vmatpush1.msra.mxu0 0.0
    %4324 = vmatprep.subr.mxu0 0.0
    %4325 = vmatpush1.msra.mxu0 0.0
    %4326 = vmatprep.subr.mxu0 0.0
    %4327 = vmatpush1.msra.mxu0 0.0
    %4328 = vmatprep.subr.mxu0 0.0
    %4329 = vmatpush1.msra.mxu0 0.0
    %4330 = vmatprep.subr.mxu0 0.0
    %4331 = vmatpush1.msra.mxu0 0.0
    %4332 = vmatprep.subr.mxu0 0.0
    %4333 = vmatpush1.msra.mxu0 0.0
    %4334 = vmatprep.mubr.f32.mxu0 0.0
    %4335 = vmatmul.mubr.f32.gmra.mrb[0].mxu0 %v4218
    %v4336 = vpop.f32.mrb[0].mxu0
    %v4337 = vadd.f32 %v4269, %v4336
    %v4338 = vpop.f32.mrb[0].mxu0
    %4339 = vmatprep.mubr.f32.mxu0 0.0
    %4340 = vmatmul.mubr.f32.gmra.mrb[0].mxu0 %v4219
    %v4341 = vpop.f32.mrb[0].mxu0
    %v4342 = vadd.f32 %v4269, %v4341
    %v4343 = vpop.f32.mrb[0].mxu0
    %4344 = vmatprep.mubr.f32.mxu0 0.0
    %4345 = vmatmul.mubr.f32.gmra.mrb[0].mxu0 %v4220
    %v4346 = vpop.f32.mrb[0].mxu0
    %v4347 = vadd.f32 %v4269, %v4346
    %v4348 = vpop.f32.mrb[0].mxu0
    %4349 = vmatprep.mubr.f32.mxu0 0.0
    %4350 = vmatmul.mubr.f32.gmra.mrb[0].mxu0 %v4221
    %v4351 = vpop.f32.mrb[0].mxu0
    %v4352 = vadd.f32 %v4269, %v4351
    %v4353 = vpop.f32.mrb[0].mxu0
    %4354 = vmatprep.mubr.f32.mxu0 0.0
    %4355 = vmatmul.mubr.f32.gmra.mrb[0].mxu0 %v4222
    %v4356 = vpop.f32.mrb[0].mxu0
    %v4357 = vadd.f32 %v4269, %v4356
    %v4358 = vpop.f32.mrb[0].mxu0
    %4359 = vmatprep.mubr.f32.mxu0 0.0
    %4360 = vmatmul.mubr.f32.gmra.mrb[0].mxu0 %v4223
    %v4361 = vpop.f32.mrb[0].mxu0
    %v4362 = vadd.f32 %v4269, %v4361
    %v4363 = vpop.f32.mrb[0].mxu0
    %4364 = vmatprep.mubr.f32.mxu0 0.0
    %4365 = vmatmul.mubr.f32.gmra.mrb[0].mxu0 %v4224
    %v4366 = vpop.f32.mrb[0].mxu0
    %v4367 = vadd.f32 %v4269, %v4366
    %v4368 = vpop.f32.mrb[0].mxu0
    %4369 = vmatprep.mubr.f32.mxu0 0.0
    %4370 = vmatmul.mubr.f32.gmra.mrb[0].mxu0 %v4225
    %v4371 = vpop.f32.mrb[0].mxu0
    %v4372 = vadd.f32 %v4269, %v4371
    %v4373 = vpop.f32.mrb[0].mxu0
    %4374 = vmatprep.mubr.f32.mxu0 0.0
    %4375 = vmatmul.mubr.f32.gmra.mrb[0].mxu0 %v4226
    %v4376 = vpop.f32.mrb[0].mxu0
    %v4377 = vadd.f32 %v4269, %v4376
    %v4378 = vpop.f32.mrb[0].mxu0
    %4379 = vmatprep.mubr.f32.mxu0 0.0
    %4380 = vmatmul.mubr.f32.gmra.mrb[0].mxu0 %v4227
    %v4381 = vpop.f32.mrb[0].mxu0
    %v4382 = vadd.f32 %v4269, %v4381
    %v4383 = vpop.f32.mrb[0].mxu0
    %4384 = vmatprep.mubr.f32.mxu0 0.0
    %4385 = vmatmul.mubr.f32.gmra.mrb[0].mxu0 %v4228
    %v4386 = vpop.f32.mrb[0].mxu0
    %v4387 = vadd.f32 %v4269, %v4386
    %v4388 = vpop.f32.mrb[0].mxu0
    %4389 = vmatprep.mubr.f32.mxu0 0.0
    %4390 = vmatmul.mubr.f32.gmra.mrb[0].mxu0 %v4229
    %v4391 = vpop.f32.mrb[0].mxu0
    %v4392 = vadd.f32 %v4269, %v4391
    %v4393 = vpop.f32.mrb[0].mxu0
    %4394 = vmatprep.mubr.f32.mxu0 0.0
    %4395 = vmatmul.mubr.f32.gmra.mrb[0].mxu0 %v4230
    %v4396 = vpop.f32.mrb[0].mxu0
    %v4397 = vadd.f32 %v4269, %v4396
    %v4398 = vpop.f32.mrb[0].mxu0
    %4399 = vmatprep.mubr.f32.mxu0 0.0
    %4400 = vmatmul.mubr.f32.gmra.mrb[0].mxu0 %v4231
    %v4401 = vpop.f32.mrb[0].mxu0
    %v4402 = vadd.f32 %v4269, %v4401
    %v4403 = vpop.f32.mrb[0].mxu0
    %4404 = vmatprep.mubr.f32.mxu0 0.0
    %4405 = vmatmul.mubr.f32.gmra.mrb[0].mxu0 %v4232
    %v4406 = vpop.f32.mrb[0].mxu0
    %v4407 = vadd.f32 %v4269, %v4406
    %v4408 = vpop.f32.mrb[0].mxu0
    %4409 = vmatprep.mubr.f32.mxu0 0.0
    %4410 = vmatmul.mubr.f32.gmra.mrb[0].mxu0 %v4233
    %v4411 = vpop.f32.mrb[0].mxu0
    %v4412 = vadd.f32 %v4269, %v4411
    %v4413 = vpop.f32.mrb[0].mxu0
    %4414 = vmatprep.mubr.f32.mxu0 0.0
    %4415 = vmatmul.mubr.f32.gmra.mrb[0].mxu0 %v4234
    %v4416 = vpop.f32.mrb[0].mxu0
    %v4417 = vadd.f32 %v4269, %v4416
    %v4418 = vpop.f32.mrb[0].mxu0
    %4419 = vmatprep.mubr.f32.mxu0 0.0
    %4420 = vmatmul.mubr.f32.gmra.mrb[0].mxu0 %v4235
    %v4421 = vpop.f32.mrb[0].mxu0
    %v4422 = vadd.f32 %v4269, %v4421
    %v4423 = vpop.f32.mrb[0].mxu0
    %4424 = vmatprep.mubr.f32.mxu0 0.0
    %4425 = vmatmul.mubr.f32.gmra.mrb[0].mxu0 %v4236
    %v4426 = vpop.f32.mrb[0].mxu0
    %v4427 = vadd.f32 %v4269, %v4426
    %v4428 = vpop.f32.mrb[0].mxu0
    %4429 = vmatprep.mubr.f32.mxu0 0.0
    %4430 = vmatmul.mubr.f32.gmra.mrb[0].mxu0 %v4237
    %v4431 = vpop.f32.mrb[0].mxu0
    %v4432 = vadd.f32 %v4269, %v4431
    %v4433 = vpop.f32.mrb[0].mxu0
    %4434 = vmatprep.mubr.f32.mxu0 0.0
    %4435 = vmatmul.mubr.f32.gmra.mrb[0].mxu0 %v4238
    %v4436 = vpop.f32.mrb[0].mxu0
    %v4437 = vadd.f32 %v4269, %v4436
    %v4438 = vpop.f32.mrb[0].mxu0
    %4439 = vmatprep.mubr.f32.mxu0 0.0
    %4440 = vmatmul.mubr.f32.gmra.mrb[0].mxu0 %v4239
    %v4441 = vpop.f32.mrb[0].mxu0
    %v4442 = vadd.f32 %v4269, %v4441
    %v4443 = vpop.f32.mrb[0].mxu0
    %4444 = vmatprep.mubr.f32.mxu0 0.0
    %4445 = vmatmul.mubr.f32.gmra.mrb[0].mxu0 %v4240
    %v4446 = vpop.f32.mrb[0].mxu0
    %v4447 = vadd.f32 %v4269, %v4446
    %v4448 = vpop.f32.mrb[0].mxu0
    %4449 = vmatprep.mubr.f32.mxu0 0.0
    %4450 = vmatmul.mubr.f32.gmra.mrb[0].mxu0 %v4241
    %v4451 = vpop.f32.mrb[0].mxu0
    %v4452 = vadd.f32 %v4269, %v4451
    %v4453 = vpop.f32.mrb[0].mxu0
    %4454 = vmatprep.mubr.f32.mxu0 0.0
    %4455 = vmatmul.mubr.f32.gmra.mrb[0].mxu0 %v4242
    %v4456 = vpop.f32.mrb[0].mxu0
    %v4457 = vadd.f32 %v4269, %v4456
    %v4458 = vpop.f32.mrb[0].mxu0
    %4459 = vmatprep.mubr.f32.mxu0 0.0
    %4460 = vmatmul.mubr.f32.gmra.mrb[0].mxu0 %v4243
    %v4461 = vpop.f32.mrb[0].mxu0
    %v4462 = vadd.f32 %v4269, %v4461
    %v4463 = vpop.f32.mrb[0].mxu0
    %4464 = vmatprep.mubr.f32.mxu0 0.0
    %4465 = vmatmul.mubr.f32.gmra.mrb[0].mxu0 %v4244
    %v4466 = vpop.f32.mrb[0].mxu0
    %v4467 = vadd.f32 %v4269, %v4466
    %v4468 = vpop.f32.mrb[0].mxu0
    %4469 = vmatprep.mubr.f32.mxu0 0.0
    %4470 = vmatmul.mubr.f32.gmra.mrb[0].mxu0 %v4245
    %v4471 = vpop.f32.mrb[0].mxu0
    %v4472 = vadd.f32 %v4269, %v4471
    %v4473 = vpop.f32.mrb[0].mxu0
    %4474 = vmatprep.mubr.f32.mxu0 0.0
    %4475 = vmatmul.mubr.f32.gmra.mrb[0].mxu0 %v4246
    %v4476 = vpop.f32.mrb[0].mxu0
    %v4477 = vadd.f32 %v4269, %v4476
    %v4478 = vpop.f32.mrb[0].mxu0
    %4479 = vmatprep.mubr.f32.mxu0 0.0
    %4480 = vmatmul.mubr.f32.gmra.mrb[0].mxu0 %v4247
    %v4481 = vpop.f32.mrb[0].mxu0
    %v4482 = vadd.f32 %v4269, %v4481
    %v4483 = vpop.f32.mrb[0].mxu0
    %4484 = vmatprep.mubr.f32.mxu0 0.0
    %4485 = vmatmul.mubr.f32.gmra.mrb[0].mxu0 %v4248
    %v4486 = vpop.f32.mrb[0].mxu0
    %v4487 = vadd.f32 %v4269, %v4486
    %v4488 = vpop.f32.mrb[0].mxu0
    %4489 = vmatprep.mubr.f32.mxu0 0.0
    %4490 = vmatmul.mubr.f32.gmra.mrb[0].mxu0 %v4249
    %v4491 = vpop.f32.mrb[0].mxu0
    %v4492 = vadd.f32 %v4269, %v4491
    %v4493 = vpop.f32.mrb[0].mxu0
    %4494 = vdwg.mxu0
    %v4495 = vtanh.pop %v4337
    %v4496 = vtanh.pop %v4342
    %v4497 = vtanh.pop %v4347
    %v4498 = vtanh.pop %v4352
    %v4499 = vtanh.pop %v4357
    %v4500 = vtanh.pop %v4362
    %v4501 = vtanh.pop %v4367
    %v4502 = vtanh.pop %v4372
    %v4503 = vtanh.pop %v4377
    %v4504 = vtanh.pop %v4382
    %v4505 = vtanh.pop %v4387
    %v4506 = vtanh.pop %v4392
    %v4507 = vtanh.pop %v4397
    %v4508 = vtanh.pop %v4402
    %v4509 = vtanh.pop %v4407
    %v4510 = vtanh.pop %v4412
    %v4511 = vtanh.pop %v4417
    %v4512 = vtanh.pop %v4422
    %v4513 = vtanh.pop %v4427
    %v4514 = vtanh.pop %v4432
    %v4515 = vtanh.pop %v4437
    %v4516 = vtanh.pop %v4442
    %v4517 = vtanh.pop %v4447
    %v4518 = vtanh.pop %v4452
    %v4519 = vtanh.pop %v4457
    %v4520 = vtanh.pop %v4462
    %v4521 = vtanh.pop %v4467
    %v4522 = vtanh.pop %v4472
    %v4523 = vtanh.pop %v4477
    %v4524 = vtanh.pop %v4482
    %v4525 = vtanh.pop %v4487
    %v4526 = vtanh.pop %v4492
    %v4527 = vld [vmem:[#allocation5] sm:$0xff]
    %v4528 = vld [vmem:[#allocation5 + $0x8] sm:$0xff]
    %v4529 = vld [vmem:[#allocation5 + $0x10] sm:$0xff]
    %v4530 = vld [vmem:[#allocation5 + $0x18] sm:$0xff]
    %v4531 = vld [vmem:[#allocation5 + $0x20] sm:$0xff]
    %v4532 = vld [vmem:[#allocation5 + $0x28] sm:$0xff]
    %v4533 = vld [vmem:[#allocation5 + $0x30] sm:$0xff]
    %v4534 = vld [vmem:[#allocation5 + $0x38] sm:$0xff]
    %v4535 = vld [vmem:[#allocation5 + $0x40] sm:$0xff]
    %v4536 = vld [vmem:[#allocation5 + $0x48] sm:$0xff]
    %v4537 = vld [vmem:[#allocation5 + $0x50] sm:$0xff]
    %v4538 = vld [vmem:[#allocation5 + $0x58] sm:$0xff]
    %v4539 = vld [vmem:[#allocation5 + $0x60] sm:$0xff]
    %v4540 = vld [vmem:[#allocation5 + $0x68] sm:$0xff]
    %v4541 = vld [vmem:[#allocation5 + $0x70] sm:$0xff]
    %v4542 = vld [vmem:[#allocation5 + $0x78] sm:$0xff]
    %v4543 = vlaneseq
    %v4544 = vshrl.u32 %v4543, 7
    %v4545 = vsub.s32 1, %v4544
    %v4546 = vrot.slane %v113, %v4545
    %4547 = vmatprep.subr.mxu0 0.0
    %4548 = vmatpush1.msra.mxu0 %v4527
    %4549 = vmatprep.subr.mxu0 0.0
    %4550 = vmatpush1.msra.mxu0 %v4528
    %4551 = vmatprep.subr.mxu0 0.0
    %4552 = vmatpush1.msra.mxu0 %v4529
    %4553 = vmatprep.subr.mxu0 0.0
    %4554 = vmatpush1.msra.mxu0 %v4530
    %4555 = vmatprep.subr.mxu0 0.0
    %4556 = vmatpush1.msra.mxu0 %v4531
    %4557 = vmatprep.subr.mxu0 0.0
    %4558 = vmatpush1.msra.mxu0 %v4532
    %4559 = vmatprep.subr.mxu0 0.0
    %4560 = vmatpush1.msra.mxu0 %v4533
    %4561 = vmatprep.subr.mxu0 0.0
    %4562 = vmatpush1.msra.mxu0 %v4534
    %4563 = vmatprep.subr.mxu0 0.0
    %4564 = vmatpush1.msra.mxu0 %v4535
    %4565 = vmatprep.subr.mxu0 0.0
    %4566 = vmatpush1.msra.mxu0 %v4536
    %4567 = vmatprep.subr.mxu0 0.0
    %4568 = vmatpush1.msra.mxu0 %v4537
    %4569 = vmatprep.subr.mxu0 0.0
    %4570 = vmatpush1.msra.mxu0 %v4538
    %4571 = vmatprep.subr.mxu0 0.0
    %4572 = vmatpush1.msra.mxu0 %v4539
    %4573 = vmatprep.subr.mxu0 0.0
    %4574 = vmatpush1.msra.mxu0 %v4540
    %4575 = vmatprep.subr.mxu0 0.0
    %4576 = vmatpush1.msra.mxu0 %v4541
    %4577 = vmatprep.subr.mxu0 0.0
    %4578 = vmatpush1.msra.mxu0 %v4542
    %4579 = vmatprep.subr.mxu0 0.0
    %4580 = vmatpush1.msra.mxu0 0.0
    %4581 = vmatprep.subr.mxu0 0.0
    %4582 = vmatpush1.msra.mxu0 0.0
    %4583 = vmatprep.subr.mxu0 0.0
    %4584 = vmatpush1.msra.mxu0 0.0
    %4585 = vmatprep.subr.mxu0 0.0
    %4586 = vmatpush1.msra.mxu0 0.0
    %4587 = vmatprep.subr.mxu0 0.0
    %4588 = vmatpush1.msra.mxu0 0.0
    %4589 = vmatprep.subr.mxu0 0.0
    %4590 = vmatpush1.msra.mxu0 0.0
    %4591 = vmatprep.subr.mxu0 0.0
    %4592 = vmatpush1.msra.mxu0 0.0
    %4593 = vmatprep.subr.mxu0 0.0
    %4594 = vmatpush1.msra.mxu0 0.0
    %4595 = vmatprep.subr.mxu0 0.0
    %4596 = vmatpush1.msra.mxu0 0.0
    %4597 = vmatprep.subr.mxu0 0.0
    %4598 = vmatpush1.msra.mxu0 0.0
    %4599 = vmatprep.subr.mxu0 0.0
    %4600 = vmatpush1.msra.mxu0 0.0
    %4601 = vmatprep.subr.mxu0 0.0
    %4602 = vmatpush1.msra.mxu0 0.0
    %4603 = vmatprep.subr.mxu0 0.0
    %4604 = vmatpush1.msra.mxu0 0.0
    %4605 = vmatprep.subr.mxu0 0.0
    %4606 = vmatpush1.msra.mxu0 0.0
    %4607 = vmatprep.subr.mxu0 0.0
    %4608 = vmatpush1.msra.mxu0 0.0
    %4609 = vmatprep.subr.mxu0 0.0
    %4610 = vmatpush1.msra.mxu0 0.0
    %4611 = vmatprep.mubr.f32.mxu0 0.0
    %4612 = vmatmul.mubr.f32.gmra.mrb[0].mxu0 %v4495
    %v4613 = vpop.f32.mrb[0].mxu0
    %v4614 = vadd.f32 %v4546, %v4613
    %v4615 = vpop.f32.mrb[0].mxu0
    %4616 = vmatprep.mubr.f32.mxu0 0.0
    %4617 = vmatmul.mubr.f32.gmra.mrb[0].mxu0 %v4496
    %v4618 = vpop.f32.mrb[0].mxu0
    %v4619 = vadd.f32 %v4546, %v4618
    %v4620 = vpop.f32.mrb[0].mxu0
    %4621 = vmatprep.mubr.f32.mxu0 0.0
    %4622 = vmatmul.mubr.f32.gmra.mrb[0].mxu0 %v4497
    %v4623 = vpop.f32.mrb[0].mxu0
    %v4624 = vadd.f32 %v4546, %v4623
    %v4625 = vpop.f32.mrb[0].mxu0
    %4626 = vmatprep.mubr.f32.mxu0 0.0
    %4627 = vmatmul.mubr.f32.gmra.mrb[0].mxu0 %v4498
    %v4628 = vpop.f32.mrb[0].mxu0
    %v4629 = vadd.f32 %v4546, %v4628
    %v4630 = vpop.f32.mrb[0].mxu0
    %4631 = vmatprep.mubr.f32.mxu0 0.0
    %4632 = vmatmul.mubr.f32.gmra.mrb[0].mxu0 %v4499
    %v4633 = vpop.f32.mrb[0].mxu0
    %v4634 = vadd.f32 %v4546, %v4633
    %v4635 = vpop.f32.mrb[0].mxu0
    %4636 = vmatprep.mubr.f32.mxu0 0.0
    %4637 = vmatmul.mubr.f32.gmra.mrb[0].mxu0 %v4500
    %v4638 = vpop.f32.mrb[0].mxu0
    %v4639 = vadd.f32 %v4546, %v4638
    %v4640 = vpop.f32.mrb[0].mxu0
    %4641 = vmatprep.mubr.f32.mxu0 0.0
    %4642 = vmatmul.mubr.f32.gmra.mrb[0].mxu0 %v4501
    %v4643 = vpop.f32.mrb[0].mxu0
    %v4644 = vadd.f32 %v4546, %v4643
    %v4645 = vpop.f32.mrb[0].mxu0
    %4646 = vmatprep.mubr.f32.mxu0 0.0
    %4647 = vmatmul.mubr.f32.gmra.mrb[0].mxu0 %v4502
    %v4648 = vpop.f32.mrb[0].mxu0
    %v4649 = vadd.f32 %v4546, %v4648
    %v4650 = vpop.f32.mrb[0].mxu0
    %4651 = vmatprep.mubr.f32.mxu0 0.0
    %4652 = vmatmul.mubr.f32.gmra.mrb[0].mxu0 %v4503
    %v4653 = vpop.f32.mrb[0].mxu0
    %v4654 = vadd.f32 %v4546, %v4653
    %v4655 = vpop.f32.mrb[0].mxu0
    %4656 = vmatprep.mubr.f32.mxu0 0.0
    %4657 = vmatmul.mubr.f32.gmra.mrb[0].mxu0 %v4504
    %v4658 = vpop.f32.mrb[0].mxu0
    %v4659 = vadd.f32 %v4546, %v4658
    %v4660 = vpop.f32.mrb[0].mxu0
    %4661 = vmatprep.mubr.f32.mxu0 0.0
    %4662 = vmatmul.mubr.f32.gmra.mrb[0].mxu0 %v4505
    %v4663 = vpop.f32.mrb[0].mxu0
    %v4664 = vadd.f32 %v4546, %v4663
    %v4665 = vpop.f32.mrb[0].mxu0
    %4666 = vmatprep.mubr.f32.mxu0 0.0
    %4667 = vmatmul.mubr.f32.gmra.mrb[0].mxu0 %v4506
    %v4668 = vpop.f32.mrb[0].mxu0
    %v4669 = vadd.f32 %v4546, %v4668
    %v4670 = vpop.f32.mrb[0].mxu0
    %4671 = vmatprep.mubr.f32.mxu0 0.0
    %4672 = vmatmul.mubr.f32.gmra.mrb[0].mxu0 %v4507
    %v4673 = vpop.f32.mrb[0].mxu0
    %v4674 = vadd.f32 %v4546, %v4673
    %v4675 = vpop.f32.mrb[0].mxu0
    %4676 = vmatprep.mubr.f32.mxu0 0.0
    %4677 = vmatmul.mubr.f32.gmra.mrb[0].mxu0 %v4508
    %v4678 = vpop.f32.mrb[0].mxu0
    %v4679 = vadd.f32 %v4546, %v4678
    %v4680 = vpop.f32.mrb[0].mxu0
    %4681 = vmatprep.mubr.f32.mxu0 0.0
    %4682 = vmatmul.mubr.f32.gmra.mrb[0].mxu0 %v4509
    %v4683 = vpop.f32.mrb[0].mxu0
    %v4684 = vadd.f32 %v4546, %v4683
    %v4685 = vpop.f32.mrb[0].mxu0
    %4686 = vmatprep.mubr.f32.mxu0 0.0
    %4687 = vmatmul.mubr.f32.gmra.mrb[0].mxu0 %v4510
    %v4688 = vpop.f32.mrb[0].mxu0
    %v4689 = vadd.f32 %v4546, %v4688
    %v4690 = vpop.f32.mrb[0].mxu0
    %4691 = vmatprep.mubr.f32.mxu0 0.0
    %4692 = vmatmul.mubr.f32.gmra.mrb[0].mxu0 %v4511
    %v4693 = vpop.f32.mrb[0].mxu0
    %v4694 = vadd.f32 %v4546, %v4693
    %v4695 = vpop.f32.mrb[0].mxu0
    %4696 = vmatprep.mubr.f32.mxu0 0.0
    %4697 = vmatmul.mubr.f32.gmra.mrb[0].mxu0 %v4512
    %v4698 = vpop.f32.mrb[0].mxu0
    %v4699 = vadd.f32 %v4546, %v4698
    %v4700 = vpop.f32.mrb[0].mxu0
    %4701 = vmatprep.mubr.f32.mxu0 0.0
    %4702 = vmatmul.mubr.f32.gmra.mrb[0].mxu0 %v4513
    %v4703 = vpop.f32.mrb[0].mxu0
    %v4704 = vadd.f32 %v4546, %v4703
    %v4705 = vpop.f32.mrb[0].mxu0
    %4706 = vmatprep.mubr.f32.mxu0 0.0
    %4707 = vmatmul.mubr.f32.gmra.mrb[0].mxu0 %v4514
    %v4708 = vpop.f32.mrb[0].mxu0
    %v4709 = vadd.f32 %v4546, %v4708
    %v4710 = vpop.f32.mrb[0].mxu0
    %4711 = vmatprep.mubr.f32.mxu0 0.0
    %4712 = vmatmul.mubr.f32.gmra.mrb[0].mxu0 %v4515
    %v4713 = vpop.f32.mrb[0].mxu0
    %v4714 = vadd.f32 %v4546, %v4713
    %v4715 = vpop.f32.mrb[0].mxu0
    %4716 = vmatprep.mubr.f32.mxu0 0.0
    %4717 = vmatmul.mubr.f32.gmra.mrb[0].mxu0 %v4516
    %v4718 = vpop.f32.mrb[0].mxu0
    %v4719 = vadd.f32 %v4546, %v4718
    %v4720 = vpop.f32.mrb[0].mxu0
    %4721 = vmatprep.mubr.f32.mxu0 0.0
    %4722 = vmatmul.mubr.f32.gmra.mrb[0].mxu0 %v4517
    %v4723 = vpop.f32.mrb[0].mxu0
    %v4724 = vadd.f32 %v4546, %v4723
    %v4725 = vpop.f32.mrb[0].mxu0
    %4726 = vmatprep.mubr.f32.mxu0 0.0
    %4727 = vmatmul.mubr.f32.gmra.mrb[0].mxu0 %v4518
    %v4728 = vpop.f32.mrb[0].mxu0
    %v4729 = vadd.f32 %v4546, %v4728
    %v4730 = vpop.f32.mrb[0].mxu0
    %4731 = vmatprep.mubr.f32.mxu0 0.0
    %4732 = vmatmul.mubr.f32.gmra.mrb[0].mxu0 %v4519
    %v4733 = vpop.f32.mrb[0].mxu0
    %v4734 = vadd.f32 %v4546, %v4733
    %v4735 = vpop.f32.mrb[0].mxu0
    %4736 = vmatprep.mubr.f32.mxu0 0.0
    %4737 = vmatmul.mubr.f32.gmra.mrb[0].mxu0 %v4520
    %v4738 = vpop.f32.mrb[0].mxu0
    %v4739 = vadd.f32 %v4546, %v4738
    %v4740 = vpop.f32.mrb[0].mxu0
    %4741 = vmatprep.mubr.f32.mxu0 0.0
    %4742 = vmatmul.mubr.f32.gmra.mrb[0].mxu0 %v4521
    %v4743 = vpop.f32.mrb[0].mxu0
    %v4744 = vadd.f32 %v4546, %v4743
    %v4745 = vpop.f32.mrb[0].mxu0
    %4746 = vmatprep.mubr.f32.mxu0 0.0
    %4747 = vmatmul.mubr.f32.gmra.mrb[0].mxu0 %v4522
    %v4748 = vpop.f32.mrb[0].mxu0
    %v4749 = vadd.f32 %v4546, %v4748
    %v4750 = vpop.f32.mrb[0].mxu0
    %4751 = vmatprep.mubr.f32.mxu0 0.0
    %4752 = vmatmul.mubr.f32.gmra.mrb[0].mxu0 %v4523
    %v4753 = vpop.f32.mrb[0].mxu0
    %v4754 = vadd.f32 %v4546, %v4753
    %v4755 = vpop.f32.mrb[0].mxu0
    %4756 = vmatprep.mubr.f32.mxu0 0.0
    %4757 = vmatmul.mubr.f32.gmra.mrb[0].mxu0 %v4524
    %v4758 = vpop.f32.mrb[0].mxu0
    %v4759 = vadd.f32 %v4546, %v4758
    %v4760 = vpop.f32.mrb[0].mxu0
    %4761 = vmatprep.mubr.f32.mxu0 0.0
    %4762 = vmatmul.mubr.f32.gmra.mrb[0].mxu0 %v4525
    %v4763 = vpop.f32.mrb[0].mxu0
    %v4764 = vadd.f32 %v4546, %v4763
    %v4765 = vpop.f32.mrb[0].mxu0
    %4766 = vmatprep.mubr.f32.mxu0 0.0
    %4767 = vmatmul.mubr.f32.gmra.mrb[0].mxu0 %v4526
    %v4768 = vpop.f32.mrb[0].mxu0
    %v4769 = vadd.f32 %v4546, %v4768
    %v4770 = vpop.f32.mrb[0].mxu0
    %4771 = vdwg.mxu0
    %v4772 = vtanh.pop %v4614
    %v4773 = vtanh.pop %v4619
    %v4774 = vtanh.pop %v4624
    %v4775 = vtanh.pop %v4629
    %v4776 = vtanh.pop %v4634
    %v4777 = vtanh.pop %v4639
    %v4778 = vtanh.pop %v4644
    %v4779 = vtanh.pop %v4649
    %v4780 = vtanh.pop %v4654
    %v4781 = vtanh.pop %v4659
    %v4782 = vtanh.pop %v4664
    %v4783 = vtanh.pop %v4669
    %v4784 = vtanh.pop %v4674
    %v4785 = vtanh.pop %v4679
    %v4786 = vtanh.pop %v4684
    %v4787 = vtanh.pop %v4689
    %v4788 = vtanh.pop %v4694
    %v4789 = vtanh.pop %v4699
    %v4790 = vtanh.pop %v4704
    %v4791 = vtanh.pop %v4709
    %v4792 = vtanh.pop %v4714
    %v4793 = vtanh.pop %v4719
    %v4794 = vtanh.pop %v4724
    %v4795 = vtanh.pop %v4729
    %v4796 = vtanh.pop %v4734
    %v4797 = vtanh.pop %v4739
    %v4798 = vtanh.pop %v4744
    %v4799 = vtanh.pop %v4749
    %v4800 = vtanh.pop %v4754
    %v4801 = vtanh.pop %v4759
    %v4802 = vtanh.pop %v4764
    %v4803 = vtanh.pop %v4769
    %s4804 = scalar_lea.vmem [#allocation5], 128
    %v4805 = vld [vmem:[%s4804] sm:$0xff]
    %v4806 = vld [vmem:[%s4804 + $0x8] sm:$0xff]
    %v4807 = vld [vmem:[%s4804 + $0x10] sm:$0xff]
    %v4808 = vld [vmem:[%s4804 + $0x18] sm:$0xff]
    %v4809 = vld [vmem:[%s4804 + $0x20] sm:$0xff]
    %v4810 = vld [vmem:[%s4804 + $0x28] sm:$0xff]
    %v4811 = vld [vmem:[%s4804 + $0x30] sm:$0xff]
    %v4812 = vld [vmem:[%s4804 + $0x38] sm:$0xff]
    %v4813 = vld [vmem:[%s4804 + $0x40] sm:$0xff]
    %v4814 = vld [vmem:[%s4804 + $0x48] sm:$0xff]
    %v4815 = vld [vmem:[%s4804 + $0x50] sm:$0xff]
    %v4816 = vld [vmem:[%s4804 + $0x58] sm:$0xff]
    %v4817 = vld [vmem:[%s4804 + $0x60] sm:$0xff]
    %v4818 = vld [vmem:[%s4804 + $0x68] sm:$0xff]
    %v4819 = vld [vmem:[%s4804 + $0x70] sm:$0xff]
    %v4820 = vld [vmem:[%s4804 + $0x78] sm:$0xff]
    %v4821 = vlaneseq
    %v4822 = vshrl.u32 %v4821, 7
    %v4823 = vsub.s32 2, %v4822
    %v4824 = vrot.slane %v113, %v4823
    %4825 = vmatprep.subr.mxu0 0.0
    %4826 = vmatpush1.msra.mxu0 %v4805
    %4827 = vmatprep.subr.mxu0 0.0
    %4828 = vmatpush1.msra.mxu0 %v4806
    %4829 = vmatprep.subr.mxu0 0.0
    %4830 = vmatpush1.msra.mxu0 %v4807
    %4831 = vmatprep.subr.mxu0 0.0
    %4832 = vmatpush1.msra.mxu0 %v4808
    %4833 = vmatprep.subr.mxu0 0.0
    %4834 = vmatpush1.msra.mxu0 %v4809
    %4835 = vmatprep.subr.mxu0 0.0
    %4836 = vmatpush1.msra.mxu0 %v4810
    %4837 = vmatprep.subr.mxu0 0.0
    %4838 = vmatpush1.msra.mxu0 %v4811
    %4839 = vmatprep.subr.mxu0 0.0
    %4840 = vmatpush1.msra.mxu0 %v4812
    %4841 = vmatprep.subr.mxu0 0.0
    %4842 = vmatpush1.msra.mxu0 %v4813
    %4843 = vmatprep.subr.mxu0 0.0
    %4844 = vmatpush1.msra.mxu0 %v4814
    %4845 = vmatprep.subr.mxu0 0.0
    %4846 = vmatpush1.msra.mxu0 %v4815
    %4847 = vmatprep.subr.mxu0 0.0
    %4848 = vmatpush1.msra.mxu0 %v4816
    %4849 = vmatprep.subr.mxu0 0.0
    %4850 = vmatpush1.msra.mxu0 %v4817
    %4851 = vmatprep.subr.mxu0 0.0
    %4852 = vmatpush1.msra.mxu0 %v4818
    %4853 = vmatprep.subr.mxu0 0.0
    %4854 = vmatpush1.msra.mxu0 %v4819
    %4855 = vmatprep.subr.mxu0 0.0
    %4856 = vmatpush1.msra.mxu0 %v4820
    %4857 = vmatprep.subr.mxu0 0.0
    %4858 = vmatpush1.msra.mxu0 0.0
    %4859 = vmatprep.subr.mxu0 0.0
    %4860 = vmatpush1.msra.mxu0 0.0
    %4861 = vmatprep.subr.mxu0 0.0
    %4862 = vmatpush1.msra.mxu0 0.0
    %4863 = vmatprep.subr.mxu0 0.0
    %4864 = vmatpush1.msra.mxu0 0.0
    %4865 = vmatprep.subr.mxu0 0.0
    %4866 = vmatpush1.msra.mxu0 0.0
    %4867 = vmatprep.subr.mxu0 0.0
    %4868 = vmatpush1.msra.mxu0 0.0
    %4869 = vmatprep.subr.mxu0 0.0
    %4870 = vmatpush1.msra.mxu0 0.0
    %4871 = vmatprep.subr.mxu0 0.0
    %4872 = vmatpush1.msra.mxu0 0.0
    %4873 = vmatprep.subr.mxu0 0.0
    %4874 = vmatpush1.msra.mxu0 0.0
    %4875 = vmatprep.subr.mxu0 0.0
    %4876 = vmatpush1.msra.mxu0 0.0
    %4877 = vmatprep.subr.mxu0 0.0
    %4878 = vmatpush1.msra.mxu0 0.0
    %4879 = vmatprep.subr.mxu0 0.0
    %4880 = vmatpush1.msra.mxu0 0.0
    %4881 = vmatprep.subr.mxu0 0.0
    %4882 = vmatpush1.msra.mxu0 0.0
    %4883 = vmatprep.subr.mxu0 0.0
    %4884 = vmatpush1.msra.mxu0 0.0
    %4885 = vmatprep.subr.mxu0 0.0
    %4886 = vmatpush1.msra.mxu0 0.0
    %4887 = vmatprep.subr.mxu0 0.0
    %4888 = vmatpush1.msra.mxu0 0.0
    %4889 = vmatprep.mubr.f32.mxu0 0.0
    %4890 = vmatmul.mubr.f32.gmra.mrb[0].mxu0 %v4772
    %v4891 = vpop.f32.mrb[0].mxu0
    %v4892 = vadd.f32 %v4824, %v4891
    %v4893 = vpop.f32.mrb[0].mxu0
    %4894 = vmatprep.mubr.f32.mxu0 0.0
    %4895 = vmatmul.mubr.f32.gmra.mrb[0].mxu0 %v4773
    %v4896 = vpop.f32.mrb[0].mxu0
    %v4897 = vadd.f32 %v4824, %v4896
    %v4898 = vpop.f32.mrb[0].mxu0
    %4899 = vmatprep.mubr.f32.mxu0 0.0
    %4900 = vmatmul.mubr.f32.gmra.mrb[0].mxu0 %v4774
    %v4901 = vpop.f32.mrb[0].mxu0
    %v4902 = vadd.f32 %v4824, %v4901
    %v4903 = vpop.f32.mrb[0].mxu0
    %4904 = vmatprep.mubr.f32.mxu0 0.0
    %4905 = vmatmul.mubr.f32.gmra.mrb[0].mxu0 %v4775
    %v4906 = vpop.f32.mrb[0].mxu0
    %v4907 = vadd.f32 %v4824, %v4906
    %v4908 = vpop.f32.mrb[0].mxu0
    %4909 = vmatprep.mubr.f32.mxu0 0.0
    %4910 = vmatmul.mubr.f32.gmra.mrb[0].mxu0 %v4776
    %v4911 = vpop.f32.mrb[0].mxu0
    %v4912 = vadd.f32 %v4824, %v4911
    %v4913 = vpop.f32.mrb[0].mxu0
    %4914 = vmatprep.mubr.f32.mxu0 0.0
    %4915 = vmatmul.mubr.f32.gmra.mrb[0].mxu0 %v4777
    %v4916 = vpop.f32.mrb[0].mxu0
    %v4917 = vadd.f32 %v4824, %v4916
    %v4918 = vpop.f32.mrb[0].mxu0
    %4919 = vmatprep.mubr.f32.mxu0 0.0
    %4920 = vmatmul.mubr.f32.gmra.mrb[0].mxu0 %v4778
    %v4921 = vpop.f32.mrb[0].mxu0
    %v4922 = vadd.f32 %v4824, %v4921
    %v4923 = vpop.f32.mrb[0].mxu0
    %4924 = vmatprep.mubr.f32.mxu0 0.0
    %4925 = vmatmul.mubr.f32.gmra.mrb[0].mxu0 %v4779
    %v4926 = vpop.f32.mrb[0].mxu0
    %v4927 = vadd.f32 %v4824, %v4926
    %v4928 = vpop.f32.mrb[0].mxu0
    %4929 = vmatprep.mubr.f32.mxu0 0.0
    %4930 = vmatmul.mubr.f32.gmra.mrb[0].mxu0 %v4780
    %v4931 = vpop.f32.mrb[0].mxu0
    %v4932 = vadd.f32 %v4824, %v4931
    %v4933 = vpop.f32.mrb[0].mxu0
    %4934 = vmatprep.mubr.f32.mxu0 0.0
    %4935 = vmatmul.mubr.f32.gmra.mrb[0].mxu0 %v4781
    %v4936 = vpop.f32.mrb[0].mxu0
    %v4937 = vadd.f32 %v4824, %v4936
    %v4938 = vpop.f32.mrb[0].mxu0
    %4939 = vmatprep.mubr.f32.mxu0 0.0
    %4940 = vmatmul.mubr.f32.gmra.mrb[0].mxu0 %v4782
    %v4941 = vpop.f32.mrb[0].mxu0
    %v4942 = vadd.f32 %v4824, %v4941
    %v4943 = vpop.f32.mrb[0].mxu0
    %4944 = vmatprep.mubr.f32.mxu0 0.0
    %4945 = vmatmul.mubr.f32.gmra.mrb[0].mxu0 %v4783
    %v4946 = vpop.f32.mrb[0].mxu0
    %v4947 = vadd.f32 %v4824, %v4946
    %v4948 = vpop.f32.mrb[0].mxu0
    %4949 = vmatprep.mubr.f32.mxu0 0.0
    %4950 = vmatmul.mubr.f32.gmra.mrb[0].mxu0 %v4784
    %v4951 = vpop.f32.mrb[0].mxu0
    %v4952 = vadd.f32 %v4824, %v4951
    %v4953 = vpop.f32.mrb[0].mxu0
    %4954 = vmatprep.mubr.f32.mxu0 0.0
    %4955 = vmatmul.mubr.f32.gmra.mrb[0].mxu0 %v4785
    %v4956 = vpop.f32.mrb[0].mxu0
    %v4957 = vadd.f32 %v4824, %v4956
    %v4958 = vpop.f32.mrb[0].mxu0
    %4959 = vmatprep.mubr.f32.mxu0 0.0
    %4960 = vmatmul.mubr.f32.gmra.mrb[0].mxu0 %v4786
    %v4961 = vpop.f32.mrb[0].mxu0
    %v4962 = vadd.f32 %v4824, %v4961
    %v4963 = vpop.f32.mrb[0].mxu0
    %4964 = vmatprep.mubr.f32.mxu0 0.0
    %4965 = vmatmul.mubr.f32.gmra.mrb[0].mxu0 %v4787
    %v4966 = vpop.f32.mrb[0].mxu0
    %v4967 = vadd.f32 %v4824, %v4966
    %v4968 = vpop.f32.mrb[0].mxu0
    %4969 = vmatprep.mubr.f32.mxu0 0.0
    %4970 = vmatmul.mubr.f32.gmra.mrb[0].mxu0 %v4788
    %v4971 = vpop.f32.mrb[0].mxu0
    %v4972 = vadd.f32 %v4824, %v4971
    %v4973 = vpop.f32.mrb[0].mxu0
    %4974 = vmatprep.mubr.f32.mxu0 0.0
    %4975 = vmatmul.mubr.f32.gmra.mrb[0].mxu0 %v4789
    %v4976 = vpop.f32.mrb[0].mxu0
    %v4977 = vadd.f32 %v4824, %v4976
    %v4978 = vpop.f32.mrb[0].mxu0
    %4979 = vmatprep.mubr.f32.mxu0 0.0
    %4980 = vmatmul.mubr.f32.gmra.mrb[0].mxu0 %v4790
    %v4981 = vpop.f32.mrb[0].mxu0
    %v4982 = vadd.f32 %v4824, %v4981
    %v4983 = vpop.f32.mrb[0].mxu0
    %4984 = vmatprep.mubr.f32.mxu0 0.0
    %4985 = vmatmul.mubr.f32.gmra.mrb[0].mxu0 %v4791
    %v4986 = vpop.f32.mrb[0].mxu0
    %v4987 = vadd.f32 %v4824, %v4986
    %v4988 = vpop.f32.mrb[0].mxu0
    %4989 = vmatprep.mubr.f32.mxu0 0.0
    %4990 = vmatmul.mubr.f32.gmra.mrb[0].mxu0 %v4792
    %v4991 = vpop.f32.mrb[0].mxu0
    %v4992 = vadd.f32 %v4824, %v4991
    %v4993 = vpop.f32.mrb[0].mxu0
    %4994 = vmatprep.mubr.f32.mxu0 0.0
    %4995 = vmatmul.mubr.f32.gmra.mrb[0].mxu0 %v4793
    %v4996 = vpop.f32.mrb[0].mxu0
    %v4997 = vadd.f32 %v4824, %v4996
    %v4998 = vpop.f32.mrb[0].mxu0
    %4999 = vmatprep.mubr.f32.mxu0 0.0
    %5000 = vmatmul.mubr.f32.gmra.mrb[0].mxu0 %v4794
    %v5001 = vpop.f32.mrb[0].mxu0
    %v5002 = vadd.f32 %v4824, %v5001
    %v5003 = vpop.f32.mrb[0].mxu0
    %5004 = vmatprep.mubr.f32.mxu0 0.0
    %5005 = vmatmul.mubr.f32.gmra.mrb[0].mxu0 %v4795
    %v5006 = vpop.f32.mrb[0].mxu0
    %v5007 = vadd.f32 %v4824, %v5006
    %v5008 = vpop.f32.mrb[0].mxu0
    %5009 = vmatprep.mubr.f32.mxu0 0.0
    %5010 = vmatmul.mubr.f32.gmra.mrb[0].mxu0 %v4796
    %v5011 = vpop.f32.mrb[0].mxu0
    %v5012 = vadd.f32 %v4824, %v5011
    %v5013 = vpop.f32.mrb[0].mxu0
    %5014 = vmatprep.mubr.f32.mxu0 0.0
    %5015 = vmatmul.mubr.f32.gmra.mrb[0].mxu0 %v4797
    %v5016 = vpop.f32.mrb[0].mxu0
    %v5017 = vadd.f32 %v4824, %v5016
    %v5018 = vpop.f32.mrb[0].mxu0
    %5019 = vmatprep.mubr.f32.mxu0 0.0
    %5020 = vmatmul.mubr.f32.gmra.mrb[0].mxu0 %v4798
    %v5021 = vpop.f32.mrb[0].mxu0
    %v5022 = vadd.f32 %v4824, %v5021
    %v5023 = vpop.f32.mrb[0].mxu0
    %5024 = vmatprep.mubr.f32.mxu0 0.0
    %5025 = vmatmul.mubr.f32.gmra.mrb[0].mxu0 %v4799
    %v5026 = vpop.f32.mrb[0].mxu0
    %v5027 = vadd.f32 %v4824, %v5026
    %v5028 = vpop.f32.mrb[0].mxu0
    %5029 = vmatprep.mubr.f32.mxu0 0.0
    %5030 = vmatmul.mubr.f32.gmra.mrb[0].mxu0 %v4800
    %v5031 = vpop.f32.mrb[0].mxu0
    %v5032 = vadd.f32 %v4824, %v5031
    %v5033 = vpop.f32.mrb[0].mxu0
    %5034 = vmatprep.mubr.f32.mxu0 0.0
    %5035 = vmatmul.mubr.f32.gmra.mrb[0].mxu0 %v4801
    %v5036 = vpop.f32.mrb[0].mxu0
    %v5037 = vadd.f32 %v4824, %v5036
    %v5038 = vpop.f32.mrb[0].mxu0
    %5039 = vmatprep.mubr.f32.mxu0 0.0
    %5040 = vmatmul.mubr.f32.gmra.mrb[0].mxu0 %v4802
    %v5041 = vpop.f32.mrb[0].mxu0
    %v5042 = vadd.f32 %v4824, %v5041
    %v5043 = vpop.f32.mrb[0].mxu0
    %5044 = vmatprep.mubr.f32.mxu0 0.0
    %5045 = vmatmul.mubr.f32.gmra.mrb[0].mxu0 %v4803
    %v5046 = vpop.f32.mrb[0].mxu0
    %v5047 = vadd.f32 %v4824, %v5046
    %v5048 = vpop.f32.mrb[0].mxu0
    %5049 = vdwg.mxu0
    %v5050 = vtanh.pop %v4892
    %v5051 = vtanh.pop %v4897
    %v5052 = vtanh.pop %v4902
    %v5053 = vtanh.pop %v4907
    %v5054 = vtanh.pop %v4912
    %v5055 = vtanh.pop %v4917
    %v5056 = vtanh.pop %v4922
    %v5057 = vtanh.pop %v4927
    %v5058 = vtanh.pop %v4932
    %v5059 = vtanh.pop %v4937
    %v5060 = vtanh.pop %v4942
    %v5061 = vtanh.pop %v4947
    %v5062 = vtanh.pop %v4952
    %v5063 = vtanh.pop %v4957
    %v5064 = vtanh.pop %v4962
    %v5065 = vtanh.pop %v4967
    %v5066 = vtanh.pop %v4972
    %v5067 = vtanh.pop %v4977
    %v5068 = vtanh.pop %v4982
    %v5069 = vtanh.pop %v4987
    %v5070 = vtanh.pop %v4992
    %v5071 = vtanh.pop %v4997
    %v5072 = vtanh.pop %v5002
    %v5073 = vtanh.pop %v5007
    %v5074 = vtanh.pop %v5012
    %v5075 = vtanh.pop %v5017
    %v5076 = vtanh.pop %v5022
    %v5077 = vtanh.pop %v5027
    %v5078 = vtanh.pop %v5032
    %v5079 = vtanh.pop %v5037
    %v5080 = vtanh.pop %v5042
    %v5081 = vtanh.pop %v5047
    %s5082 = scalar_lea.vmem [#allocation5], 256
    %v5083 = vld [vmem:[%s5082] sm:$0xff]
    %v5084 = vld [vmem:[%s5082 + $0x8] sm:$0xff]
    %v5085 = vld [vmem:[%s5082 + $0x10] sm:$0xff]
    %v5086 = vld [vmem:[%s5082 + $0x18] sm:$0xff]
    %v5087 = vld [vmem:[%s5082 + $0x20] sm:$0xff]
    %v5088 = vld [vmem:[%s5082 + $0x28] sm:$0xff]
    %v5089 = vld [vmem:[%s5082 + $0x30] sm:$0xff]
    %v5090 = vld [vmem:[%s5082 + $0x38] sm:$0xff]
    %v5091 = vld [vmem:[%s5082 + $0x40] sm:$0xff]
    %v5092 = vld [vmem:[%s5082 + $0x48] sm:$0xff]
    %v5093 = vld [vmem:[%s5082 + $0x50] sm:$0xff]
    %v5094 = vld [vmem:[%s5082 + $0x58] sm:$0xff]
    %v5095 = vld [vmem:[%s5082 + $0x60] sm:$0xff]
    %v5096 = vld [vmem:[%s5082 + $0x68] sm:$0xff]
    %v5097 = vld [vmem:[%s5082 + $0x70] sm:$0xff]
    %v5098 = vld [vmem:[%s5082 + $0x78] sm:$0xff]
    %v5099 = vlaneseq
    %v5100 = vshrl.u32 %v5099, 7
    %v5101 = vsub.s32 3, %v5100
    %v5102 = vrot.slane %v113, %v5101
    %5103 = vmatprep.subr.mxu0 0.0
    %5104 = vmatpush1.msra.mxu0 %v5083
    %5105 = vmatprep.subr.mxu0 0.0
    %5106 = vmatpush1.msra.mxu0 %v5084
    %5107 = vmatprep.subr.mxu0 0.0
    %5108 = vmatpush1.msra.mxu0 %v5085
    %5109 = vmatprep.subr.mxu0 0.0
    %5110 = vmatpush1.msra.mxu0 %v5086
    %5111 = vmatprep.subr.mxu0 0.0
    %5112 = vmatpush1.msra.mxu0 %v5087
    %5113 = vmatprep.subr.mxu0 0.0
    %5114 = vmatpush1.msra.mxu0 %v5088
    %5115 = vmatprep.subr.mxu0 0.0
    %5116 = vmatpush1.msra.mxu0 %v5089
    %5117 = vmatprep.subr.mxu0 0.0
    %5118 = vmatpush1.msra.mxu0 %v5090
    %5119 = vmatprep.subr.mxu0 0.0
    %5120 = vmatpush1.msra.mxu0 %v5091
    %5121 = vmatprep.subr.mxu0 0.0
    %5122 = vmatpush1.msra.mxu0 %v5092
    %5123 = vmatprep.subr.mxu0 0.0
    %5124 = vmatpush1.msra.mxu0 %v5093
    %5125 = vmatprep.subr.mxu0 0.0
    %5126 = vmatpush1.msra.mxu0 %v5094
    %5127 = vmatprep.subr.mxu0 0.0
    %5128 = vmatpush1.msra.mxu0 %v5095
    %5129 = vmatprep.subr.mxu0 0.0
    %5130 = vmatpush1.msra.mxu0 %v5096
    %5131 = vmatprep.subr.mxu0 0.0
    %5132 = vmatpush1.msra.mxu0 %v5097
    %5133 = vmatprep.subr.mxu0 0.0
    %5134 = vmatpush1.msra.mxu0 %v5098
    %5135 = vmatprep.subr.mxu0 0.0
    %5136 = vmatpush1.msra.mxu0 0.0
    %5137 = vmatprep.subr.mxu0 0.0
    %5138 = vmatpush1.msra.mxu0 0.0
    %5139 = vmatprep.subr.mxu0 0.0
    %5140 = vmatpush1.msra.mxu0 0.0
    %5141 = vmatprep.subr.mxu0 0.0
    %5142 = vmatpush1.msra.mxu0 0.0
    %5143 = vmatprep.subr.mxu0 0.0
    %5144 = vmatpush1.msra.mxu0 0.0
    %5145 = vmatprep.subr.mxu0 0.0
    %5146 = vmatpush1.msra.mxu0 0.0
    %5147 = vmatprep.subr.mxu0 0.0
    %5148 = vmatpush1.msra.mxu0 0.0
    %5149 = vmatprep.subr.mxu0 0.0
    %5150 = vmatpush1.msra.mxu0 0.0
    %5151 = vmatprep.subr.mxu0 0.0
    %5152 = vmatpush1.msra.mxu0 0.0
    %5153 = vmatprep.subr.mxu0 0.0
    %5154 = vmatpush1.msra.mxu0 0.0
    %5155 = vmatprep.subr.mxu0 0.0
    %5156 = vmatpush1.msra.mxu0 0.0
    %5157 = vmatprep.subr.mxu0 0.0
    %5158 = vmatpush1.msra.mxu0 0.0
    %5159 = vmatprep.subr.mxu0 0.0
    %5160 = vmatpush1.msra.mxu0 0.0
    %5161 = vmatprep.subr.mxu0 0.0
    %5162 = vmatpush1.msra.mxu0 0.0
    %5163 = vmatprep.subr.mxu0 0.0
    %5164 = vmatpush1.msra.mxu0 0.0
    %5165 = vmatprep.subr.mxu0 0.0
    %5166 = vmatpush1.msra.mxu0 0.0
    %5167 = vmatprep.mubr.f32.mxu0 0.0
    %5168 = vmatmul.mubr.f32.gmra.mrb[0].mxu0 %v5050
    %v5169 = vpop.f32.mrb[0].mxu0
    %v5170 = vadd.f32 %v5102, %v5169
    %v5171 = vpop.f32.mrb[0].mxu0
    %5172 = vmatprep.mubr.f32.mxu0 0.0
    %5173 = vmatmul.mubr.f32.gmra.mrb[0].mxu0 %v5051
    %v5174 = vpop.f32.mrb[0].mxu0
    %v5175 = vadd.f32 %v5102, %v5174
    %v5176 = vpop.f32.mrb[0].mxu0
    %5177 = vmatprep.mubr.f32.mxu0 0.0
    %5178 = vmatmul.mubr.f32.gmra.mrb[0].mxu0 %v5052
    %v5179 = vpop.f32.mrb[0].mxu0
    %v5180 = vadd.f32 %v5102, %v5179
    %v5181 = vpop.f32.mrb[0].mxu0
    %5182 = vmatprep.mubr.f32.mxu0 0.0
    %5183 = vmatmul.mubr.f32.gmra.mrb[0].mxu0 %v5053
    %v5184 = vpop.f32.mrb[0].mxu0
    %v5185 = vadd.f32 %v5102, %v5184
    %v5186 = vpop.f32.mrb[0].mxu0
    %5187 = vmatprep.mubr.f32.mxu0 0.0
    %5188 = vmatmul.mubr.f32.gmra.mrb[0].mxu0 %v5054
    %v5189 = vpop.f32.mrb[0].mxu0
    %v5190 = vadd.f32 %v5102, %v5189
    %v5191 = vpop.f32.mrb[0].mxu0
    %5192 = vmatprep.mubr.f32.mxu0 0.0
    %5193 = vmatmul.mubr.f32.gmra.mrb[0].mxu0 %v5055
    %v5194 = vpop.f32.mrb[0].mxu0
    %v5195 = vadd.f32 %v5102, %v5194
    %v5196 = vpop.f32.mrb[0].mxu0
    %5197 = vmatprep.mubr.f32.mxu0 0.0
    %5198 = vmatmul.mubr.f32.gmra.mrb[0].mxu0 %v5056
    %v5199 = vpop.f32.mrb[0].mxu0
    %v5200 = vadd.f32 %v5102, %v5199
    %v5201 = vpop.f32.mrb[0].mxu0
    %5202 = vmatprep.mubr.f32.mxu0 0.0
    %5203 = vmatmul.mubr.f32.gmra.mrb[0].mxu0 %v5057
    %v5204 = vpop.f32.mrb[0].mxu0
    %v5205 = vadd.f32 %v5102, %v5204
    %v5206 = vpop.f32.mrb[0].mxu0
    %5207 = vmatprep.mubr.f32.mxu0 0.0
    %5208 = vmatmul.mubr.f32.gmra.mrb[0].mxu0 %v5058
    %v5209 = vpop.f32.mrb[0].mxu0
    %v5210 = vadd.f32 %v5102, %v5209
    %v5211 = vpop.f32.mrb[0].mxu0
    %5212 = vmatprep.mubr.f32.mxu0 0.0
    %5213 = vmatmul.mubr.f32.gmra.mrb[0].mxu0 %v5059
    %v5214 = vpop.f32.mrb[0].mxu0
    %v5215 = vadd.f32 %v5102, %v5214
    %v5216 = vpop.f32.mrb[0].mxu0
    %5217 = vmatprep.mubr.f32.mxu0 0.0
    %5218 = vmatmul.mubr.f32.gmra.mrb[0].mxu0 %v5060
    %v5219 = vpop.f32.mrb[0].mxu0
    %v5220 = vadd.f32 %v5102, %v5219
    %v5221 = vpop.f32.mrb[0].mxu0
    %5222 = vmatprep.mubr.f32.mxu0 0.0
    %5223 = vmatmul.mubr.f32.gmra.mrb[0].mxu0 %v5061
    %v5224 = vpop.f32.mrb[0].mxu0
    %v5225 = vadd.f32 %v5102, %v5224
    %v5226 = vpop.f32.mrb[0].mxu0
    %5227 = vmatprep.mubr.f32.mxu0 0.0
    %5228 = vmatmul.mubr.f32.gmra.mrb[0].mxu0 %v5062
    %v5229 = vpop.f32.mrb[0].mxu0
    %v5230 = vadd.f32 %v5102, %v5229
    %v5231 = vpop.f32.mrb[0].mxu0
    %5232 = vmatprep.mubr.f32.mxu0 0.0
    %5233 = vmatmul.mubr.f32.gmra.mrb[0].mxu0 %v5063
    %v5234 = vpop.f32.mrb[0].mxu0
    %v5235 = vadd.f32 %v5102, %v5234
    %v5236 = vpop.f32.mrb[0].mxu0
    %5237 = vmatprep.mubr.f32.mxu0 0.0
    %5238 = vmatmul.mubr.f32.gmra.mrb[0].mxu0 %v5064
    %v5239 = vpop.f32.mrb[0].mxu0
    %v5240 = vadd.f32 %v5102, %v5239
    %v5241 = vpop.f32.mrb[0].mxu0
    %5242 = vmatprep.mubr.f32.mxu0 0.0
    %5243 = vmatmul.mubr.f32.gmra.mrb[0].mxu0 %v5065
    %v5244 = vpop.f32.mrb[0].mxu0
    %v5245 = vadd.f32 %v5102, %v5244
    %v5246 = vpop.f32.mrb[0].mxu0
    %5247 = vmatprep.mubr.f32.mxu0 0.0
    %5248 = vmatmul.mubr.f32.gmra.mrb[0].mxu0 %v5066
    %v5249 = vpop.f32.mrb[0].mxu0
    %v5250 = vadd.f32 %v5102, %v5249
    %v5251 = vpop.f32.mrb[0].mxu0
    %5252 = vmatprep.mubr.f32.mxu0 0.0
    %5253 = vmatmul.mubr.f32.gmra.mrb[0].mxu0 %v5067
    %v5254 = vpop.f32.mrb[0].mxu0
    %v5255 = vadd.f32 %v5102, %v5254
    %v5256 = vpop.f32.mrb[0].mxu0
    %5257 = vmatprep.mubr.f32.mxu0 0.0
    %5258 = vmatmul.mubr.f32.gmra.mrb[0].mxu0 %v5068
    %v5259 = vpop.f32.mrb[0].mxu0
    %v5260 = vadd.f32 %v5102, %v5259
    %v5261 = vpop.f32.mrb[0].mxu0
    %5262 = vmatprep.mubr.f32.mxu0 0.0
    %5263 = vmatmul.mubr.f32.gmra.mrb[0].mxu0 %v5069
    %v5264 = vpop.f32.mrb[0].mxu0
    %v5265 = vadd.f32 %v5102, %v5264
    %v5266 = vpop.f32.mrb[0].mxu0
    %5267 = vmatprep.mubr.f32.mxu0 0.0
    %5268 = vmatmul.mubr.f32.gmra.mrb[0].mxu0 %v5070
    %v5269 = vpop.f32.mrb[0].mxu0
    %v5270 = vadd.f32 %v5102, %v5269
    %v5271 = vpop.f32.mrb[0].mxu0
    %5272 = vmatprep.mubr.f32.mxu0 0.0
    %5273 = vmatmul.mubr.f32.gmra.mrb[0].mxu0 %v5071
    %v5274 = vpop.f32.mrb[0].mxu0
    %v5275 = vadd.f32 %v5102, %v5274
    %v5276 = vpop.f32.mrb[0].mxu0
    %5277 = vmatprep.mubr.f32.mxu0 0.0
    %5278 = vmatmul.mubr.f32.gmra.mrb[0].mxu0 %v5072
    %v5279 = vpop.f32.mrb[0].mxu0
    %v5280 = vadd.f32 %v5102, %v5279
    %v5281 = vpop.f32.mrb[0].mxu0
    %5282 = vmatprep.mubr.f32.mxu0 0.0
    %5283 = vmatmul.mubr.f32.gmra.mrb[0].mxu0 %v5073
    %v5284 = vpop.f32.mrb[0].mxu0
    %v5285 = vadd.f32 %v5102, %v5284
    %v5286 = vpop.f32.mrb[0].mxu0
    %5287 = vmatprep.mubr.f32.mxu0 0.0
    %5288 = vmatmul.mubr.f32.gmra.mrb[0].mxu0 %v5074
    %v5289 = vpop.f32.mrb[0].mxu0
    %v5290 = vadd.f32 %v5102, %v5289
    %v5291 = vpop.f32.mrb[0].mxu0
    %5292 = vmatprep.mubr.f32.mxu0 0.0
    %5293 = vmatmul.mubr.f32.gmra.mrb[0].mxu0 %v5075
    %v5294 = vpop.f32.mrb[0].mxu0
    %v5295 = vadd.f32 %v5102, %v5294
    %v5296 = vpop.f32.mrb[0].mxu0
    %5297 = vmatprep.mubr.f32.mxu0 0.0
    %5298 = vmatmul.mubr.f32.gmra.mrb[0].mxu0 %v5076
    %v5299 = vpop.f32.mrb[0].mxu0
    %v5300 = vadd.f32 %v5102, %v5299
    %v5301 = vpop.f32.mrb[0].mxu0
    %5302 = vmatprep.mubr.f32.mxu0 0.0
    %5303 = vmatmul.mubr.f32.gmra.mrb[0].mxu0 %v5077
    %v5304 = vpop.f32.mrb[0].mxu0
    %v5305 = vadd.f32 %v5102, %v5304
    %v5306 = vpop.f32.mrb[0].mxu0
    %5307 = vmatprep.mubr.f32.mxu0 0.0
    %5308 = vmatmul.mubr.f32.gmra.mrb[0].mxu0 %v5078
    %v5309 = vpop.f32.mrb[0].mxu0
    %v5310 = vadd.f32 %v5102, %v5309
    %v5311 = vpop.f32.mrb[0].mxu0
    %5312 = vmatprep.mubr.f32.mxu0 0.0
    %5313 = vmatmul.mubr.f32.gmra.mrb[0].mxu0 %v5079
    %v5314 = vpop.f32.mrb[0].mxu0
    %v5315 = vadd.f32 %v5102, %v5314
    %v5316 = vpop.f32.mrb[0].mxu0
    %5317 = vmatprep.mubr.f32.mxu0 0.0
    %5318 = vmatmul.mubr.f32.gmra.mrb[0].mxu0 %v5080
    %v5319 = vpop.f32.mrb[0].mxu0
    %v5320 = vadd.f32 %v5102, %v5319
    %v5321 = vpop.f32.mrb[0].mxu0
    %5322 = vmatprep.mubr.f32.mxu0 0.0
    %5323 = vmatmul.mubr.f32.gmra.mrb[0].mxu0 %v5081
    %v5324 = vpop.f32.mrb[0].mxu0
    %v5325 = vadd.f32 %v5102, %v5324
    %v5326 = vpop.f32.mrb[0].mxu0
    %5327 = vdwg.mxu0
    %v5328 = vtanh.pop %v5170
    %v5329 = vtanh.pop %v5175
    %v5330 = vtanh.pop %v5180
    %v5331 = vtanh.pop %v5185
    %v5332 = vtanh.pop %v5190
    %v5333 = vtanh.pop %v5195
    %v5334 = vtanh.pop %v5200
    %v5335 = vtanh.pop %v5205
    %v5336 = vtanh.pop %v5210
    %v5337 = vtanh.pop %v5215
    %v5338 = vtanh.pop %v5220
    %v5339 = vtanh.pop %v5225
    %v5340 = vtanh.pop %v5230
    %v5341 = vtanh.pop %v5235
    %v5342 = vtanh.pop %v5240
    %v5343 = vtanh.pop %v5245
    %v5344 = vtanh.pop %v5250
    %v5345 = vtanh.pop %v5255
    %v5346 = vtanh.pop %v5260
    %v5347 = vtanh.pop %v5265
    %v5348 = vtanh.pop %v5270
    %v5349 = vtanh.pop %v5275
    %v5350 = vtanh.pop %v5280
    %v5351 = vtanh.pop %v5285
    %v5352 = vtanh.pop %v5290
    %v5353 = vtanh.pop %v5295
    %v5354 = vtanh.pop %v5300
    %v5355 = vtanh.pop %v5305
    %v5356 = vtanh.pop %v5310
    %v5357 = vtanh.pop %v5315
    %v5358 = vtanh.pop %v5320
    %v5359 = vtanh.pop %v5325
    %s5360 = scalar_lea.vmem [#allocation5], 384
    %v5361 = vld [vmem:[%s5360] sm:$0xff]
    %v5362 = vld [vmem:[%s5360 + $0x8] sm:$0xff]
    %v5363 = vld [vmem:[%s5360 + $0x10] sm:$0xff]
    %v5364 = vld [vmem:[%s5360 + $0x18] sm:$0xff]
    %v5365 = vld [vmem:[%s5360 + $0x20] sm:$0xff]
    %v5366 = vld [vmem:[%s5360 + $0x28] sm:$0xff]
    %v5367 = vld [vmem:[%s5360 + $0x30] sm:$0xff]
    %v5368 = vld [vmem:[%s5360 + $0x38] sm:$0xff]
    %v5369 = vld [vmem:[%s5360 + $0x40] sm:$0xff]
    %v5370 = vld [vmem:[%s5360 + $0x48] sm:$0xff]
    %v5371 = vld [vmem:[%s5360 + $0x50] sm:$0xff]
    %v5372 = vld [vmem:[%s5360 + $0x58] sm:$0xff]
    %v5373 = vld [vmem:[%s5360 + $0x60] sm:$0xff]
    %v5374 = vld [vmem:[%s5360 + $0x68] sm:$0xff]
    %v5375 = vld [vmem:[%s5360 + $0x70] sm:$0xff]
    %v5376 = vld [vmem:[%s5360 + $0x78] sm:$0xff]
    %v5377 = vlaneseq
    %v5378 = vshrl.u32 %v5377, 7
    %v5379 = vsub.s32 4, %v5378
    %v5380 = vrot.slane %v113, %v5379
    %5381 = vmatprep.subr.mxu0 0.0
    %5382 = vmatpush1.msra.mxu0 %v5361
    %5383 = vmatprep.subr.mxu0 0.0
    %5384 = vmatpush1.msra.mxu0 %v5362
    %5385 = vmatprep.subr.mxu0 0.0
    %5386 = vmatpush1.msra.mxu0 %v5363
    %5387 = vmatprep.subr.mxu0 0.0
    %5388 = vmatpush1.msra.mxu0 %v5364
    %5389 = vmatprep.subr.mxu0 0.0
    %5390 = vmatpush1.msra.mxu0 %v5365
    %5391 = vmatprep.subr.mxu0 0.0
    %5392 = vmatpush1.msra.mxu0 %v5366
    %5393 = vmatprep.subr.mxu0 0.0
    %5394 = vmatpush1.msra.mxu0 %v5367
    %5395 = vmatprep.subr.mxu0 0.0
    %5396 = vmatpush1.msra.mxu0 %v5368
    %5397 = vmatprep.subr.mxu0 0.0
    %5398 = vmatpush1.msra.mxu0 %v5369
    %5399 = vmatprep.subr.mxu0 0.0
    %5400 = vmatpush1.msra.mxu0 %v5370
    %5401 = vmatprep.subr.mxu0 0.0
    %5402 = vmatpush1.msra.mxu0 %v5371
    %5403 = vmatprep.subr.mxu0 0.0
    %5404 = vmatpush1.msra.mxu0 %v5372
    %5405 = vmatprep.subr.mxu0 0.0
    %5406 = vmatpush1.msra.mxu0 %v5373
    %5407 = vmatprep.subr.mxu0 0.0
    %5408 = vmatpush1.msra.mxu0 %v5374
    %5409 = vmatprep.subr.mxu0 0.0
    %5410 = vmatpush1.msra.mxu0 %v5375
    %5411 = vmatprep.subr.mxu0 0.0
    %5412 = vmatpush1.msra.mxu0 %v5376
    %5413 = vmatprep.subr.mxu0 0.0
    %5414 = vmatpush1.msra.mxu0 0.0
    %5415 = vmatprep.subr.mxu0 0.0
    %5416 = vmatpush1.msra.mxu0 0.0
    %5417 = vmatprep.subr.mxu0 0.0
    %5418 = vmatpush1.msra.mxu0 0.0
    %5419 = vmatprep.subr.mxu0 0.0
    %5420 = vmatpush1.msra.mxu0 0.0
    %5421 = vmatprep.subr.mxu0 0.0
    %5422 = vmatpush1.msra.mxu0 0.0
    %5423 = vmatprep.subr.mxu0 0.0
    %5424 = vmatpush1.msra.mxu0 0.0
    %5425 = vmatprep.subr.mxu0 0.0
    %5426 = vmatpush1.msra.mxu0 0.0
    %5427 = vmatprep.subr.mxu0 0.0
    %5428 = vmatpush1.msra.mxu0 0.0
    %5429 = vmatprep.subr.mxu0 0.0
    %5430 = vmatpush1.msra.mxu0 0.0
    %5431 = vmatprep.subr.mxu0 0.0
    %5432 = vmatpush1.msra.mxu0 0.0
    %5433 = vmatprep.subr.mxu0 0.0
    %5434 = vmatpush1.msra.mxu0 0.0
    %5435 = vmatprep.subr.mxu0 0.0
    %5436 = vmatpush1.msra.mxu0 0.0
    %5437 = vmatprep.subr.mxu0 0.0
    %5438 = vmatpush1.msra.mxu0 0.0
    %5439 = vmatprep.subr.mxu0 0.0
    %5440 = vmatpush1.msra.mxu0 0.0
    %5441 = vmatprep.subr.mxu0 0.0
    %5442 = vmatpush1.msra.mxu0 0.0
    %5443 = vmatprep.subr.mxu0 0.0
    %5444 = vmatpush1.msra.mxu0 0.0
    %5445 = vmatprep.mubr.f32.mxu0 0.0
    %5446 = vmatmul.mubr.f32.gmra.mrb[0].mxu0 %v5328
    %v5447 = vpop.f32.mrb[0].mxu0
    %v5448 = vadd.f32 %v5380, %v5447
    %v5449 = vpop.f32.mrb[0].mxu0
    %5450 = vmatprep.mubr.f32.mxu0 0.0
    %5451 = vmatmul.mubr.f32.gmra.mrb[0].mxu0 %v5329
    %v5452 = vpop.f32.mrb[0].mxu0
    %v5453 = vadd.f32 %v5380, %v5452
    %v5454 = vpop.f32.mrb[0].mxu0
    %5455 = vmatprep.mubr.f32.mxu0 0.0
    %5456 = vmatmul.mubr.f32.gmra.mrb[0].mxu0 %v5330
    %v5457 = vpop.f32.mrb[0].mxu0
    %v5458 = vadd.f32 %v5380, %v5457
    %v5459 = vpop.f32.mrb[0].mxu0
    %5460 = vmatprep.mubr.f32.mxu0 0.0
    %5461 = vmatmul.mubr.f32.gmra.mrb[0].mxu0 %v5331
    %v5462 = vpop.f32.mrb[0].mxu0
    %v5463 = vadd.f32 %v5380, %v5462
    %v5464 = vpop.f32.mrb[0].mxu0
    %5465 = vmatprep.mubr.f32.mxu0 0.0
    %5466 = vmatmul.mubr.f32.gmra.mrb[0].mxu0 %v5332
    %v5467 = vpop.f32.mrb[0].mxu0
    %v5468 = vadd.f32 %v5380, %v5467
    %v5469 = vpop.f32.mrb[0].mxu0
    %5470 = vmatprep.mubr.f32.mxu0 0.0
    %5471 = vmatmul.mubr.f32.gmra.mrb[0].mxu0 %v5333
    %v5472 = vpop.f32.mrb[0].mxu0
    %v5473 = vadd.f32 %v5380, %v5472
    %v5474 = vpop.f32.mrb[0].mxu0
    %5475 = vmatprep.mubr.f32.mxu0 0.0
    %5476 = vmatmul.mubr.f32.gmra.mrb[0].mxu0 %v5334
    %v5477 = vpop.f32.mrb[0].mxu0
    %v5478 = vadd.f32 %v5380, %v5477
    %v5479 = vpop.f32.mrb[0].mxu0
    %5480 = vmatprep.mubr.f32.mxu0 0.0
    %5481 = vmatmul.mubr.f32.gmra.mrb[0].mxu0 %v5335
    %v5482 = vpop.f32.mrb[0].mxu0
    %v5483 = vadd.f32 %v5380, %v5482
    %v5484 = vpop.f32.mrb[0].mxu0
    %5485 = vmatprep.mubr.f32.mxu0 0.0
    %5486 = vmatmul.mubr.f32.gmra.mrb[0].mxu0 %v5336
    %v5487 = vpop.f32.mrb[0].mxu0
    %v5488 = vadd.f32 %v5380, %v5487
    %v5489 = vpop.f32.mrb[0].mxu0
    %5490 = vmatprep.mubr.f32.mxu0 0.0
    %5491 = vmatmul.mubr.f32.gmra.mrb[0].mxu0 %v5337
    %v5492 = vpop.f32.mrb[0].mxu0
    %v5493 = vadd.f32 %v5380, %v5492
    %v5494 = vpop.f32.mrb[0].mxu0
    %5495 = vmatprep.mubr.f32.mxu0 0.0
    %5496 = vmatmul.mubr.f32.gmra.mrb[0].mxu0 %v5338
    %v5497 = vpop.f32.mrb[0].mxu0
    %v5498 = vadd.f32 %v5380, %v5497
    %v5499 = vpop.f32.mrb[0].mxu0
    %5500 = vmatprep.mubr.f32.mxu0 0.0
    %5501 = vmatmul.mubr.f32.gmra.mrb[0].mxu0 %v5339
    %v5502 = vpop.f32.mrb[0].mxu0
    %v5503 = vadd.f32 %v5380, %v5502
    %v5504 = vpop.f32.mrb[0].mxu0
    %5505 = vmatprep.mubr.f32.mxu0 0.0
    %5506 = vmatmul.mubr.f32.gmra.mrb[0].mxu0 %v5340
    %v5507 = vpop.f32.mrb[0].mxu0
    %v5508 = vadd.f32 %v5380, %v5507
    %v5509 = vpop.f32.mrb[0].mxu0
    %5510 = vmatprep.mubr.f32.mxu0 0.0
    %5511 = vmatmul.mubr.f32.gmra.mrb[0].mxu0 %v5341
    %v5512 = vpop.f32.mrb[0].mxu0
    %v5513 = vadd.f32 %v5380, %v5512
    %v5514 = vpop.f32.mrb[0].mxu0
    %5515 = vmatprep.mubr.f32.mxu0 0.0
    %5516 = vmatmul.mubr.f32.gmra.mrb[0].mxu0 %v5342
    %v5517 = vpop.f32.mrb[0].mxu0
    %v5518 = vadd.f32 %v5380, %v5517
    %v5519 = vpop.f32.mrb[0].mxu0
    %5520 = vmatprep.mubr.f32.mxu0 0.0
    %5521 = vmatmul.mubr.f32.gmra.mrb[0].mxu0 %v5343
    %v5522 = vpop.f32.mrb[0].mxu0
    %v5523 = vadd.f32 %v5380, %v5522
    %v5524 = vpop.f32.mrb[0].mxu0
    %5525 = vmatprep.mubr.f32.mxu0 0.0
    %5526 = vmatmul.mubr.f32.gmra.mrb[0].mxu0 %v5344
    %v5527 = vpop.f32.mrb[0].mxu0
    %v5528 = vadd.f32 %v5380, %v5527
    %v5529 = vpop.f32.mrb[0].mxu0
    %5530 = vmatprep.mubr.f32.mxu0 0.0
    %5531 = vmatmul.mubr.f32.gmra.mrb[0].mxu0 %v5345
    %v5532 = vpop.f32.mrb[0].mxu0
    %v5533 = vadd.f32 %v5380, %v5532
    %v5534 = vpop.f32.mrb[0].mxu0
    %5535 = vmatprep.mubr.f32.mxu0 0.0
    %5536 = vmatmul.mubr.f32.gmra.mrb[0].mxu0 %v5346
    %v5537 = vpop.f32.mrb[0].mxu0
    %v5538 = vadd.f32 %v5380, %v5537
    %v5539 = vpop.f32.mrb[0].mxu0
    %5540 = vmatprep.mubr.f32.mxu0 0.0
    %5541 = vmatmul.mubr.f32.gmra.mrb[0].mxu0 %v5347
    %v5542 = vpop.f32.mrb[0].mxu0
    %v5543 = vadd.f32 %v5380, %v5542
    %v5544 = vpop.f32.mrb[0].mxu0
    %5545 = vmatprep.mubr.f32.mxu0 0.0
    %5546 = vmatmul.mubr.f32.gmra.mrb[0].mxu0 %v5348
    %v5547 = vpop.f32.mrb[0].mxu0
    %v5548 = vadd.f32 %v5380, %v5547
    %v5549 = vpop.f32.mrb[0].mxu0
    %5550 = vmatprep.mubr.f32.mxu0 0.0
    %5551 = vmatmul.mubr.f32.gmra.mrb[0].mxu0 %v5349
    %v5552 = vpop.f32.mrb[0].mxu0
    %v5553 = vadd.f32 %v5380, %v5552
    %v5554 = vpop.f32.mrb[0].mxu0
    %5555 = vmatprep.mubr.f32.mxu0 0.0
    %5556 = vmatmul.mubr.f32.gmra.mrb[0].mxu0 %v5350
    %v5557 = vpop.f32.mrb[0].mxu0
    %v5558 = vadd.f32 %v5380, %v5557
    %v5559 = vpop.f32.mrb[0].mxu0
    %5560 = vmatprep.mubr.f32.mxu0 0.0
    %5561 = vmatmul.mubr.f32.gmra.mrb[0].mxu0 %v5351
    %v5562 = vpop.f32.mrb[0].mxu0
    %v5563 = vadd.f32 %v5380, %v5562
    %v5564 = vpop.f32.mrb[0].mxu0
    %5565 = vmatprep.mubr.f32.mxu0 0.0
    %5566 = vmatmul.mubr.f32.gmra.mrb[0].mxu0 %v5352
    %v5567 = vpop.f32.mrb[0].mxu0
    %v5568 = vadd.f32 %v5380, %v5567
    %v5569 = vpop.f32.mrb[0].mxu0
    %5570 = vmatprep.mubr.f32.mxu0 0.0
    %5571 = vmatmul.mubr.f32.gmra.mrb[0].mxu0 %v5353
    %v5572 = vpop.f32.mrb[0].mxu0
    %v5573 = vadd.f32 %v5380, %v5572
    %v5574 = vpop.f32.mrb[0].mxu0
    %5575 = vmatprep.mubr.f32.mxu0 0.0
    %5576 = vmatmul.mubr.f32.gmra.mrb[0].mxu0 %v5354
    %v5577 = vpop.f32.mrb[0].mxu0
    %v5578 = vadd.f32 %v5380, %v5577
    %v5579 = vpop.f32.mrb[0].mxu0
    %5580 = vmatprep.mubr.f32.mxu0 0.0
    %5581 = vmatmul.mubr.f32.gmra.mrb[0].mxu0 %v5355
    %v5582 = vpop.f32.mrb[0].mxu0
    %v5583 = vadd.f32 %v5380, %v5582
    %v5584 = vpop.f32.mrb[0].mxu0
    %5585 = vmatprep.mubr.f32.mxu0 0.0
    %5586 = vmatmul.mubr.f32.gmra.mrb[0].mxu0 %v5356
    %v5587 = vpop.f32.mrb[0].mxu0
    %v5588 = vadd.f32 %v5380, %v5587
    %v5589 = vpop.f32.mrb[0].mxu0
    %5590 = vmatprep.mubr.f32.mxu0 0.0
    %5591 = vmatmul.mubr.f32.gmra.mrb[0].mxu0 %v5357
    %v5592 = vpop.f32.mrb[0].mxu0
    %v5593 = vadd.f32 %v5380, %v5592
    %v5594 = vpop.f32.mrb[0].mxu0
    %5595 = vmatprep.mubr.f32.mxu0 0.0
    %5596 = vmatmul.mubr.f32.gmra.mrb[0].mxu0 %v5358
    %v5597 = vpop.f32.mrb[0].mxu0
    %v5598 = vadd.f32 %v5380, %v5597
    %v5599 = vpop.f32.mrb[0].mxu0
    %5600 = vmatprep.mubr.f32.mxu0 0.0
    %5601 = vmatmul.mubr.f32.gmra.mrb[0].mxu0 %v5359
    %v5602 = vpop.f32.mrb[0].mxu0
    %v5603 = vadd.f32 %v5380, %v5602
    %v5604 = vpop.f32.mrb[0].mxu0
    %5605 = vdwg.mxu0
    %5607 = vset.pattern.permute.xlu0 0
    %5608 = vperm.xlu0 %5607, %v434
    %v5609 = vpop.permute.xlu0 %5608
    %5612 = vset.pattern.permute.xlu0 0
    %5613 = vperm.xlu0 %5612, %v435
    %v5614 = vpop.permute.xlu0 %5613
    %5617 = vset.pattern.permute.xlu0 0
    %5618 = vperm.xlu0 %5617, %v436
    %v5619 = vpop.permute.xlu0 %5618
    %5622 = vset.pattern.permute.xlu0 0
    %5623 = vperm.xlu0 %5622, %v437
    %v5624 = vpop.permute.xlu0 %5623
    %5627 = vset.pattern.permute.xlu0 0
    %5628 = vperm.xlu0 %5627, %v438
    %v5629 = vpop.permute.xlu0 %5628
    %5632 = vset.pattern.permute.xlu0 0
    %5633 = vperm.xlu0 %5632, %v439
    %v5634 = vpop.permute.xlu0 %5633
    %5637 = vset.pattern.permute.xlu0 0
    %5638 = vperm.xlu0 %5637, %v440
    %v5639 = vpop.permute.xlu0 %5638
    %5642 = vset.pattern.permute.xlu0 0
    %5643 = vperm.xlu0 %5642, %v441
    %v5644 = vpop.permute.xlu0 %5643
    %5647 = vset.pattern.permute.xlu0 0
    %5648 = vperm.xlu0 %5647, %v442
    %v5649 = vpop.permute.xlu0 %5648
    %5652 = vset.pattern.permute.xlu0 0
    %5653 = vperm.xlu0 %5652, %v443
    %v5654 = vpop.permute.xlu0 %5653
    %5657 = vset.pattern.permute.xlu0 0
    %5658 = vperm.xlu0 %5657, %v444
    %v5659 = vpop.permute.xlu0 %5658
    %5662 = vset.pattern.permute.xlu0 0
    %5663 = vperm.xlu0 %5662, %v445
    %v5664 = vpop.permute.xlu0 %5663
    %5667 = vset.pattern.permute.xlu0 0
    %5668 = vperm.xlu0 %5667, %v446
    %v5669 = vpop.permute.xlu0 %5668
    %5672 = vset.pattern.permute.xlu0 0
    %5673 = vperm.xlu0 %5672, %v447
    %v5674 = vpop.permute.xlu0 %5673
    %5677 = vset.pattern.permute.xlu0 0
    %5678 = vperm.xlu0 %5677, %v448
    %v5679 = vpop.permute.xlu0 %5678
    %5682 = vset.pattern.permute.xlu0 0
    %5683 = vperm.xlu0 %5682, %v449
    %v5684 = vpop.permute.xlu0 %5683
    %5687 = vset.pattern.permute.xlu0 0
    %5688 = vperm.xlu0 %5687, %v450
    %v5689 = vpop.permute.xlu0 %5688
    %5692 = vset.pattern.permute.xlu0 0
    %5693 = vperm.xlu0 %5692, %v451
    %v5694 = vpop.permute.xlu0 %5693
    %5697 = vset.pattern.permute.xlu0 0
    %5698 = vperm.xlu0 %5697, %v452
    %v5699 = vpop.permute.xlu0 %5698
    %5702 = vset.pattern.permute.xlu0 0
    %5703 = vperm.xlu0 %5702, %v453
    %v5704 = vpop.permute.xlu0 %5703
    %5707 = vset.pattern.permute.xlu0 0
    %5708 = vperm.xlu0 %5707, %v454
    %v5709 = vpop.permute.xlu0 %5708
    %5712 = vset.pattern.permute.xlu0 0
    %5713 = vperm.xlu0 %5712, %v455
    %v5714 = vpop.permute.xlu0 %5713
    %5717 = vset.pattern.permute.xlu0 0
    %5718 = vperm.xlu0 %5717, %v456
    %v5719 = vpop.permute.xlu0 %5718
    %5722 = vset.pattern.permute.xlu0 0
    %5723 = vperm.xlu0 %5722, %v457
    %v5724 = vpop.permute.xlu0 %5723
    %5727 = vset.pattern.permute.xlu0 0
    %5728 = vperm.xlu0 %5727, %v458
    %v5729 = vpop.permute.xlu0 %5728
    %5732 = vset.pattern.permute.xlu0 0
    %5733 = vperm.xlu0 %5732, %v459
    %v5734 = vpop.permute.xlu0 %5733
    %5737 = vset.pattern.permute.xlu0 0
    %5738 = vperm.xlu0 %5737, %v460
    %v5739 = vpop.permute.xlu0 %5738
    %5742 = vset.pattern.permute.xlu0 0
    %5743 = vperm.xlu0 %5742, %v461
    %v5744 = vpop.permute.xlu0 %5743
    %5747 = vset.pattern.permute.xlu0 0
    %5748 = vperm.xlu0 %5747, %v462
    %v5749 = vpop.permute.xlu0 %5748
    %5752 = vset.pattern.permute.xlu0 0
    %5753 = vperm.xlu0 %5752, %v463
    %v5754 = vpop.permute.xlu0 %5753
    %5757 = vset.pattern.permute.xlu0 0
    %5758 = vperm.xlu0 %5757, %v464
    %v5759 = vpop.permute.xlu0 %5758
    %5762 = vset.pattern.permute.xlu0 0
    %5763 = vperm.xlu0 %5762, %v465
    %v5764 = vpop.permute.xlu0 %5763
    %v5766 = vmul.f32 %v5448, %v5609
    %v5767 = vmul.f32 %v5453, %v5614
    %v5768 = vmul.f32 %v5458, %v5619
    %v5769 = vmul.f32 %v5463, %v5624
    %v5770 = vmul.f32 %v5468, %v5629
    %v5771 = vmul.f32 %v5473, %v5634
    %v5772 = vmul.f32 %v5478, %v5639
    %v5773 = vmul.f32 %v5483, %v5644
    %v5774 = vmul.f32 %v5488, %v5649
    %v5775 = vmul.f32 %v5493, %v5654
    %v5776 = vmul.f32 %v5498, %v5659
    %v5777 = vmul.f32 %v5503, %v5664
    %v5778 = vmul.f32 %v5508, %v5669
    %v5779 = vmul.f32 %v5513, %v5674
    %v5780 = vmul.f32 %v5518, %v5679
    %v5781 = vmul.f32 %v5523, %v5684
    %v5782 = vmul.f32 %v5528, %v5689
    %v5783 = vmul.f32 %v5533, %v5694
    %v5784 = vmul.f32 %v5538, %v5699
    %v5785 = vmul.f32 %v5543, %v5704
    %v5786 = vmul.f32 %v5548, %v5709
    %v5787 = vmul.f32 %v5553, %v5714
    %v5788 = vmul.f32 %v5558, %v5719
    %v5789 = vmul.f32 %v5563, %v5724
    %v5790 = vmul.f32 %v5568, %v5729
    %v5791 = vmul.f32 %v5573, %v5734
    %v5792 = vmul.f32 %v5578, %v5739
    %v5793 = vmul.f32 %v5583, %v5744
    %v5794 = vmul.f32 %v5588, %v5749
    %v5795 = vmul.f32 %v5593, %v5754
    %v5796 = vmul.f32 %v5598, %v5759
    %v5797 = vmul.f32 %v5603, %v5764
    %v5798 = vmul.f32 %v402, %v402
    %v5799 = vmul.f32 %v403, %v403
    %v5800 = vmul.f32 %v404, %v404
    %v5801 = vmul.f32 %v405, %v405
    %v5802 = vmul.f32 %v406, %v406
    %v5803 = vmul.f32 %v407, %v407
    %v5804 = vmul.f32 %v408, %v408
    %v5805 = vmul.f32 %v409, %v409
    %v5806 = vmul.f32 %v410, %v410
    %v5807 = vmul.f32 %v411, %v411
    %v5808 = vmul.f32 %v412, %v412
    %v5809 = vmul.f32 %v413, %v413
    %v5810 = vmul.f32 %v414, %v414
    %v5811 = vmul.f32 %v415, %v415
    %v5812 = vmul.f32 %v416, %v416
    %v5813 = vmul.f32 %v417, %v417
    %v5814 = vmul.f32 %v418, %v418
    %v5815 = vmul.f32 %v419, %v419
    %v5816 = vmul.f32 %v420, %v420
    %v5817 = vmul.f32 %v421, %v421
    %v5818 = vmul.f32 %v422, %v422
    %v5819 = vmul.f32 %v423, %v423
    %v5820 = vmul.f32 %v424, %v424
    %v5821 = vmul.f32 %v425, %v425
    %v5822 = vmul.f32 %v426, %v426
    %v5823 = vmul.f32 %v427, %v427
    %v5824 = vmul.f32 %v428, %v428
    %v5825 = vmul.f32 %v429, %v429
    %v5826 = vmul.f32 %v430, %v430
    %v5827 = vmul.f32 %v431, %v431
    %v5828 = vmul.f32 %v432, %v432
    %v5829 = vmul.f32 %v433, %v433
    %5831 = vset.pattern.permute.xlu0 0
    %5832 = vperm.xlu0 %5831, %v5798
    %v5833 = vpop.permute.xlu0 %5832
    %5836 = vset.pattern.permute.xlu0 0
    %5837 = vperm.xlu0 %5836, %v5799
    %v5838 = vpop.permute.xlu0 %5837
    %5841 = vset.pattern.permute.xlu0 0
    %5842 = vperm.xlu0 %5841, %v5800
    %v5843 = vpop.permute.xlu0 %5842
    %5846 = vset.pattern.permute.xlu0 0
    %5847 = vperm.xlu0 %5846, %v5801
    %v5848 = vpop.permute.xlu0 %5847
    %5851 = vset.pattern.permute.xlu0 0
    %5852 = vperm.xlu0 %5851, %v5802
    %v5853 = vpop.permute.xlu0 %5852
    %5856 = vset.pattern.permute.xlu0 0
    %5857 = vperm.xlu0 %5856, %v5803
    %v5858 = vpop.permute.xlu0 %5857
    %5861 = vset.pattern.permute.xlu0 0
    %5862 = vperm.xlu0 %5861, %v5804
    %v5863 = vpop.permute.xlu0 %5862
    %5866 = vset.pattern.permute.xlu0 0
    %5867 = vperm.xlu0 %5866, %v5805
    %v5868 = vpop.permute.xlu0 %5867
    %5871 = vset.pattern.permute.xlu0 0
    %5872 = vperm.xlu0 %5871, %v5806
    %v5873 = vpop.permute.xlu0 %5872
    %5876 = vset.pattern.permute.xlu0 0
    %5877 = vperm.xlu0 %5876, %v5807
    %v5878 = vpop.permute.xlu0 %5877
    %5881 = vset.pattern.permute.xlu0 0
    %5882 = vperm.xlu0 %5881, %v5808
    %v5883 = vpop.permute.xlu0 %5882
    %5886 = vset.pattern.permute.xlu0 0
    %5887 = vperm.xlu0 %5886, %v5809
    %v5888 = vpop.permute.xlu0 %5887
    %5891 = vset.pattern.permute.xlu0 0
    %5892 = vperm.xlu0 %5891, %v5810
    %v5893 = vpop.permute.xlu0 %5892
    %5896 = vset.pattern.permute.xlu0 0
    %5897 = vperm.xlu0 %5896, %v5811
    %v5898 = vpop.permute.xlu0 %5897
    %5901 = vset.pattern.permute.xlu0 0
    %5902 = vperm.xlu0 %5901, %v5812
    %v5903 = vpop.permute.xlu0 %5902
    %5906 = vset.pattern.permute.xlu0 0
    %5907 = vperm.xlu0 %5906, %v5813
    %v5908 = vpop.permute.xlu0 %5907
    %5911 = vset.pattern.permute.xlu0 0
    %5912 = vperm.xlu0 %5911, %v5814
    %v5913 = vpop.permute.xlu0 %5912
    %5916 = vset.pattern.permute.xlu0 0
    %5917 = vperm.xlu0 %5916, %v5815
    %v5918 = vpop.permute.xlu0 %5917
    %5921 = vset.pattern.permute.xlu0 0
    %5922 = vperm.xlu0 %5921, %v5816
    %v5923 = vpop.permute.xlu0 %5922
    %5926 = vset.pattern.permute.xlu0 0
    %5927 = vperm.xlu0 %5926, %v5817
    %v5928 = vpop.permute.xlu0 %5927
    %5931 = vset.pattern.permute.xlu0 0
    %5932 = vperm.xlu0 %5931, %v5818
    %v5933 = vpop.permute.xlu0 %5932
    %5936 = vset.pattern.permute.xlu0 0
    %5937 = vperm.xlu0 %5936, %v5819
    %v5938 = vpop.permute.xlu0 %5937
    %5941 = vset.pattern.permute.xlu0 0
    %5942 = vperm.xlu0 %5941, %v5820
    %v5943 = vpop.permute.xlu0 %5942
    %5946 = vset.pattern.permute.xlu0 0
    %5947 = vperm.xlu0 %5946, %v5821
    %v5948 = vpop.permute.xlu0 %5947
    %5951 = vset.pattern.permute.xlu0 0
    %5952 = vperm.xlu0 %5951, %v5822
    %v5953 = vpop.permute.xlu0 %5952
    %5956 = vset.pattern.permute.xlu0 0
    %5957 = vperm.xlu0 %5956, %v5823
    %v5958 = vpop.permute.xlu0 %5957
    %5961 = vset.pattern.permute.xlu0 0
    %5962 = vperm.xlu0 %5961, %v5824
    %v5963 = vpop.permute.xlu0 %5962
    %5966 = vset.pattern.permute.xlu0 0
    %5967 = vperm.xlu0 %5966, %v5825
    %v5968 = vpop.permute.xlu0 %5967
    %5971 = vset.pattern.permute.xlu0 0
    %5972 = vperm.xlu0 %5971, %v5826
    %v5973 = vpop.permute.xlu0 %5972
    %5976 = vset.pattern.permute.xlu0 0
    %5977 = vperm.xlu0 %5976, %v5827
    %v5978 = vpop.permute.xlu0 %5977
    %5981 = vset.pattern.permute.xlu0 0
    %5982 = vperm.xlu0 %5981, %v5828
    %v5983 = vpop.permute.xlu0 %5982
    %5986 = vset.pattern.permute.xlu0 0
    %5987 = vperm.xlu0 %5986, %v5829
    %v5988 = vpop.permute.xlu0 %5987
    %v5990 = vmul.f32 %v49, %v5833
    %v5991 = vmul.f32 %v50, %v5838
    %v5992 = vmul.f32 %v51, %v5843
    %v5993 = vmul.f32 %v52, %v5848
    %v5994 = vmul.f32 %v53, %v5853
    %v5995 = vmul.f32 %v54, %v5858
    %v5996 = vmul.f32 %v55, %v5863
    %v5997 = vmul.f32 %v56, %v5868
    %v5998 = vmul.f32 %v57, %v5873
    %v5999 = vmul.f32 %v58, %v5878
    %v6000 = vmul.f32 %v59, %v5883
    %v6001 = vmul.f32 %v60, %v5888
    %v6002 = vmul.f32 %v61, %v5893
    %v6003 = vmul.f32 %v62, %v5898
    %v6004 = vmul.f32 %v63, %v5903
    %v6005 = vmul.f32 %v64, %v5908
    %v6006 = vmul.f32 %v65, %v5913
    %v6007 = vmul.f32 %v66, %v5918
    %v6008 = vmul.f32 %v67, %v5923
    %v6009 = vmul.f32 %v68, %v5928
    %v6010 = vmul.f32 %v69, %v5933
    %v6011 = vmul.f32 %v70, %v5938
    %v6012 = vmul.f32 %v71, %v5943
    %v6013 = vmul.f32 %v72, %v5948
    %v6014 = vmul.f32 %v73, %v5953
    %v6015 = vmul.f32 %v74, %v5958
    %v6016 = vmul.f32 %v75, %v5963
    %v6017 = vmul.f32 %v76, %v5968
    %v6018 = vmul.f32 %v77, %v5973
    %v6019 = vmul.f32 %v78, %v5978
    %v6020 = vmul.f32 %v79, %v5983
    %v6021 = vmul.f32 %v80, %v5988
    %v6022 = vsub.f32 %v5766, %v5990
    %v6023 = vsub.f32 %v5767, %v5991
    %v6024 = vsub.f32 %v5768, %v5992
    %v6025 = vsub.f32 %v5769, %v5993
    %v6026 = vsub.f32 %v5770, %v5994
    %v6027 = vsub.f32 %v5771, %v5995
    %v6028 = vsub.f32 %v5772, %v5996
    %v6029 = vsub.f32 %v5773, %v5997
    %v6030 = vsub.f32 %v5774, %v5998
    %v6031 = vsub.f32 %v5775, %v5999
    %v6032 = vsub.f32 %v5776, %v6000
    %v6033 = vsub.f32 %v5777, %v6001
    %v6034 = vsub.f32 %v5778, %v6002
    %v6035 = vsub.f32 %v5779, %v6003
    %v6036 = vsub.f32 %v5780, %v6004
    %v6037 = vsub.f32 %v5781, %v6005
    %v6038 = vsub.f32 %v5782, %v6006
    %v6039 = vsub.f32 %v5783, %v6007
    %v6040 = vsub.f32 %v5784, %v6008
    %v6041 = vsub.f32 %v5785, %v6009
    %v6042 = vsub.f32 %v5786, %v6010
    %v6043 = vsub.f32 %v5787, %v6011
    %v6044 = vsub.f32 %v5788, %v6012
    %v6045 = vsub.f32 %v5789, %v6013
    %v6046 = vsub.f32 %v5790, %v6014
    %v6047 = vsub.f32 %v5791, %v6015
    %v6048 = vsub.f32 %v5792, %v6016
    %v6049 = vsub.f32 %v5793, %v6017
    %v6050 = vsub.f32 %v5794, %v6018
    %v6051 = vsub.f32 %v5795, %v6019
    %v6052 = vsub.f32 %v5796, %v6020
    %v6053 = vsub.f32 %v5797, %v6021
    %6054 = vst [vmem:[#allocation7] sm:$0xff] %v6022
    %6055 = vst [vmem:[#allocation7 + $0x8] sm:$0xff] %v6023
    %6056 = vst [vmem:[#allocation7 + $0x10] sm:$0xff] %v6024
    %6057 = vst [vmem:[#allocation7 + $0x18] sm:$0xff] %v6025
    %6058 = vst [vmem:[#allocation7 + $0x20] sm:$0xff] %v6026
    %6059 = vst [vmem:[#allocation7 + $0x28] sm:$0xff] %v6027
    %6060 = vst [vmem:[#allocation7 + $0x30] sm:$0xff] %v6028
    %6061 = vst [vmem:[#allocation7 + $0x38] sm:$0xff] %v6029
    %6062 = vst [vmem:[#allocation7 + $0x40] sm:$0xff] %v6030
    %6063 = vst [vmem:[#allocation7 + $0x48] sm:$0xff] %v6031
    %6064 = vst [vmem:[#allocation7 + $0x50] sm:$0xff] %v6032
    %6065 = vst [vmem:[#allocation7 + $0x58] sm:$0xff] %v6033
    %6066 = vst [vmem:[#allocation7 + $0x60] sm:$0xff] %v6034
    %6067 = vst [vmem:[#allocation7 + $0x68] sm:$0xff] %v6035
    %6068 = vst [vmem:[#allocation7 + $0x70] sm:$0xff] %v6036
    %6069 = vst [vmem:[#allocation7 + $0x78] sm:$0xff] %v6037
    %6070 = vst [vmem:[#allocation7 + $0x80] sm:$0xff] %v6038
    %6071 = vst [vmem:[#allocation7 + $0x88] sm:$0xff] %v6039
    %6072 = vst [vmem:[#allocation7 + $0x90] sm:$0xff] %v6040
    %6073 = vst [vmem:[#allocation7 + $0x98] sm:$0xff] %v6041
    %6074 = vst [vmem:[#allocation7 + $0xa0] sm:$0xff] %v6042
    %6075 = vst [vmem:[#allocation7 + $0xa8] sm:$0xff] %v6043
    %6076 = vst [vmem:[#allocation7 + $0xb0] sm:$0xff] %v6044
    %6077 = vst [vmem:[#allocation7 + $0xb8] sm:$0xff] %v6045
    %6078 = vst [vmem:[#allocation7 + $0xc0] sm:$0xff] %v6046
    %6079 = vst [vmem:[#allocation7 + $0xc8] sm:$0xff] %v6047
    %6080 = vst [vmem:[#allocation7 + $0xd0] sm:$0xff] %v6048
    %6081 = vst [vmem:[#allocation7 + $0xd8] sm:$0xff] %v6049
    %6082 = vst [vmem:[#allocation7 + $0xe0] sm:$0xff] %v6050
    %6083 = vst [vmem:[#allocation7 + $0xe8] sm:$0xff] %v6051
    %6084 = vst [vmem:[#allocation7 + $0xf0] sm:$0xff] %v6052
    %6085 = vst [vmem:[#allocation7 + $0xf8] sm:$0xff] %v6053
    // Predicated region
    $region30: #{tpu_custom_call.1} parent=1 // pred_check
      _
    $region31: #{tpu_custom_call.1} parent=1 // pred_check_branch
      %6087 = sbr.rel (0) target = $region33
    $region32: #{tpu_custom_call.1} parent=1 // pred_region
      %s6089 = ssub.s32 4096, 4096
      %6090 = vsyncadd [#allocation4], %s6089
      %s6091 = sshll.u32 [#allocation7], 4
      %s6092 = int_to_ptr.vmem [resolvable:$true] %s6091
      %6097 = dma.vmem_to_hbm [thread:$0]  %s6092, 4096, %s5, [#allocation4], 128, 128, 8
    $region33: #{tpu_custom_call.1} parent=1 // pred_fallthru
      _
    // Predicated region
    $region34: #{tpu_custom_call.1} parent=1 // pred_check
      _
    $region35: #{tpu_custom_call.1} parent=1 // pred_check_branch
      %6099 = sbr.rel (0) target = $region37
    $region36: #{tpu_custom_call.1} parent=1 // pred_region
      %6100 = dma.done [#allocation4], 4096
    $region37: #{tpu_custom_call.1} parent=1 // pred_fallthru
      _
    %6101 = vsyncpa [#allocation3], 1
    %6102 = vsyncpa [#allocation6], 1
    %6103 = vsyncpa [#allocation4], 1

</llo_original>
